<compile_context>
chip_gen: v6e
topology: v6e:2x2x1
jax: 0.10.0
libtpu: 0.0.40
codegen_flags: <defaults>
</compile_context>

<pallas_src>
import math

import jax
import jax.numpy as jnp
from jax import lax
from jax.experimental import pallas as pl
from jax.experimental.pallas import tpu as pltpu

# ----------------------------- model config ---------------------------------
B, T, V = 2, 8, 128          # batch, sequence, vocab
D, H, DH = 32, 2, 16         # model dim, heads, head dim
MLP = 64                     # feed-forward dim
NLAYERS = 2


# ----------------------------- fused kernel ----------------------------------
def _ln(x, g, b):
    """LayerNorm over the last (lane) axis, all in f32."""
    mu = jnp.mean(x, axis=-1, keepdims=True)
    var = jnp.mean(jnp.square(x - mu), axis=-1, keepdims=True)
    return (x - mu) * lax.rsqrt(var + 1e-5) * g + b


def fused_forward_kernel(ids_ref, labels_ref, mrow_ref, mtail_ref,
                         tok_emb_ref, pos_emb_ref,
                         ln1_g_ref, ln1_b_ref, w_qkv_ref, b_qkv_ref,
                         w_o_ref, b_o_ref, ln2_g_ref, ln2_b_ref,
                         w_fc_ref, b_fc_ref, w_proj_ref, b_proj_ref,
                         lnf_g_ref, lnf_b_ref, o_ref):
    """One grid step == one batch element; everything lives in VMEM/vregs."""
    ids = ids_ref[...]                                   # (T, 1)   int32
    labels = labels_ref[...]                             # (T-1, 1) int32
    key_mask = mrow_ref[...]                             # (1, T)   f32
    mask_tail = mtail_ref[...]                           # (T-1, 1) f32
    tok_emb = tok_emb_ref[...]                           # (V, D)   f32

    # ---- embedding lookup as a one-hot matmul (avoids dynamic gather) ----
    vocab_tv = lax.broadcasted_iota(jnp.int32, (T, V), 1)
    onehot = (vocab_tv == ids).astype(jnp.float32)       # (T, V)
    x = jnp.dot(onehot, tok_emb, preferred_element_type=jnp.float32)
    x = x + pos_emb_ref[...]                             # (T, D)

    # ---- causal + key-padding mask, shared by all layers / heads ----
    row = lax.broadcasted_iota(jnp.int32, (T, T), 0)
    col = lax.broadcasted_iota(jnp.int32, (T, T), 1)
    allowed = (col <= row) & (key_mask > 0.5)            # (T, T)

    scale = 1.0 / math.sqrt(DH)
    for li in range(NLAYERS):                            # static unroll
        # -- attention block --
        h1 = _ln(x, ln1_g_ref[li], ln1_b_ref[li])
        qkv = jnp.dot(h1, w_qkv_ref[li],
                      preferred_element_type=jnp.float32) + b_qkv_ref[li]  # (T, 3D)
        w_o_l = w_o_ref[li]                                                # (D, D)
        attn_proj = jnp.zeros((T, D), jnp.float32)
        for hd in range(H):                              # static unroll over heads
            q = qkv[:, hd * DH:(hd + 1) * DH]                     # (T, DH)
            k = qkv[:, D + hd * DH:D + (hd + 1) * DH]             # (T, DH)
            v = qkv[:, 2 * D + hd * DH:2 * D + (hd + 1) * DH]     # (T, DH)
            s = jnp.dot(q, k.T, preferred_element_type=jnp.float32) * scale
            s = jnp.where(allowed, s, -1e30)
            s = s - jnp.max(s, axis=-1, keepdims=True)
            p = jnp.exp(s)
            p = p * pl.reciprocal(jnp.sum(p, axis=-1, keepdims=True), approx=True)
            o_h = jnp.dot(p, v, preferred_element_type=jnp.float32)        # (T, DH)
            # merge heads by accumulating per-head slice of the output proj
            attn_proj = attn_proj + jnp.dot(
                o_h, w_o_l[hd * DH:(hd + 1) * DH, :],
                preferred_element_type=jnp.float32)
        x = x + attn_proj + b_o_ref[li]

        # -- MLP block --
        h2 = _ln(x, ln2_g_ref[li], ln2_b_ref[li])
        # NOTE: tanh-approximate GELU (jax.nn.gelu default) == HF GPT-2 "gelu_new".
        ff = jax.nn.gelu(jnp.dot(h2, w_fc_ref[li],
                                 preferred_element_type=jnp.float32) + b_fc_ref[li])
        x = x + jnp.dot(ff, w_proj_ref[li],
                        preferred_element_type=jnp.float32) + b_proj_ref[li]

    x = _ln(x, lnf_g_ref[...], lnf_b_ref[...])           # (T, D)

    # ---- tied LM head fused with log-softmax gather (logits stay in VMEM) ----
    # logits = x @ tok_emb.T via dot_general (no materialized transpose)
    logits = lax.dot_general(x, tok_emb, (((1,), (1,)), ((), ())),
                             preferred_element_type=jnp.float32)  # (T, V)
    lg = logits[:-1, :]                                           # (T-1, V)
    mx = jnp.max(lg, axis=-1, keepdims=True)
    lse = jnp.log(jnp.sum(jnp.exp(lg - mx), axis=-1, keepdims=True)) + mx
    vocab_idx = lax.broadcasted_iota(jnp.int32, (T - 1, V), 1)
    gathered = jnp.sum(jnp.where(vocab_idx == labels, lg, 0.0),
                       axis=-1, keepdims=True)                    # (T-1, 1)
    # Tools.probs_from_logits followed by Tools.filter_mask
    # TODO(synk): exact Tools implementation unavailable; assuming log-softmax
    #             gather followed by masking with attention_mask[:, 1:].
    o_ref[...] = (gathered - lse) * mask_tail


# ----------------------------- parameters ------------------------------------
def init_params(seed=0):
    key = jax.random.PRNGKey(seed)

    def nrm(k, shape, scale=0.02):
        return (scale * jax.random.normal(k, shape)).astype(jnp.float32)

    keys = jax.random.split(key, 2 + 4 * NLAYERS)
    f32 = jnp.float32
    params = {
        "tok_emb": nrm(keys[0], (V, D)),
        "pos_emb": nrm(keys[1], (T, D)),
        "ln1_g": jnp.ones((NLAYERS, 1, D), f32),
        "ln1_b": jnp.zeros((NLAYERS, 1, D), f32),
        "w_qkv": jnp.stack([nrm(keys[2 + 4 * li + 0], (D, 3 * D))
                            for li in range(NLAYERS)]),
        "b_qkv": jnp.zeros((NLAYERS, 1, 3 * D), f32),
        "w_o": jnp.stack([nrm(keys[2 + 4 * li + 1], (D, D))
                          for li in range(NLAYERS)]),
        "b_o": jnp.zeros((NLAYERS, 1, D), f32),
        "ln2_g": jnp.ones((NLAYERS, 1, D), f32),
        "ln2_b": jnp.zeros((NLAYERS, 1, D), f32),
        "w_fc": jnp.stack([nrm(keys[2 + 4 * li + 2], (D, MLP))
                           for li in range(NLAYERS)]),
        "b_fc": jnp.zeros((NLAYERS, 1, MLP), f32),
        "w_proj": jnp.stack([nrm(keys[2 + 4 * li + 3], (MLP, D))
                             for li in range(NLAYERS)]),
        "b_proj": jnp.zeros((NLAYERS, 1, D), f32),
        "lnf_g": jnp.ones((1, D), f32),
        "lnf_b": jnp.zeros((1, D), f32),
    }
    return params


_WEIGHT_ORDER = ("tok_emb", "pos_emb",
                 "ln1_g", "ln1_b", "w_qkv", "b_qkv", "w_o", "b_o",
                 "ln2_g", "ln2_b", "w_fc", "b_fc", "w_proj", "b_proj",
                 "lnf_g", "lnf_b")


def _full_spec(arr):
    """Full-array BlockSpec (same block for every grid step — no re-fetch)."""
    nd = arr.ndim
    return pl.BlockSpec(arr.shape, lambda b, _nd=nd: (0,) * _nd)


# ----------------------------- forward pass -----------------------------------
def reference_model_forward(params, input_ids, attention_mask):
    """Equivalent of ReferenceModel.forward: per-token reference log-probs [B, T-1]."""
    ids_col = input_ids[:, :, None].astype(jnp.int32)               # [B, T, 1]
    labels_col = input_ids[:, 1:, None].astype(jnp.int32)           # [B, T-1, 1]
    mask_row = attention_mask.astype(jnp.float32)[:, None, :]       # [B, 1, T]
    mask_tail = attention_mask.astype(jnp.float32)[:, 1:, None]     # [B, T-1, 1]

    weights = [params[n] for n in _WEIGHT_ORDER]

    in_specs = [
        pl.BlockSpec((None, T, 1), lambda b: (b, 0, 0)),      # ids_col
        pl.BlockSpec((None, T - 1, 1), lambda b: (b, 0, 0)),  # labels_col
        pl.BlockSpec((None, 1, T), lambda b: (b, 0, 0)),      # mask_row
        pl.BlockSpec((None, T - 1, 1), lambda b: (b, 0, 0)),  # mask_tail
    ] + [_full_spec(w) for w in weights]

    prob_refs = pl.pallas_call(
        fused_forward_kernel,
        out_shape=jax.ShapeDtypeStruct((B, T - 1, 1), jnp.float32),
        grid=(B,),
        in_specs=in_specs,
        out_specs=pl.BlockSpec((None, T - 1, 1), lambda b: (b, 0, 0)),
        compiler_params=pltpu.CompilerParams(
            dimension_semantics=("parallel",)),   # v7x: one batch per TensorCore
    )(ids_col, labels_col, mask_row, mask_tail, *weights)

    return prob_refs[..., 0]                                        # [B, T-1]


# ----------------------------- main -------------------------------------------
if __name__ == "__main__":
    params = init_params(0)

    key = jax.random.PRNGKey(0)
    k_ids, _ = jax.random.split(key)
    input_ids = jax.random.randint(k_ids, (B, T), 0, V, dtype=jnp.int32)
    attention_mask = jnp.ones((B, T), jnp.int32).at[1, 6:].set(0)   # pad tail of row 1

    fwd = jax.jit(reference_model_forward)
    prob_refs = fwd(params, input_ids, attention_mask)
    jax.block_until_ready(prob_refs)

    assert prob_refs.shape == (B, T - 1)
    assert bool(jnp.all(jnp.isfinite(prob_refs)))
    print("KERNEL_OK")
</pallas_src>

<mosaic_0001>
module attributes {stable_mosaic.version = 11 : i64} {
  func.func @fused_forward_kernel(%arg0: i32, %arg1: memref<1x8x1xi32, #tpu.memory_space<vmem>>, %arg2: memref<1x7x1xi32, #tpu.memory_space<vmem>>, %arg3: memref<1x1x8xf32, #tpu.memory_space<vmem>>, %arg4: memref<1x7x1xf32, #tpu.memory_space<vmem>>, %arg5: memref<128x32xf32, #tpu.memory_space<vmem>>, %arg6: memref<8x32xf32, #tpu.memory_space<vmem>>, %arg7: memref<2x1x32xf32, #tpu.memory_space<vmem>>, %arg8: memref<2x1x32xf32, #tpu.memory_space<vmem>>, %arg9: memref<2x32x96xf32, #tpu.memory_space<vmem>>, %arg10: memref<2x1x96xf32, #tpu.memory_space<vmem>>, %arg11: memref<2x32x32xf32, #tpu.memory_space<vmem>>, %arg12: memref<2x1x32xf32, #tpu.memory_space<vmem>>, %arg13: memref<2x1x32xf32, #tpu.memory_space<vmem>>, %arg14: memref<2x1x32xf32, #tpu.memory_space<vmem>>, %arg15: memref<2x32x64xf32, #tpu.memory_space<vmem>>, %arg16: memref<2x1x64xf32, #tpu.memory_space<vmem>>, %arg17: memref<2x64x32xf32, #tpu.memory_space<vmem>>, %arg18: memref<2x1x32xf32, #tpu.memory_space<vmem>>, %arg19: memref<1x32xf32, #tpu.memory_space<vmem>>, %arg20: memref<1x32xf32, #tpu.memory_space<vmem>>, %arg21: memref<1x7x1xf32, #tpu.memory_space<vmem>>) attributes {dimension_semantics = [#tpu.dimension_semantics<parallel>], iteration_bounds = array<i64: 2>, scalar_prefetch = 0 : i64, scratch_operands = 0 : i64, tpu.core_type = #tpu.core_type<tc>, window_params = [{transform_indices = @transform_0, window_bounds = array<i64: 1, 8, 1>}, {transform_indices = @transform_1, window_bounds = array<i64: 1, 7, 1>}, {transform_indices = @transform_2, window_bounds = array<i64: 1, 1, 8>}, {transform_indices = @transform_3, window_bounds = array<i64: 1, 7, 1>}, {pipeline_mode = #tpu.pipeline_mode<synchronous>, transform_indices = @transform_4, window_bounds = array<i64: 128, 32>}, {pipeline_mode = #tpu.pipeline_mode<synchronous>, transform_indices = @transform_5, window_bounds = array<i64: 8, 32>}, {pipeline_mode = #tpu.pipeline_mode<synchronous>, transform_indices = @transform_6, window_bounds = array<i64: 2, 1, 32>}, {pipeline_mode = #tpu.pipeline_mode<synchronous>, transform_indices = @transform_7, window_bounds = array<i64: 2, 1, 32>}, {pipeline_mode = #tpu.pipeline_mode<synchronous>, transform_indices = @transform_8, window_bounds = array<i64: 2, 32, 96>}, {pipeline_mode = #tpu.pipeline_mode<synchronous>, transform_indices = @transform_9, window_bounds = array<i64: 2, 1, 96>}, {pipeline_mode = #tpu.pipeline_mode<synchronous>, transform_indices = @transform_10, window_bounds = array<i64: 2, 32, 32>}, {pipeline_mode = #tpu.pipeline_mode<synchronous>, transform_indices = @transform_11, window_bounds = array<i64: 2, 1, 32>}, {pipeline_mode = #tpu.pipeline_mode<synchronous>, transform_indices = @transform_12, window_bounds = array<i64: 2, 1, 32>}, {pipeline_mode = #tpu.pipeline_mode<synchronous>, transform_indices = @transform_13, window_bounds = array<i64: 2, 1, 32>}, {pipeline_mode = #tpu.pipeline_mode<synchronous>, transform_indices = @transform_14, window_bounds = array<i64: 2, 32, 64>}, {pipeline_mode = #tpu.pipeline_mode<synchronous>, transform_indices = @transform_15, window_bounds = array<i64: 2, 1, 64>}, {pipeline_mode = #tpu.pipeline_mode<synchronous>, transform_indices = @transform_16, window_bounds = array<i64: 2, 64, 32>}, {pipeline_mode = #tpu.pipeline_mode<synchronous>, transform_indices = @transform_17, window_bounds = array<i64: 2, 1, 32>}, {pipeline_mode = #tpu.pipeline_mode<synchronous>, transform_indices = @transform_18, window_bounds = array<i64: 1, 32>}, {pipeline_mode = #tpu.pipeline_mode<synchronous>, transform_indices = @transform_19, window_bounds = array<i64: 1, 32>}, {transform_indices = @transform_20, window_bounds = array<i64: 1, 7, 1>}]} {
    %c0 = arith.constant 0 : index
    %c0_0 = arith.constant 0 : index
    %c0_1 = arith.constant 0 : index
    %0 = vector.load %arg1[%c0, %c0_0, %c0_1] : memref<1x8x1xi32, #tpu.memory_space<vmem>>, vector<1x8x1xi32>
    %1 = vector.shape_cast %0 : vector<1x8x1xi32> to vector<8x1xi32>
    %c0_2 = arith.constant 0 : index
    %c0_3 = arith.constant 0 : index
    %c0_4 = arith.constant 0 : index
    %2 = vector.load %arg2[%c0_2, %c0_3, %c0_4] : memref<1x7x1xi32, #tpu.memory_space<vmem>>, vector<1x7x1xi32>
    %3 = vector.shape_cast %2 : vector<1x7x1xi32> to vector<7x1xi32>
    %c0_5 = arith.constant 0 : index
    %c0_6 = arith.constant 0 : index
    %c0_7 = arith.constant 0 : index
    %4 = vector.load %arg3[%c0_5, %c0_6, %c0_7] : memref<1x1x8xf32, #tpu.memory_space<vmem>>, vector<1x1x8xf32>
    %5 = vector.shape_cast %4 : vector<1x1x8xf32> to vector<1x8xf32>
    %c0_8 = arith.constant 0 : index
    %c0_9 = arith.constant 0 : index
    %c0_10 = arith.constant 0 : index
    %6 = vector.load %arg4[%c0_8, %c0_9, %c0_10] : memref<1x7x1xf32, #tpu.memory_space<vmem>>, vector<1x7x1xf32>
    %7 = vector.shape_cast %6 : vector<1x7x1xf32> to vector<7x1xf32>
    %c0_11 = arith.constant 0 : index
    %c0_12 = arith.constant 0 : index
    %8 = vector.load %arg5[%c0_11, %c0_12] : memref<128x32xf32, #tpu.memory_space<vmem>>, vector<128x32xf32>
    %9 = tpu.iota {dimensions = array<i32: 1>} : vector<8x128xi32>
    %10 = vector.broadcast %1 : vector<8x1xi32> to vector<8x128xi32>
    %11 = arith.cmpi eq, %9, %10 : vector<8x128xi32>
    %12 = arith.extui %11 : vector<8x128xi1> to vector<8x128xi32>
    %13 = arith.sitofp %12 : vector<8x128xi32> to vector<8x128xf32>
    %cst = arith.constant dense<0.000000e+00> : vector<8x32xf32>
    %14 = tpu.matmul %13, %8, %cst {dimension_numbers = #tpu.dot_dimension_numbers<[1], [0], [0], [1], [0, 0, 1, 1], [], []>} : vector<8x128xf32>, vector<128x32xf32>, vector<8x32xf32> -> vector<8x32xf32>
    %c0_13 = arith.constant 0 : index
    %c0_14 = arith.constant 0 : index
    %15 = vector.load %arg6[%c0_13, %c0_14] : memref<8x32xf32, #tpu.memory_space<vmem>>, vector<8x32xf32>
    %16 = arith.addf %14, %15 : vector<8x32xf32>
    %17 = tpu.iota {dimensions = array<i32: 0>} : vector<8x8xi32>
    %18 = tpu.iota {dimensions = array<i32: 1>} : vector<8x8xi32>
    %19 = arith.cmpi sle, %18, %17 : vector<8x8xi32>
    %cst_15 = arith.constant 5.000000e-01 : f32
    %20 = vector.broadcast %cst_15 : f32 to vector<1x8xf32>
    %21 = arith.cmpf ogt, %5, %20 : vector<1x8xf32>
    %22 = vector.broadcast %21 : vector<1x8xi1> to vector<8x8xi1>
    %23 = arith.andi %19, %22 : vector<8x8xi1>
    %c0_16 = arith.constant 0 : index
    %c0_17 = arith.constant 0 : index
    %c0_18 = arith.constant 0 : index
    %24 = vector.load %arg7[%c0_16, %c0_17, %c0_18] : memref<2x1x32xf32, #tpu.memory_space<vmem>>, vector<1x1x32xf32>
    %25 = vector.shape_cast %24 : vector<1x1x32xf32> to vector<1x32xf32>
    %c0_19 = arith.constant 0 : index
    %c0_20 = arith.constant 0 : index
    %c0_21 = arith.constant 0 : index
    %26 = vector.load %arg8[%c0_19, %c0_20, %c0_21] : memref<2x1x32xf32, #tpu.memory_space<vmem>>, vector<1x1x32xf32>
    %27 = vector.shape_cast %26 : vector<1x1x32xf32> to vector<1x32xf32>
    %cst_22 = arith.constant dense<0.000000e+00> : vector<8xf32>
    %28 = vector.multi_reduction <add>, %16, %cst_22 [1] : vector<8x32xf32> to vector<8xf32>
    %29 = vector.shape_cast %28 : vector<8xf32> to vector<8x1xf32>
    %cst_23 = arith.constant 3.200000e+01 : f32
    %30 = vector.broadcast %cst_23 : f32 to vector<8x1xf32>
    %31 = arith.divf %29, %30 : vector<8x1xf32>
    %32 = vector.broadcast %31 : vector<8x1xf32> to vector<8x32xf32>
    %33 = arith.subf %16, %32 : vector<8x32xf32>
    %34 = arith.mulf %33, %33 : vector<8x32xf32>
    %cst_24 = arith.constant dense<0.000000e+00> : vector<8xf32>
    %35 = vector.multi_reduction <add>, %34, %cst_24 [1] : vector<8x32xf32> to vector<8xf32>
    %36 = vector.shape_cast %35 : vector<8xf32> to vector<8x1xf32>
    %cst_25 = arith.constant 3.200000e+01 : f32
    %37 = vector.broadcast %cst_25 : f32 to vector<8x1xf32>
    %38 = arith.divf %36, %37 : vector<8x1xf32>
    %39 = vector.broadcast %31 : vector<8x1xf32> to vector<8x32xf32>
    %40 = arith.subf %16, %39 : vector<8x32xf32>
    %cst_26 = arith.constant 9.99999974E-6 : f32
    %41 = vector.broadcast %cst_26 : f32 to vector<8x1xf32>
    %42 = arith.addf %38, %41 : vector<8x1xf32>
    %43 = math.rsqrt %42 : vector<8x1xf32>
    %44 = vector.broadcast %43 : vector<8x1xf32> to vector<8x32xf32>
    %45 = arith.mulf %40, %44 : vector<8x32xf32>
    %46 = vector.broadcast %25 : vector<1x32xf32> to vector<8x32xf32>
    %47 = arith.mulf %45, %46 : vector<8x32xf32>
    %48 = vector.broadcast %27 : vector<1x32xf32> to vector<8x32xf32>
    %49 = arith.addf %47, %48 : vector<8x32xf32>
    %c0_27 = arith.constant 0 : index
    %c0_28 = arith.constant 0 : index
    %c0_29 = arith.constant 0 : index
    %50 = vector.load %arg9[%c0_27, %c0_28, %c0_29] : memref<2x32x96xf32, #tpu.memory_space<vmem>>, vector<1x32x96xf32>
    %51 = vector.shape_cast %50 : vector<1x32x96xf32> to vector<32x96xf32>
    %cst_30 = arith.constant dense<0.000000e+00> : vector<8x96xf32>
    %52 = tpu.matmul %49, %51, %cst_30 {dimension_numbers = #tpu.dot_dimension_numbers<[1], [0], [0], [1], [0, 0, 1, 1], [], []>} : vector<8x32xf32>, vector<32x96xf32>, vector<8x96xf32> -> vector<8x96xf32>
    %c0_31 = arith.constant 0 : index
    %c0_32 = arith.constant 0 : index
    %c0_33 = arith.constant 0 : index
    %53 = vector.load %arg10[%c0_31, %c0_32, %c0_33] : memref<2x1x96xf32, #tpu.memory_space<vmem>>, vector<1x1x96xf32>
    %54 = vector.shape_cast %53 : vector<1x1x96xf32> to vector<1x96xf32>
    %55 = vector.broadcast %54 : vector<1x96xf32> to vector<8x96xf32>
    %56 = arith.addf %52, %55 : vector<8x96xf32>
    %c0_34 = arith.constant 0 : index
    %c0_35 = arith.constant 0 : index
    %c0_36 = arith.constant 0 : index
    %57 = vector.load %arg11[%c0_34, %c0_35, %c0_36] : memref<2x32x32xf32, #tpu.memory_space<vmem>>, vector<1x32x32xf32>
    %58 = vector.shape_cast %57 : vector<1x32x32xf32> to vector<32x32xf32>
    %cst_37 = arith.constant 0.000000e+00 : f32
    %59 = vector.broadcast %cst_37 : f32 to vector<8x32xf32>
    %60 = vector.extract_strided_slice %56 {offsets = [0, 0], sizes = [8, 16], strides = [1, 1]} : vector<8x96xf32> to vector<8x16xf32>
    %61 = vector.extract_strided_slice %56 {offsets = [0, 32], sizes = [8, 16], strides = [1, 1]} : vector<8x96xf32> to vector<8x16xf32>
    %62 = vector.extract_strided_slice %56 {offsets = [0, 64], sizes = [8, 16], strides = [1, 1]} : vector<8x96xf32> to vector<8x16xf32>
    %63 = tpu.transpose %61, [1, 0] : vector<8x16xf32> -> vector<16x8xf32>
    %cst_38 = arith.constant dense<0.000000e+00> : vector<8x8xf32>
    %64 = tpu.matmul %60, %63, %cst_38 {dimension_numbers = #tpu.dot_dimension_numbers<[1], [0], [0], [1], [0, 0, 1, 1], [], []>} : vector<8x16xf32>, vector<16x8xf32>, vector<8x8xf32> -> vector<8x8xf32>
    %cst_39 = arith.constant 2.500000e-01 : f32
    %65 = vector.broadcast %cst_39 : f32 to vector<8x8xf32>
    %66 = arith.mulf %64, %65 : vector<8x8xf32>
    %cst_40 = arith.constant -1.000000e+30 : f32
    %67 = vector.broadcast %cst_40 : f32 to vector<8x8xf32>
    %68 = arith.select %23, %66, %67 : vector<8x8xi1>, vector<8x8xf32>
    %cst_41 = arith.constant dense<0xFF800000> : vector<8xf32>
    %69 = vector.multi_reduction <maximumf>, %68, %cst_41 [1] : vector<8x8xf32> to vector<8xf32>
    %70 = vector.shape_cast %69 : vector<8xf32> to vector<8x1xf32>
    %71 = vector.broadcast %70 : vector<8x1xf32> to vector<8x8xf32>
    %72 = arith.subf %68, %71 : vector<8x8xf32>
    %73 = math.exp %72 : vector<8x8xf32>
    %cst_42 = arith.constant dense<0.000000e+00> : vector<8xf32>
    %74 = vector.multi_reduction <add>, %73, %cst_42 [1] : vector<8x8xf32> to vector<8xf32>
    %75 = vector.shape_cast %74 : vector<8xf32> to vector<8x1xf32>
    %76 = tpu.reciprocal %75 {approx = true} : vector<8x1xf32> -> vector<8x1xf32>
    %77 = vector.broadcast %76 : vector<8x1xf32> to vector<8x8xf32>
    %78 = arith.mulf %73, %77 : vector<8x8xf32>
    %cst_43 = arith.constant dense<0.000000e+00> : vector<8x16xf32>
    %79 = tpu.matmul %78, %62, %cst_43 {dimension_numbers = #tpu.dot_dimension_numbers<[1], [0], [0], [1], [0, 0, 1, 1], [], []>} : vector<8x8xf32>, vector<8x16xf32>, vector<8x16xf32> -> vector<8x16xf32>
    %80 = vector.extract_strided_slice %58 {offsets = [0, 0], sizes = [16, 32], strides = [1, 1]} : vector<32x32xf32> to vector<16x32xf32>
    %cst_44 = arith.constant dense<0.000000e+00> : vector<8x32xf32>
    %81 = tpu.matmul %79, %80, %cst_44 {dimension_numbers = #tpu.dot_dimension_numbers<[1], [0], [0], [1], [0, 0, 1, 1], [], []>} : vector<8x16xf32>, vector<16x32xf32>, vector<8x32xf32> -> vector<8x32xf32>
    %82 = arith.addf %59, %81 : vector<8x32xf32>
    %83 = vector.extract_strided_slice %56 {offsets = [0, 16], sizes = [8, 16], strides = [1, 1]} : vector<8x96xf32> to vector<8x16xf32>
    %84 = vector.extract_strided_slice %56 {offsets = [0, 48], sizes = [8, 16], strides = [1, 1]} : vector<8x96xf32> to vector<8x16xf32>
    %85 = vector.extract_strided_slice %56 {offsets = [0, 80], sizes = [8, 16], strides = [1, 1]} : vector<8x96xf32> to vector<8x16xf32>
    %86 = tpu.transpose %84, [1, 0] : vector<8x16xf32> -> vector<16x8xf32>
    %cst_45 = arith.constant dense<0.000000e+00> : vector<8x8xf32>
    %87 = tpu.matmul %83, %86, %cst_45 {dimension_numbers = #tpu.dot_dimension_numbers<[1], [0], [0], [1], [0, 0, 1, 1], [], []>} : vector<8x16xf32>, vector<16x8xf32>, vector<8x8xf32> -> vector<8x8xf32>
    %cst_46 = arith.constant 2.500000e-01 : f32
    %88 = vector.broadcast %cst_46 : f32 to vector<8x8xf32>
    %89 = arith.mulf %87, %88 : vector<8x8xf32>
    %cst_47 = arith.constant -1.000000e+30 : f32
    %90 = vector.broadcast %cst_47 : f32 to vector<8x8xf32>
    %91 = arith.select %23, %89, %90 : vector<8x8xi1>, vector<8x8xf32>
    %cst_48 = arith.constant dense<0xFF800000> : vector<8xf32>
    %92 = vector.multi_reduction <maximumf>, %91, %cst_48 [1] : vector<8x8xf32> to vector<8xf32>
    %93 = vector.shape_cast %92 : vector<8xf32> to vector<8x1xf32>
    %94 = vector.broadcast %93 : vector<8x1xf32> to vector<8x8xf32>
    %95 = arith.subf %91, %94 : vector<8x8xf32>
    %96 = math.exp %95 : vector<8x8xf32>
    %cst_49 = arith.constant dense<0.000000e+00> : vector<8xf32>
    %97 = vector.multi_reduction <add>, %96, %cst_49 [1] : vector<8x8xf32> to vector<8xf32>
    %98 = vector.shape_cast %97 : vector<8xf32> to vector<8x1xf32>
    %99 = tpu.reciprocal %98 {approx = true} : vector<8x1xf32> -> vector<8x1xf32>
    %100 = vector.broadcast %99 : vector<8x1xf32> to vector<8x8xf32>
    %101 = arith.mulf %96, %100 : vector<8x8xf32>
    %cst_50 = arith.constant dense<0.000000e+00> : vector<8x16xf32>
    %102 = tpu.matmul %101, %85, %cst_50 {dimension_numbers = #tpu.dot_dimension_numbers<[1], [0], [0], [1], [0, 0, 1, 1], [], []>} : vector<8x8xf32>, vector<8x16xf32>, vector<8x16xf32> -> vector<8x16xf32>
    %103 = vector.extract_strided_slice %58 {offsets = [16, 0], sizes = [16, 32], strides = [1, 1]} : vector<32x32xf32> to vector<16x32xf32>
    %cst_51 = arith.constant dense<0.000000e+00> : vector<8x32xf32>
    %104 = tpu.matmul %102, %103, %cst_51 {dimension_numbers = #tpu.dot_dimension_numbers<[1], [0], [0], [1], [0, 0, 1, 1], [], []>} : vector<8x16xf32>, vector<16x32xf32>, vector<8x32xf32> -> vector<8x32xf32>
    %105 = arith.addf %82, %104 : vector<8x32xf32>
    %106 = arith.addf %16, %105 : vector<8x32xf32>
    %c0_52 = arith.constant 0 : index
    %c0_53 = arith.constant 0 : index
    %c0_54 = arith.constant 0 : index
    %107 = vector.load %arg12[%c0_52, %c0_53, %c0_54] : memref<2x1x32xf32, #tpu.memory_space<vmem>>, vector<1x1x32xf32>
    %108 = vector.shape_cast %107 : vector<1x1x32xf32> to vector<1x32xf32>
    %109 = vector.broadcast %108 : vector<1x32xf32> to vector<8x32xf32>
    %110 = arith.addf %106, %109 : vector<8x32xf32>
    %c0_55 = arith.constant 0 : index
    %c0_56 = arith.constant 0 : index
    %c0_57 = arith.constant 0 : index
    %111 = vector.load %arg13[%c0_55, %c0_56, %c0_57] : memref<2x1x32xf32, #tpu.memory_space<vmem>>, vector<1x1x32xf32>
    %112 = vector.shape_cast %111 : vector<1x1x32xf32> to vector<1x32xf32>
    %c0_58 = arith.constant 0 : index
    %c0_59 = arith.constant 0 : index
    %c0_60 = arith.constant 0 : index
    %113 = vector.load %arg14[%c0_58, %c0_59, %c0_60] : memref<2x1x32xf32, #tpu.memory_space<vmem>>, vector<1x1x32xf32>
    %114 = vector.shape_cast %113 : vector<1x1x32xf32> to vector<1x32xf32>
    %cst_61 = arith.constant dense<0.000000e+00> : vector<8xf32>
    %115 = vector.multi_reduction <add>, %110, %cst_61 [1] : vector<8x32xf32> to vector<8xf32>
    %116 = vector.shape_cast %115 : vector<8xf32> to vector<8x1xf32>
    %cst_62 = arith.constant 3.200000e+01 : f32
    %117 = vector.broadcast %cst_62 : f32 to vector<8x1xf32>
    %118 = arith.divf %116, %117 : vector<8x1xf32>
    %119 = vector.broadcast %118 : vector<8x1xf32> to vector<8x32xf32>
    %120 = arith.subf %110, %119 : vector<8x32xf32>
    %121 = arith.mulf %120, %120 : vector<8x32xf32>
    %cst_63 = arith.constant dense<0.000000e+00> : vector<8xf32>
    %122 = vector.multi_reduction <add>, %121, %cst_63 [1] : vector<8x32xf32> to vector<8xf32>
    %123 = vector.shape_cast %122 : vector<8xf32> to vector<8x1xf32>
    %cst_64 = arith.constant 3.200000e+01 : f32
    %124 = vector.broadcast %cst_64 : f32 to vector<8x1xf32>
    %125 = arith.divf %123, %124 : vector<8x1xf32>
    %126 = vector.broadcast %118 : vector<8x1xf32> to vector<8x32xf32>
    %127 = arith.subf %110, %126 : vector<8x32xf32>
    %cst_65 = arith.constant 9.99999974E-6 : f32
    %128 = vector.broadcast %cst_65 : f32 to vector<8x1xf32>
    %129 = arith.addf %125, %128 : vector<8x1xf32>
    %130 = math.rsqrt %129 : vector<8x1xf32>
    %131 = vector.broadcast %130 : vector<8x1xf32> to vector<8x32xf32>
    %132 = arith.mulf %127, %131 : vector<8x32xf32>
    %133 = vector.broadcast %112 : vector<1x32xf32> to vector<8x32xf32>
    %134 = arith.mulf %132, %133 : vector<8x32xf32>
    %135 = vector.broadcast %114 : vector<1x32xf32> to vector<8x32xf32>
    %136 = arith.addf %134, %135 : vector<8x32xf32>
    %c0_66 = arith.constant 0 : index
    %c0_67 = arith.constant 0 : index
    %c0_68 = arith.constant 0 : index
    %137 = vector.load %arg15[%c0_66, %c0_67, %c0_68] : memref<2x32x64xf32, #tpu.memory_space<vmem>>, vector<1x32x64xf32>
    %138 = vector.shape_cast %137 : vector<1x32x64xf32> to vector<32x64xf32>
    %cst_69 = arith.constant dense<0.000000e+00> : vector<8x64xf32>
    %139 = tpu.matmul %136, %138, %cst_69 {dimension_numbers = #tpu.dot_dimension_numbers<[1], [0], [0], [1], [0, 0, 1, 1], [], []>} : vector<8x32xf32>, vector<32x64xf32>, vector<8x64xf32> -> vector<8x64xf32>
    %c0_70 = arith.constant 0 : index
    %c0_71 = arith.constant 0 : index
    %c0_72 = arith.constant 0 : index
    %140 = vector.load %arg16[%c0_70, %c0_71, %c0_72] : memref<2x1x64xf32, #tpu.memory_space<vmem>>, vector<1x1x64xf32>
    %141 = vector.shape_cast %140 : vector<1x1x64xf32> to vector<1x64xf32>
    %142 = vector.broadcast %141 : vector<1x64xf32> to vector<8x64xf32>
    %143 = arith.addf %139, %142 : vector<8x64xf32>
    %144 = arith.mulf %143, %143 : vector<8x64xf32>
    %145 = arith.mulf %143, %144 : vector<8x64xf32>
    %cst_73 = arith.constant 4.471500e-02 : f32
    %146 = vector.broadcast %cst_73 : f32 to vector<8x64xf32>
    %147 = arith.mulf %146, %145 : vector<8x64xf32>
    %148 = arith.addf %143, %147 : vector<8x64xf32>
    %cst_74 = arith.constant 0.797884583 : f32
    %149 = vector.broadcast %cst_74 : f32 to vector<8x64xf32>
    %150 = arith.mulf %149, %148 : vector<8x64xf32>
    %151 = math.tanh %150 : vector<8x64xf32>
    %cst_75 = arith.constant 1.000000e+00 : f32
    %152 = vector.broadcast %cst_75 : f32 to vector<8x64xf32>
    %153 = arith.addf %152, %151 : vector<8x64xf32>
    %cst_76 = arith.constant 5.000000e-01 : f32
    %154 = vector.broadcast %cst_76 : f32 to vector<8x64xf32>
    %155 = arith.mulf %154, %153 : vector<8x64xf32>
    %156 = arith.mulf %143, %155 : vector<8x64xf32>
    %c0_77 = arith.constant 0 : index
    %c0_78 = arith.constant 0 : index
    %c0_79 = arith.constant 0 : index
    %157 = vector.load %arg17[%c0_77, %c0_78, %c0_79] : memref<2x64x32xf32, #tpu.memory_space<vmem>>, vector<1x64x32xf32>
    %158 = vector.shape_cast %157 : vector<1x64x32xf32> to vector<64x32xf32>
    %cst_80 = arith.constant dense<0.000000e+00> : vector<8x32xf32>
    %159 = tpu.matmul %156, %158, %cst_80 {dimension_numbers = #tpu.dot_dimension_numbers<[1], [0], [0], [1], [0, 0, 1, 1], [], []>} : vector<8x64xf32>, vector<64x32xf32>, vector<8x32xf32> -> vector<8x32xf32>
    %160 = arith.addf %110, %159 : vector<8x32xf32>
    %c0_81 = arith.constant 0 : index
    %c0_82 = arith.constant 0 : index
    %c0_83 = arith.constant 0 : index
    %161 = vector.load %arg18[%c0_81, %c0_82, %c0_83] : memref<2x1x32xf32, #tpu.memory_space<vmem>>, vector<1x1x32xf32>
    %162 = vector.shape_cast %161 : vector<1x1x32xf32> to vector<1x32xf32>
    %163 = vector.broadcast %162 : vector<1x32xf32> to vector<8x32xf32>
    %164 = arith.addf %160, %163 : vector<8x32xf32>
    %c1 = arith.constant 1 : index
    %c0_84 = arith.constant 0 : index
    %c0_85 = arith.constant 0 : index
    %165 = vector.load %arg7[%c1, %c0_84, %c0_85] : memref<2x1x32xf32, #tpu.memory_space<vmem>>, vector<1x1x32xf32>
    %166 = vector.shape_cast %165 : vector<1x1x32xf32> to vector<1x32xf32>
    %c1_86 = arith.constant 1 : index
    %c0_87 = arith.constant 0 : index
    %c0_88 = arith.constant 0 : index
    %167 = vector.load %arg8[%c1_86, %c0_87, %c0_88] : memref<2x1x32xf32, #tpu.memory_space<vmem>>, vector<1x1x32xf32>
    %168 = vector.shape_cast %167 : vector<1x1x32xf32> to vector<1x32xf32>
    %cst_89 = arith.constant dense<0.000000e+00> : vector<8xf32>
    %169 = vector.multi_reduction <add>, %164, %cst_89 [1] : vector<8x32xf32> to vector<8xf32>
    %170 = vector.shape_cast %169 : vector<8xf32> to vector<8x1xf32>
    %cst_90 = arith.constant 3.200000e+01 : f32
    %171 = vector.broadcast %cst_90 : f32 to vector<8x1xf32>
    %172 = arith.divf %170, %171 : vector<8x1xf32>
    %173 = vector.broadcast %172 : vector<8x1xf32> to vector<8x32xf32>
    %174 = arith.subf %164, %173 : vector<8x32xf32>
    %175 = arith.mulf %174, %174 : vector<8x32xf32>
    %cst_91 = arith.constant dense<0.000000e+00> : vector<8xf32>
    %176 = vector.multi_reduction <add>, %175, %cst_91 [1] : vector<8x32xf32> to vector<8xf32>
    %177 = vector.shape_cast %176 : vector<8xf32> to vector<8x1xf32>
    %cst_92 = arith.constant 3.200000e+01 : f32
    %178 = vector.broadcast %cst_92 : f32 to vector<8x1xf32>
    %179 = arith.divf %177, %178 : vector<8x1xf32>
    %180 = vector.broadcast %172 : vector<8x1xf32> to vector<8x32xf32>
    %181 = arith.subf %164, %180 : vector<8x32xf32>
    %cst_93 = arith.constant 9.99999974E-6 : f32
    %182 = vector.broadcast %cst_93 : f32 to vector<8x1xf32>
    %183 = arith.addf %179, %182 : vector<8x1xf32>
    %184 = math.rsqrt %183 : vector<8x1xf32>
    %185 = vector.broadcast %184 : vector<8x1xf32> to vector<8x32xf32>
    %186 = arith.mulf %181, %185 : vector<8x32xf32>
    %187 = vector.broadcast %166 : vector<1x32xf32> to vector<8x32xf32>
    %188 = arith.mulf %186, %187 : vector<8x32xf32>
    %189 = vector.broadcast %168 : vector<1x32xf32> to vector<8x32xf32>
    %190 = arith.addf %188, %189 : vector<8x32xf32>
    %c1_94 = arith.constant 1 : index
    %c0_95 = arith.constant 0 : index
    %c0_96 = arith.constant 0 : index
    %191 = vector.load %arg9[%c1_94, %c0_95, %c0_96] : memref<2x32x96xf32, #tpu.memory_space<vmem>>, vector<1x32x96xf32>
    %192 = vector.shape_cast %191 : vector<1x32x96xf32> to vector<32x96xf32>
    %cst_97 = arith.constant dense<0.000000e+00> : vector<8x96xf32>
    %193 = tpu.matmul %190, %192, %cst_97 {dimension_numbers = #tpu.dot_dimension_numbers<[1], [0], [0], [1], [0, 0, 1, 1], [], []>} : vector<8x32xf32>, vector<32x96xf32>, vector<8x96xf32> -> vector<8x96xf32>
    %c1_98 = arith.constant 1 : index
    %c0_99 = arith.constant 0 : index
    %c0_100 = arith.constant 0 : index
    %194 = vector.load %arg10[%c1_98, %c0_99, %c0_100] : memref<2x1x96xf32, #tpu.memory_space<vmem>>, vector<1x1x96xf32>
    %195 = vector.shape_cast %194 : vector<1x1x96xf32> to vector<1x96xf32>
    %196 = vector.broadcast %195 : vector<1x96xf32> to vector<8x96xf32>
    %197 = arith.addf %193, %196 : vector<8x96xf32>
    %c1_101 = arith.constant 1 : index
    %c0_102 = arith.constant 0 : index
    %c0_103 = arith.constant 0 : index
    %198 = vector.load %arg11[%c1_101, %c0_102, %c0_103] : memref<2x32x32xf32, #tpu.memory_space<vmem>>, vector<1x32x32xf32>
    %199 = vector.shape_cast %198 : vector<1x32x32xf32> to vector<32x32xf32>
    %cst_104 = arith.constant 0.000000e+00 : f32
    %200 = vector.broadcast %cst_104 : f32 to vector<8x32xf32>
    %201 = vector.extract_strided_slice %197 {offsets = [0, 0], sizes = [8, 16], strides = [1, 1]} : vector<8x96xf32> to vector<8x16xf32>
    %202 = vector.extract_strided_slice %197 {offsets = [0, 32], sizes = [8, 16], strides = [1, 1]} : vector<8x96xf32> to vector<8x16xf32>
    %203 = vector.extract_strided_slice %197 {offsets = [0, 64], sizes = [8, 16], strides = [1, 1]} : vector<8x96xf32> to vector<8x16xf32>
    %204 = tpu.transpose %202, [1, 0] : vector<8x16xf32> -> vector<16x8xf32>
    %cst_105 = arith.constant dense<0.000000e+00> : vector<8x8xf32>
    %205 = tpu.matmul %201, %204, %cst_105 {dimension_numbers = #tpu.dot_dimension_numbers<[1], [0], [0], [1], [0, 0, 1, 1], [], []>} : vector<8x16xf32>, vector<16x8xf32>, vector<8x8xf32> -> vector<8x8xf32>
    %cst_106 = arith.constant 2.500000e-01 : f32
    %206 = vector.broadcast %cst_106 : f32 to vector<8x8xf32>
    %207 = arith.mulf %205, %206 : vector<8x8xf32>
    %cst_107 = arith.constant -1.000000e+30 : f32
    %208 = vector.broadcast %cst_107 : f32 to vector<8x8xf32>
    %209 = arith.select %23, %207, %208 : vector<8x8xi1>, vector<8x8xf32>
    %cst_108 = arith.constant dense<0xFF800000> : vector<8xf32>
    %210 = vector.multi_reduction <maximumf>, %209, %cst_108 [1] : vector<8x8xf32> to vector<8xf32>
    %211 = vector.shape_cast %210 : vector<8xf32> to vector<8x1xf32>
    %212 = vector.broadcast %211 : vector<8x1xf32> to vector<8x8xf32>
    %213 = arith.subf %209, %212 : vector<8x8xf32>
    %214 = math.exp %213 : vector<8x8xf32>
    %cst_109 = arith.constant dense<0.000000e+00> : vector<8xf32>
    %215 = vector.multi_reduction <add>, %214, %cst_109 [1] : vector<8x8xf32> to vector<8xf32>
    %216 = vector.shape_cast %215 : vector<8xf32> to vector<8x1xf32>
    %217 = tpu.reciprocal %216 {approx = true} : vector<8x1xf32> -> vector<8x1xf32>
    %218 = vector.broadcast %217 : vector<8x1xf32> to vector<8x8xf32>
    %219 = arith.mulf %214, %218 : vector<8x8xf32>
    %cst_110 = arith.constant dense<0.000000e+00> : vector<8x16xf32>
    %220 = tpu.matmul %219, %203, %cst_110 {dimension_numbers = #tpu.dot_dimension_numbers<[1], [0], [0], [1], [0, 0, 1, 1], [], []>} : vector<8x8xf32>, vector<8x16xf32>, vector<8x16xf32> -> vector<8x16xf32>
    %221 = vector.extract_strided_slice %199 {offsets = [0, 0], sizes = [16, 32], strides = [1, 1]} : vector<32x32xf32> to vector<16x32xf32>
    %cst_111 = arith.constant dense<0.000000e+00> : vector<8x32xf32>
    %222 = tpu.matmul %220, %221, %cst_111 {dimension_numbers = #tpu.dot_dimension_numbers<[1], [0], [0], [1], [0, 0, 1, 1], [], []>} : vector<8x16xf32>, vector<16x32xf32>, vector<8x32xf32> -> vector<8x32xf32>
    %223 = arith.addf %200, %222 : vector<8x32xf32>
    %224 = vector.extract_strided_slice %197 {offsets = [0, 16], sizes = [8, 16], strides = [1, 1]} : vector<8x96xf32> to vector<8x16xf32>
    %225 = vector.extract_strided_slice %197 {offsets = [0, 48], sizes = [8, 16], strides = [1, 1]} : vector<8x96xf32> to vector<8x16xf32>
    %226 = vector.extract_strided_slice %197 {offsets = [0, 80], sizes = [8, 16], strides = [1, 1]} : vector<8x96xf32> to vector<8x16xf32>
    %227 = tpu.transpose %225, [1, 0] : vector<8x16xf32> -> vector<16x8xf32>
    %cst_112 = arith.constant dense<0.000000e+00> : vector<8x8xf32>
    %228 = tpu.matmul %224, %227, %cst_112 {dimension_numbers = #tpu.dot_dimension_numbers<[1], [0], [0], [1], [0, 0, 1, 1], [], []>} : vector<8x16xf32>, vector<16x8xf32>, vector<8x8xf32> -> vector<8x8xf32>
    %cst_113 = arith.constant 2.500000e-01 : f32
    %229 = vector.broadcast %cst_113 : f32 to vector<8x8xf32>
    %230 = arith.mulf %228, %229 : vector<8x8xf32>
    %cst_114 = arith.constant -1.000000e+30 : f32
    %231 = vector.broadcast %cst_114 : f32 to vector<8x8xf32>
    %232 = arith.select %23, %230, %231 : vector<8x8xi1>, vector<8x8xf32>
    %cst_115 = arith.constant dense<0xFF800000> : vector<8xf32>
    %233 = vector.multi_reduction <maximumf>, %232, %cst_115 [1] : vector<8x8xf32> to vector<8xf32>
    %234 = vector.shape_cast %233 : vector<8xf32> to vector<8x1xf32>
    %235 = vector.broadcast %234 : vector<8x1xf32> to vector<8x8xf32>
    %236 = arith.subf %232, %235 : vector<8x8xf32>
    %237 = math.exp %236 : vector<8x8xf32>
    %cst_116 = arith.constant dense<0.000000e+00> : vector<8xf32>
    %238 = vector.multi_reduction <add>, %237, %cst_116 [1] : vector<8x8xf32> to vector<8xf32>
    %239 = vector.shape_cast %238 : vector<8xf32> to vector<8x1xf32>
    %240 = tpu.reciprocal %239 {approx = true} : vector<8x1xf32> -> vector<8x1xf32>
    %241 = vector.broadcast %240 : vector<8x1xf32> to vector<8x8xf32>
    %242 = arith.mulf %237, %241 : vector<8x8xf32>
    %cst_117 = arith.constant dense<0.000000e+00> : vector<8x16xf32>
    %243 = tpu.matmul %242, %226, %cst_117 {dimension_numbers = #tpu.dot_dimension_numbers<[1], [0], [0], [1], [0, 0, 1, 1], [], []>} : vector<8x8xf32>, vector<8x16xf32>, vector<8x16xf32> -> vector<8x16xf32>
    %244 = vector.extract_strided_slice %199 {offsets = [16, 0], sizes = [16, 32], strides = [1, 1]} : vector<32x32xf32> to vector<16x32xf32>
    %cst_118 = arith.constant dense<0.000000e+00> : vector<8x32xf32>
    %245 = tpu.matmul %243, %244, %cst_118 {dimension_numbers = #tpu.dot_dimension_numbers<[1], [0], [0], [1], [0, 0, 1, 1], [], []>} : vector<8x16xf32>, vector<16x32xf32>, vector<8x32xf32> -> vector<8x32xf32>
    %246 = arith.addf %223, %245 : vector<8x32xf32>
    %247 = arith.addf %164, %246 : vector<8x32xf32>
    %c1_119 = arith.constant 1 : index
    %c0_120 = arith.constant 0 : index
    %c0_121 = arith.constant 0 : index
    %248 = vector.load %arg12[%c1_119, %c0_120, %c0_121] : memref<2x1x32xf32, #tpu.memory_space<vmem>>, vector<1x1x32xf32>
    %249 = vector.shape_cast %248 : vector<1x1x32xf32> to vector<1x32xf32>
    %250 = vector.broadcast %249 : vector<1x32xf32> to vector<8x32xf32>
    %251 = arith.addf %247, %250 : vector<8x32xf32>
    %c1_122 = arith.constant 1 : index
    %c0_123 = arith.constant 0 : index
    %c0_124 = arith.constant 0 : index
    %252 = vector.load %arg13[%c1_122, %c0_123, %c0_124] : memref<2x1x32xf32, #tpu.memory_space<vmem>>, vector<1x1x32xf32>
    %253 = vector.shape_cast %252 : vector<1x1x32xf32> to vector<1x32xf32>
    %c1_125 = arith.constant 1 : index
    %c0_126 = arith.constant 0 : index
    %c0_127 = arith.constant 0 : index
    %254 = vector.load %arg14[%c1_125, %c0_126, %c0_127] : memref<2x1x32xf32, #tpu.memory_space<vmem>>, vector<1x1x32xf32>
    %255 = vector.shape_cast %254 : vector<1x1x32xf32> to vector<1x32xf32>
    %cst_128 = arith.constant dense<0.000000e+00> : vector<8xf32>
    %256 = vector.multi_reduction <add>, %251, %cst_128 [1] : vector<8x32xf32> to vector<8xf32>
    %257 = vector.shape_cast %256 : vector<8xf32> to vector<8x1xf32>
    %cst_129 = arith.constant 3.200000e+01 : f32
    %258 = vector.broadcast %cst_129 : f32 to vector<8x1xf32>
    %259 = arith.divf %257, %258 : vector<8x1xf32>
    %260 = vector.broadcast %259 : vector<8x1xf32> to vector<8x32xf32>
    %261 = arith.subf %251, %260 : vector<8x32xf32>
    %262 = arith.mulf %261, %261 : vector<8x32xf32>
    %cst_130 = arith.constant dense<0.000000e+00> : vector<8xf32>
    %263 = vector.multi_reduction <add>, %262, %cst_130 [1] : vector<8x32xf32> to vector<8xf32>
    %264 = vector.shape_cast %263 : vector<8xf32> to vector<8x1xf32>
    %cst_131 = arith.constant 3.200000e+01 : f32
    %265 = vector.broadcast %cst_131 : f32 to vector<8x1xf32>
    %266 = arith.divf %264, %265 : vector<8x1xf32>
    %267 = vector.broadcast %259 : vector<8x1xf32> to vector<8x32xf32>
    %268 = arith.subf %251, %267 : vector<8x32xf32>
    %cst_132 = arith.constant 9.99999974E-6 : f32
    %269 = vector.broadcast %cst_132 : f32 to vector<8x1xf32>
    %270 = arith.addf %266, %269 : vector<8x1xf32>
    %271 = math.rsqrt %270 : vector<8x1xf32>
    %272 = vector.broadcast %271 : vector<8x1xf32> to vector<8x32xf32>
    %273 = arith.mulf %268, %272 : vector<8x32xf32>
    %274 = vector.broadcast %253 : vector<1x32xf32> to vector<8x32xf32>
    %275 = arith.mulf %273, %274 : vector<8x32xf32>
    %276 = vector.broadcast %255 : vector<1x32xf32> to vector<8x32xf32>
    %277 = arith.addf %275, %276 : vector<8x32xf32>
    %c1_133 = arith.constant 1 : index
    %c0_134 = arith.constant 0 : index
    %c0_135 = arith.constant 0 : index
    %278 = vector.load %arg15[%c1_133, %c0_134, %c0_135] : memref<2x32x64xf32, #tpu.memory_space<vmem>>, vector<1x32x64xf32>
    %279 = vector.shape_cast %278 : vector<1x32x64xf32> to vector<32x64xf32>
    %cst_136 = arith.constant dense<0.000000e+00> : vector<8x64xf32>
    %280 = tpu.matmul %277, %279, %cst_136 {dimension_numbers = #tpu.dot_dimension_numbers<[1], [0], [0], [1], [0, 0, 1, 1], [], []>} : vector<8x32xf32>, vector<32x64xf32>, vector<8x64xf32> -> vector<8x64xf32>
    %c1_137 = arith.constant 1 : index
    %c0_138 = arith.constant 0 : index
    %c0_139 = arith.constant 0 : index
    %281 = vector.load %arg16[%c1_137, %c0_138, %c0_139] : memref<2x1x64xf32, #tpu.memory_space<vmem>>, vector<1x1x64xf32>
    %282 = vector.shape_cast %281 : vector<1x1x64xf32> to vector<1x64xf32>
    %283 = vector.broadcast %282 : vector<1x64xf32> to vector<8x64xf32>
    %284 = arith.addf %280, %283 : vector<8x64xf32>
    %285 = arith.mulf %284, %284 : vector<8x64xf32>
    %286 = arith.mulf %284, %285 : vector<8x64xf32>
    %cst_140 = arith.constant 4.471500e-02 : f32
    %287 = vector.broadcast %cst_140 : f32 to vector<8x64xf32>
    %288 = arith.mulf %287, %286 : vector<8x64xf32>
    %289 = arith.addf %284, %288 : vector<8x64xf32>
    %cst_141 = arith.constant 0.797884583 : f32
    %290 = vector.broadcast %cst_141 : f32 to vector<8x64xf32>
    %291 = arith.mulf %290, %289 : vector<8x64xf32>
    %292 = math.tanh %291 : vector<8x64xf32>
    %cst_142 = arith.constant 1.000000e+00 : f32
    %293 = vector.broadcast %cst_142 : f32 to vector<8x64xf32>
    %294 = arith.addf %293, %292 : vector<8x64xf32>
    %cst_143 = arith.constant 5.000000e-01 : f32
    %295 = vector.broadcast %cst_143 : f32 to vector<8x64xf32>
    %296 = arith.mulf %295, %294 : vector<8x64xf32>
    %297 = arith.mulf %284, %296 : vector<8x64xf32>
    %c1_144 = arith.constant 1 : index
    %c0_145 = arith.constant 0 : index
    %c0_146 = arith.constant 0 : index
    %298 = vector.load %arg17[%c1_144, %c0_145, %c0_146] : memref<2x64x32xf32, #tpu.memory_space<vmem>>, vector<1x64x32xf32>
    %299 = vector.shape_cast %298 : vector<1x64x32xf32> to vector<64x32xf32>
    %cst_147 = arith.constant dense<0.000000e+00> : vector<8x32xf32>
    %300 = tpu.matmul %297, %299, %cst_147 {dimension_numbers = #tpu.dot_dimension_numbers<[1], [0], [0], [1], [0, 0, 1, 1], [], []>} : vector<8x64xf32>, vector<64x32xf32>, vector<8x32xf32> -> vector<8x32xf32>
    %301 = arith.addf %251, %300 : vector<8x32xf32>
    %c1_148 = arith.constant 1 : index
    %c0_149 = arith.constant 0 : index
    %c0_150 = arith.constant 0 : index
    %302 = vector.load %arg18[%c1_148, %c0_149, %c0_150] : memref<2x1x32xf32, #tpu.memory_space<vmem>>, vector<1x1x32xf32>
    %303 = vector.shape_cast %302 : vector<1x1x32xf32> to vector<1x32xf32>
    %304 = vector.broadcast %303 : vector<1x32xf32> to vector<8x32xf32>
    %305 = arith.addf %301, %304 : vector<8x32xf32>
    %c0_151 = arith.constant 0 : index
    %c0_152 = arith.constant 0 : index
    %306 = vector.load %arg19[%c0_151, %c0_152] : memref<1x32xf32, #tpu.memory_space<vmem>>, vector<1x32xf32>
    %c0_153 = arith.constant 0 : index
    %c0_154 = arith.constant 0 : index
    %307 = vector.load %arg20[%c0_153, %c0_154] : memref<1x32xf32, #tpu.memory_space<vmem>>, vector<1x32xf32>
    %cst_155 = arith.constant dense<0.000000e+00> : vector<8xf32>
    %308 = vector.multi_reduction <add>, %305, %cst_155 [1] : vector<8x32xf32> to vector<8xf32>
    %309 = vector.shape_cast %308 : vector<8xf32> to vector<8x1xf32>
    %cst_156 = arith.constant 3.200000e+01 : f32
    %310 = vector.broadcast %cst_156 : f32 to vector<8x1xf32>
    %311 = arith.divf %309, %310 : vector<8x1xf32>
    %312 = vector.broadcast %311 : vector<8x1xf32> to vector<8x32xf32>
    %313 = arith.subf %305, %312 : vector<8x32xf32>
    %314 = arith.mulf %313, %313 : vector<8x32xf32>
    %cst_157 = arith.constant dense<0.000000e+00> : vector<8xf32>
    %315 = vector.multi_reduction <add>, %314, %cst_157 [1] : vector<8x32xf32> to vector<8xf32>
    %316 = vector.shape_cast %315 : vector<8xf32> to vector<8x1xf32>
    %cst_158 = arith.constant 3.200000e+01 : f32
    %317 = vector.broadcast %cst_158 : f32 to vector<8x1xf32>
    %318 = arith.divf %316, %317 : vector<8x1xf32>
    %319 = vector.broadcast %311 : vector<8x1xf32> to vector<8x32xf32>
    %320 = arith.subf %305, %319 : vector<8x32xf32>
    %cst_159 = arith.constant 9.99999974E-6 : f32
    %321 = vector.broadcast %cst_159 : f32 to vector<8x1xf32>
    %322 = arith.addf %318, %321 : vector<8x1xf32>
    %323 = math.rsqrt %322 : vector<8x1xf32>
    %324 = vector.broadcast %323 : vector<8x1xf32> to vector<8x32xf32>
    %325 = arith.mulf %320, %324 : vector<8x32xf32>
    %326 = vector.broadcast %306 : vector<1x32xf32> to vector<8x32xf32>
    %327 = arith.mulf %325, %326 : vector<8x32xf32>
    %328 = vector.broadcast %307 : vector<1x32xf32> to vector<8x32xf32>
    %329 = arith.addf %327, %328 : vector<8x32xf32>
    %cst_160 = arith.constant dense<0.000000e+00> : vector<8x128xf32>
    %330 = tpu.matmul %329, %8, %cst_160 {dimension_numbers = #tpu.dot_dimension_numbers<[1], [1], [0], [0], [0, 0, 1, 0], [], []>} : vector<8x32xf32>, vector<128x32xf32>, vector<8x128xf32> -> vector<8x128xf32>
    %331 = vector.extract_strided_slice %330 {offsets = [0, 0], sizes = [7, 128], strides = [1, 1]} : vector<8x128xf32> to vector<7x128xf32>
    %cst_161 = arith.constant dense<0xFF800000> : vector<7xf32>
    %332 = vector.multi_reduction <maximumf>, %331, %cst_161 [1] : vector<7x128xf32> to vector<7xf32>
    %333 = vector.shape_cast %332 : vector<7xf32> to vector<7x1xf32>
    %334 = vector.broadcast %333 : vector<7x1xf32> to vector<7x128xf32>
    %335 = arith.subf %331, %334 : vector<7x128xf32>
    %336 = math.exp %335 : vector<7x128xf32>
    %cst_162 = arith.constant dense<0.000000e+00> : vector<7xf32>
    %337 = vector.multi_reduction <add>, %336, %cst_162 [1] : vector<7x128xf32> to vector<7xf32>
    %338 = vector.shape_cast %337 : vector<7xf32> to vector<7x1xf32>
    %339 = math.log %338 : vector<7x1xf32>
    %340 = arith.addf %339, %333 : vector<7x1xf32>
    %341 = tpu.iota {dimensions = array<i32: 1>} : vector<7x128xi32>
    %342 = vector.broadcast %3 : vector<7x1xi32> to vector<7x128xi32>
    %343 = arith.cmpi eq, %341, %342 : vector<7x128xi32>
    %cst_163 = arith.constant 0.000000e+00 : f32
    %344 = vector.broadcast %cst_163 : f32 to vector<7x128xf32>
    %345 = arith.select %343, %331, %344 : vector<7x128xi1>, vector<7x128xf32>
    %cst_164 = arith.constant dense<0.000000e+00> : vector<7xf32>
    %346 = vector.multi_reduction <add>, %345, %cst_164 [1] : vector<7x128xf32> to vector<7xf32>
    %347 = vector.shape_cast %346 : vector<7xf32> to vector<7x1xf32>
    %348 = arith.subf %347, %340 : vector<7x1xf32>
    %349 = arith.mulf %348, %7 : vector<7x1xf32>
    %c0_165 = arith.constant 0 : index
    %c0_166 = arith.constant 0 : index
    %c0_167 = arith.constant 0 : index
    %350 = vector.load %arg21[%c0_165, %c0_166, %c0_167] : memref<1x7x1xf32, #tpu.memory_space<vmem>>, vector<1x7x1xf32>
    %351 = vector.shape_cast %350 : vector<1x7x1xf32> to vector<7x1xf32>
    %352 = vector.shape_cast %349 : vector<7x1xf32> to vector<1x7x1xf32>
    tpu.vector_store %arg21[%c0_165, %c0_166, %c0_167], %352 {strides = array<i32>} : memref<1x7x1xf32, #tpu.memory_space<vmem>>, vector<1x7x1xf32>,
    return
  }
  func.func @transform_0(%arg0: i32) -> (i32, i32, i32) {
    %c0_i32 = arith.constant 0 : i32
    %c0_i32_0 = arith.constant 0 : i32
    %c0_i32_1 = arith.constant 0 : i32
    return %arg0, %c0_i32, %c0_i32_0 : i32, i32, i32
  }
  func.func @transform_1(%arg0: i32) -> (i32, i32, i32) {
    %c0_i32 = arith.constant 0 : i32
    %c0_i32_0 = arith.constant 0 : i32
    %c0_i32_1 = arith.constant 0 : i32
    return %arg0, %c0_i32, %c0_i32_0 : i32, i32, i32
  }
  func.func @transform_2(%arg0: i32) -> (i32, i32, i32) {
    %c0_i32 = arith.constant 0 : i32
    %c0_i32_0 = arith.constant 0 : i32
    %c0_i32_1 = arith.constant 0 : i32
    return %arg0, %c0_i32, %c0_i32_0 : i32, i32, i32
  }
  func.func @transform_3(%arg0: i32) -> (i32, i32, i32) {
    %c0_i32 = arith.constant 0 : i32
    %c0_i32_0 = arith.constant 0 : i32
    %c0_i32_1 = arith.constant 0 : i32
    return %arg0, %c0_i32, %c0_i32_0 : i32, i32, i32
  }
  func.func @transform_4(%arg0: i32) -> (i32, i32) {
    %c0_i32 = arith.constant 0 : i32
    %c0_i32_0 = arith.constant 0 : i32
    %c0_i32_1 = arith.constant 0 : i32
    return %c0_i32, %c0_i32_0 : i32, i32
  }
  func.func @transform_5(%arg0: i32) -> (i32, i32) {
    %c0_i32 = arith.constant 0 : i32
    %c0_i32_0 = arith.constant 0 : i32
    %c0_i32_1 = arith.constant 0 : i32
    return %c0_i32, %c0_i32_0 : i32, i32
  }
  func.func @transform_6(%arg0: i32) -> (i32, i32, i32) {
    %c0_i32 = arith.constant 0 : i32
    %c0_i32_0 = arith.constant 0 : i32
    %c0_i32_1 = arith.constant 0 : i32
    %c0_i32_2 = arith.constant 0 : i32
    return %c0_i32, %c0_i32_0, %c0_i32_1 : i32, i32, i32
  }
  func.func @transform_7(%arg0: i32) -> (i32, i32, i32) {
    %c0_i32 = arith.constant 0 : i32
    %c0_i32_0 = arith.constant 0 : i32
    %c0_i32_1 = arith.constant 0 : i32
    %c0_i32_2 = arith.constant 0 : i32
    return %c0_i32, %c0_i32_0, %c0_i32_1 : i32, i32, i32
  }
  func.func @transform_8(%arg0: i32) -> (i32, i32, i32) {
    %c0_i32 = arith.constant 0 : i32
    %c0_i32_0 = arith.constant 0 : i32
    %c0_i32_1 = arith.constant 0 : i32
    %c0_i32_2 = arith.constant 0 : i32
    return %c0_i32, %c0_i32_0, %c0_i32_1 : i32, i32, i32
  }
  func.func @transform_9(%arg0: i32) -> (i32, i32, i32) {
    %c0_i32 = arith.constant 0 : i32
    %c0_i32_0 = arith.constant 0 : i32
    %c0_i32_1 = arith.constant 0 : i32
    %c0_i32_2 = arith.constant 0 : i32
    return %c0_i32, %c0_i32_0, %c0_i32_1 : i32, i32, i32
  }
  func.func @transform_10(%arg0: i32) -> (i32, i32, i32) {
    %c0_i32 = arith.constant 0 : i32
    %c0_i32_0 = arith.constant 0 : i32
    %c0_i32_1 = arith.constant 0 : i32
    %c0_i32_2 = arith.constant 0 : i32
    return %c0_i32, %c0_i32_0, %c0_i32_1 : i32, i32, i32
  }
  func.func @transform_11(%arg0: i32) -> (i32, i32, i32) {
    %c0_i32 = arith.constant 0 : i32
    %c0_i32_0 = arith.constant 0 : i32
    %c0_i32_1 = arith.constant 0 : i32
    %c0_i32_2 = arith.constant 0 : i32
    return %c0_i32, %c0_i32_0, %c0_i32_1 : i32, i32, i32
  }
  func.func @transform_12(%arg0: i32) -> (i32, i32, i32) {
    %c0_i32 = arith.constant 0 : i32
    %c0_i32_0 = arith.constant 0 : i32
    %c0_i32_1 = arith.constant 0 : i32
    %c0_i32_2 = arith.constant 0 : i32
    return %c0_i32, %c0_i32_0, %c0_i32_1 : i32, i32, i32
  }
  func.func @transform_13(%arg0: i32) -> (i32, i32, i32) {
    %c0_i32 = arith.constant 0 : i32
    %c0_i32_0 = arith.constant 0 : i32
    %c0_i32_1 = arith.constant 0 : i32
    %c0_i32_2 = arith.constant 0 : i32
    return %c0_i32, %c0_i32_0, %c0_i32_1 : i32, i32, i32
  }
  func.func @transform_14(%arg0: i32) -> (i32, i32, i32) {
    %c0_i32 = arith.constant 0 : i32
    %c0_i32_0 = arith.constant 0 : i32
    %c0_i32_1 = arith.constant 0 : i32
    %c0_i32_2 = arith.constant 0 : i32
    return %c0_i32, %c0_i32_0, %c0_i32_1 : i32, i32, i32
  }
  func.func @transform_15(%arg0: i32) -> (i32, i32, i32) {
    %c0_i32 = arith.constant 0 : i32
    %c0_i32_0 = arith.constant 0 : i32
    %c0_i32_1 = arith.constant 0 : i32
    %c0_i32_2 = arith.constant 0 : i32
    return %c0_i32, %c0_i32_0, %c0_i32_1 : i32, i32, i32
  }
  func.func @transform_16(%arg0: i32) -> (i32, i32, i32) {
    %c0_i32 = arith.constant 0 : i32
    %c0_i32_0 = arith.constant 0 : i32
    %c0_i32_1 = arith.constant 0 : i32
    %c0_i32_2 = arith.constant 0 : i32
    return %c0_i32, %c0_i32_0, %c0_i32_1 : i32, i32, i32
  }
  func.func @transform_17(%arg0: i32) -> (i32, i32, i32) {
    %c0_i32 = arith.constant 0 : i32
    %c0_i32_0 = arith.constant 0 : i32
    %c0_i32_1 = arith.constant 0 : i32
    %c0_i32_2 = arith.constant 0 : i32
    return %c0_i32, %c0_i32_0, %c0_i32_1 : i32, i32, i32
  }
  func.func @transform_18(%arg0: i32) -> (i32, i32) {
    %c0_i32 = arith.constant 0 : i32
    %c0_i32_0 = arith.constant 0 : i32
    %c0_i32_1 = arith.constant 0 : i32
    return %c0_i32, %c0_i32_0 : i32, i32
  }
  func.func @transform_19(%arg0: i32) -> (i32, i32) {
    %c0_i32 = arith.constant 0 : i32
    %c0_i32_0 = arith.constant 0 : i32
    %c0_i32_1 = arith.constant 0 : i32
    return %c0_i32, %c0_i32_0 : i32, i32
  }
  func.func @transform_20(%arg0: i32) -> (i32, i32, i32) {
    %c0_i32 = arith.constant 0 : i32
    %c0_i32_0 = arith.constant 0 : i32
    %c0_i32_1 = arith.constant 0 : i32
    return %arg0, %c0_i32, %c0_i32_0 : i32, i32, i32
  }
}

</mosaic_0001>

<llo_original>
// kernel: reference_model_forward.1
$region0: #{reference_model_forward.1}
  #allocation0 [shape = 'u32[]', space=smem, size = 0x4, offset = 0x4, fixed_abs, tag = 'smem constant byte address 0x4 - core index']
  #allocation1 [shape = 'u32[144,128]{1,0:T(1,128)}', space=vmem, size = 0x12000, scoped, tag = 'internal scratch']
  %s0 = inlined_call_operand.vmem [shape: s32[2,8,1], index: 0, kind: input, shape index: {}]
  %s1 = inlined_call_operand.vmem [shape: s32[2,7,1], index: 1, kind: input, shape index: {}]
  %s2 = inlined_call_operand.vmem [shape: f32[2,1,8], index: 2, kind: input, shape index: {}]
  %s3 = inlined_call_operand.vmem [shape: f32[2,7,1], index: 3, kind: input, shape index: {}]
  %s4 = inlined_call_operand.vmem [shape: f32[128,32], index: 4, kind: input, shape index: {}]
  %s5 = inlined_call_operand.vmem [shape: f32[8,32], index: 5, kind: input, shape index: {}]
  %s6 = inlined_call_operand.vmem [shape: f32[2,1,32], index: 6, kind: input, shape index: {}]
  %s7 = inlined_call_operand.vmem [shape: f32[2,1,32], index: 7, kind: input, shape index: {}]
  %s8 = inlined_call_operand.vmem [shape: f32[2,32,96], index: 8, kind: input, shape index: {}]
  %s9 = inlined_call_operand.vmem [shape: f32[2,1,96], index: 9, kind: input, shape index: {}]
  %s10 = inlined_call_operand.vmem [shape: f32[2,32,32], index: 10, kind: input, shape index: {}]
  %s11 = inlined_call_operand.vmem [shape: f32[2,1,32], index: 11, kind: input, shape index: {}]
  %s12 = inlined_call_operand.vmem [shape: f32[2,1,32], index: 12, kind: input, shape index: {}]
  %s13 = inlined_call_operand.vmem [shape: f32[2,1,32], index: 13, kind: input, shape index: {}]
  %s14 = inlined_call_operand.vmem [shape: f32[2,32,64], index: 14, kind: input, shape index: {}]
  %s15 = inlined_call_operand.vmem [shape: f32[2,1,64], index: 15, kind: input, shape index: {}]
  %s16 = inlined_call_operand.vmem [shape: f32[2,64,32], index: 16, kind: input, shape index: {}]
  %s17 = inlined_call_operand.vmem [shape: f32[2,1,32], index: 17, kind: input, shape index: {}]
  %s18 = inlined_call_operand.vmem [shape: f32[1,32], index: 18, kind: input, shape index: {}]
  %s19 = inlined_call_operand.vmem [shape: f32[1,32], index: 19, kind: input, shape index: {}]
  %s20 = inlined_call_operand.vmem [shape: f32[2,7,1], index: 20, kind: output, shape index: {}]
  %s21 = sld [smem:[#allocation0]]
  $region113: #{reference_model_forward.1} parent=0
    _
  %s23 = ssub.s32 1, %s21
  %s24 = scalar_select 0, %s23, %s21
  loop: start=0, step=1, limit=4
  $region2: #{reference_model_forward.1} parent=0 // loop_pre_header
    _
  $region3: #{reference_model_forward.1} parent=0 // loop_header
    %s26 = sphi 0, %s30
    %p27 = scmp.ge.s32.totalorder %s26, 4
    %s36 = sphi 0, %s38
    %s39 = sphi 0, %s36
    %s40 = sphi 0, %s39
    %s56 = sphi 0, %s40
    %s62 = sphi 0, %s64
    %s65 = sphi 0, %s62
    %s66 = sphi 0, %s65
    %s82 = sphi 0, %s66
    %s88 = sphi 0, %s90
    %s91 = sphi 0, %s88
    %s92 = sphi 0, %s91
    %s108 = sphi 0, %s92
    %s114 = sphi 0, %s116
    %s117 = sphi 0, %s114
    %s118 = sphi 0, %s117
    %s134 = sphi 0, %s118
    %s138 = sphi 0, %s138
    %s140 = sphi 0, %s138
    %s141 = sphi 0, %s140
    %s155 = sphi 0, %s141
    %s159 = sphi 0, %s159
    %s161 = sphi 0, %s159
    %s162 = sphi 0, %s161
    %s176 = sphi 0, %s162
    %s180 = sphi 0, %s180
    %s182 = sphi 0, %s180
    %s183 = sphi 0, %s182
    %s197 = sphi 0, %s183
    %s201 = sphi 0, %s201
    %s203 = sphi 0, %s201
    %s204 = sphi 0, %s203
    %s218 = sphi 0, %s204
    %s222 = sphi 0, %s222
    %s224 = sphi 0, %s222
    %s225 = sphi 0, %s224
    %s239 = sphi 0, %s225
    %s243 = sphi 0, %s243
    %s245 = sphi 0, %s243
    %s246 = sphi 0, %s245
    %s260 = sphi 0, %s246
    %s264 = sphi 0, %s264
    %s266 = sphi 0, %s264
    %s267 = sphi 0, %s266
    %s281 = sphi 0, %s267
    %s285 = sphi 0, %s285
    %s287 = sphi 0, %s285
    %s288 = sphi 0, %s287
    %s302 = sphi 0, %s288
    %s306 = sphi 0, %s306
    %s308 = sphi 0, %s306
    %s309 = sphi 0, %s308
    %s323 = sphi 0, %s309
    %s327 = sphi 0, %s327
    %s329 = sphi 0, %s327
    %s330 = sphi 0, %s329
    %s344 = sphi 0, %s330
    %s348 = sphi 0, %s348
    %s350 = sphi 0, %s348
    %s351 = sphi 0, %s350
    %s365 = sphi 0, %s351
    %s369 = sphi 0, %s369
    %s371 = sphi 0, %s369
    %s372 = sphi 0, %s371
    %s386 = sphi 0, %s372
    %s390 = sphi 0, %s390
    %s392 = sphi 0, %s390
    %s393 = sphi 0, %s392
    %s407 = sphi 0, %s393
    %s411 = sphi 0, %s411
    %s413 = sphi 0, %s411
    %s414 = sphi 0, %s413
    %s428 = sphi 0, %s414
    %s432 = sphi 0, %s432
    %s434 = sphi 0, %s432
    %s435 = sphi 0, %s434
    %s449 = sphi 0, %s435
    %s453 = sphi 0, %s453
    %s455 = sphi 0, %s453
    %s456 = sphi 0, %s455
    %s470 = sphi 0, %s456
    %s476 = sphi 0, %s478
    %s479 = sphi 0, %s476
    %s480 = sphi 0, %s479
    %s496 = sphi 0, %s480
  $region4: #{reference_model_forward.1} parent=0 // loop_header_branch
    %29 = sbr.rel (%p27) target = $region8
  $region5: #{reference_model_forward.1} parent=0 // loop_body
    %s31 = ssub.s32 %s26, 1
    %s32 = ssub.s32 %s26, 2
    %s33 = sadd.s32 %s26, 1
    %s34 = ssub.s32 %s26, %s33
    %p35 = scmp.eq.s32.totalorder %s34, 0
    %s37 = sadd.s32 %s36, 1
    %s38 = scalar_select %p35, %s36, %s37
    %p41 = pneg %p35
    %p42 = scmp.eq.s32.totalorder %s26, 1
    %p43 = por %p41, %p42
    %p44 = scmp.ne.s32.totalorder %s36, %s39
    %p45 = scmp.eq.s32.totalorder %s26, 0
    %p46 = por %p44, %p45
    %p47 = scmp.ne.s32.totalorder %s36, %s39
    %p48 = scmp.eq.s32.totalorder %s31, 1
    %p49 = por %p47, %p48
    %p50 = scmp.ne.s32.totalorder %s39, %s40
    %p51 = scmp.eq.s32.totalorder %s31, 0
    %p52 = por %p50, %p51
    %p53 = scmp.ne.s32.totalorder %s39, %s40
    %p54 = scmp.eq.s32.totalorder %s32, 1
    %p55 = por %p53, %p54
    %p57 = scmp.ne.s32.totalorder %s40, %s56
    %p58 = scmp.eq.s32.totalorder %s32, 0
    %p59 = por %p57, %p58
    %s60 = ssub.s32 %s26, %s33
    %p61 = scmp.eq.s32.totalorder %s60, 0
    %s63 = sadd.s32 %s62, 1
    %s64 = scalar_select %p61, %s62, %s63
    %p67 = pneg %p61
    %p68 = scmp.eq.s32.totalorder %s26, 1
    %p69 = por %p67, %p68
    %p70 = scmp.ne.s32.totalorder %s62, %s65
    %p71 = scmp.eq.s32.totalorder %s26, 0
    %p72 = por %p70, %p71
    %p73 = scmp.ne.s32.totalorder %s62, %s65
    %p74 = scmp.eq.s32.totalorder %s31, 1
    %p75 = por %p73, %p74
    %p76 = scmp.ne.s32.totalorder %s65, %s66
    %p77 = scmp.eq.s32.totalorder %s31, 0
    %p78 = por %p76, %p77
    %p79 = scmp.ne.s32.totalorder %s65, %s66
    %p80 = scmp.eq.s32.totalorder %s32, 1
    %p81 = por %p79, %p80
    %p83 = scmp.ne.s32.totalorder %s66, %s82
    %p84 = scmp.eq.s32.totalorder %s32, 0
    %p85 = por %p83, %p84
    %s86 = ssub.s32 %s26, %s33
    %p87 = scmp.eq.s32.totalorder %s86, 0
    %s89 = sadd.s32 %s88, 1
    %s90 = scalar_select %p87, %s88, %s89
    %p93 = pneg %p87
    %p94 = scmp.eq.s32.totalorder %s26, 1
    %p95 = por %p93, %p94
    %p96 = scmp.ne.s32.totalorder %s88, %s91
    %p97 = scmp.eq.s32.totalorder %s26, 0
    %p98 = por %p96, %p97
    %p99 = scmp.ne.s32.totalorder %s88, %s91
    %p100 = scmp.eq.s32.totalorder %s31, 1
    %p101 = por %p99, %p100
    %p102 = scmp.ne.s32.totalorder %s91, %s92
    %p103 = scmp.eq.s32.totalorder %s31, 0
    %p104 = por %p102, %p103
    %p105 = scmp.ne.s32.totalorder %s91, %s92
    %p106 = scmp.eq.s32.totalorder %s32, 1
    %p107 = por %p105, %p106
    %p109 = scmp.ne.s32.totalorder %s92, %s108
    %p110 = scmp.eq.s32.totalorder %s32, 0
    %p111 = por %p109, %p110
    %s112 = ssub.s32 %s26, %s33
    %p113 = scmp.eq.s32.totalorder %s112, 0
    %s115 = sadd.s32 %s114, 1
    %s116 = scalar_select %p113, %s114, %s115
    %p119 = pneg %p113
    %p120 = scmp.eq.s32.totalorder %s26, 1
    %p121 = por %p119, %p120
    %p122 = scmp.ne.s32.totalorder %s114, %s117
    %p123 = scmp.eq.s32.totalorder %s26, 0
    %p124 = por %p122, %p123
    %p125 = scmp.ne.s32.totalorder %s114, %s117
    %p126 = scmp.eq.s32.totalorder %s31, 1
    %p127 = por %p125, %p126
    %p128 = scmp.ne.s32.totalorder %s117, %s118
    %p129 = scmp.eq.s32.totalorder %s31, 0
    %p130 = por %p128, %p129
    %p131 = scmp.ne.s32.totalorder %s117, %s118
    %p132 = scmp.eq.s32.totalorder %s32, 1
    %p133 = por %p131, %p132
    %p135 = scmp.ne.s32.totalorder %s118, %s134
    %p136 = scmp.eq.s32.totalorder %s32, 0
    %p137 = por %p135, %p136
    %s139 = sadd.s32 %s138, 1
    %p142 = scmp.eq.s32.totalorder %s26, 1
    %p143 = scmp.ne.s32.totalorder %s138, %s140
    %p144 = scmp.eq.s32.totalorder %s26, 0
    %p145 = por %p143, %p144
    %p146 = scmp.ne.s32.totalorder %s138, %s140
    %p147 = scmp.eq.s32.totalorder %s31, 1
    %p148 = por %p146, %p147
    %p149 = scmp.ne.s32.totalorder %s140, %s141
    %p150 = scmp.eq.s32.totalorder %s31, 0
    %p151 = por %p149, %p150
    %p152 = scmp.ne.s32.totalorder %s140, %s141
    %p153 = scmp.eq.s32.totalorder %s32, 1
    %p154 = por %p152, %p153
    %p156 = scmp.ne.s32.totalorder %s141, %s155
    %p157 = scmp.eq.s32.totalorder %s32, 0
    %p158 = por %p156, %p157
    %s160 = sadd.s32 %s159, 1
    %p163 = scmp.eq.s32.totalorder %s26, 1
    %p164 = scmp.ne.s32.totalorder %s159, %s161
    %p165 = scmp.eq.s32.totalorder %s26, 0
    %p166 = por %p164, %p165
    %p167 = scmp.ne.s32.totalorder %s159, %s161
    %p168 = scmp.eq.s32.totalorder %s31, 1
    %p169 = por %p167, %p168
    %p170 = scmp.ne.s32.totalorder %s161, %s162
    %p171 = scmp.eq.s32.totalorder %s31, 0
    %p172 = por %p170, %p171
    %p173 = scmp.ne.s32.totalorder %s161, %s162
    %p174 = scmp.eq.s32.totalorder %s32, 1
    %p175 = por %p173, %p174
    %p177 = scmp.ne.s32.totalorder %s162, %s176
    %p178 = scmp.eq.s32.totalorder %s32, 0
    %p179 = por %p177, %p178
    %s181 = sadd.s32 %s180, 1
    %p184 = scmp.eq.s32.totalorder %s26, 1
    %p185 = scmp.ne.s32.totalorder %s180, %s182
    %p186 = scmp.eq.s32.totalorder %s26, 0
    %p187 = por %p185, %p186
    %p188 = scmp.ne.s32.totalorder %s180, %s182
    %p189 = scmp.eq.s32.totalorder %s31, 1
    %p190 = por %p188, %p189
    %p191 = scmp.ne.s32.totalorder %s182, %s183
    %p192 = scmp.eq.s32.totalorder %s31, 0
    %p193 = por %p191, %p192
    %p194 = scmp.ne.s32.totalorder %s182, %s183
    %p195 = scmp.eq.s32.totalorder %s32, 1
    %p196 = por %p194, %p195
    %p198 = scmp.ne.s32.totalorder %s183, %s197
    %p199 = scmp.eq.s32.totalorder %s32, 0
    %p200 = por %p198, %p199
    %s202 = sadd.s32 %s201, 1
    %p205 = scmp.eq.s32.totalorder %s26, 1
    %p206 = scmp.ne.s32.totalorder %s201, %s203
    %p207 = scmp.eq.s32.totalorder %s26, 0
    %p208 = por %p206, %p207
    %p209 = scmp.ne.s32.totalorder %s201, %s203
    %p210 = scmp.eq.s32.totalorder %s31, 1
    %p211 = por %p209, %p210
    %p212 = scmp.ne.s32.totalorder %s203, %s204
    %p213 = scmp.eq.s32.totalorder %s31, 0
    %p214 = por %p212, %p213
    %p215 = scmp.ne.s32.totalorder %s203, %s204
    %p216 = scmp.eq.s32.totalorder %s32, 1
    %p217 = por %p215, %p216
    %p219 = scmp.ne.s32.totalorder %s204, %s218
    %p220 = scmp.eq.s32.totalorder %s32, 0
    %p221 = por %p219, %p220
    %s223 = sadd.s32 %s222, 1
    %p226 = scmp.eq.s32.totalorder %s26, 1
    %p227 = scmp.ne.s32.totalorder %s222, %s224
    %p228 = scmp.eq.s32.totalorder %s26, 0
    %p229 = por %p227, %p228
    %p230 = scmp.ne.s32.totalorder %s222, %s224
    %p231 = scmp.eq.s32.totalorder %s31, 1
    %p232 = por %p230, %p231
    %p233 = scmp.ne.s32.totalorder %s224, %s225
    %p234 = scmp.eq.s32.totalorder %s31, 0
    %p235 = por %p233, %p234
    %p236 = scmp.ne.s32.totalorder %s224, %s225
    %p237 = scmp.eq.s32.totalorder %s32, 1
    %p238 = por %p236, %p237
    %p240 = scmp.ne.s32.totalorder %s225, %s239
    %p241 = scmp.eq.s32.totalorder %s32, 0
    %p242 = por %p240, %p241
    %s244 = sadd.s32 %s243, 1
    %p247 = scmp.eq.s32.totalorder %s26, 1
    %p248 = scmp.ne.s32.totalorder %s243, %s245
    %p249 = scmp.eq.s32.totalorder %s26, 0
    %p250 = por %p248, %p249
    %p251 = scmp.ne.s32.totalorder %s243, %s245
    %p252 = scmp.eq.s32.totalorder %s31, 1
    %p253 = por %p251, %p252
    %p254 = scmp.ne.s32.totalorder %s245, %s246
    %p255 = scmp.eq.s32.totalorder %s31, 0
    %p256 = por %p254, %p255
    %p257 = scmp.ne.s32.totalorder %s245, %s246
    %p258 = scmp.eq.s32.totalorder %s32, 1
    %p259 = por %p257, %p258
    %p261 = scmp.ne.s32.totalorder %s246, %s260
    %p262 = scmp.eq.s32.totalorder %s32, 0
    %p263 = por %p261, %p262
    %s265 = sadd.s32 %s264, 1
    %p268 = scmp.eq.s32.totalorder %s26, 1
    %p269 = scmp.ne.s32.totalorder %s264, %s266
    %p270 = scmp.eq.s32.totalorder %s26, 0
    %p271 = por %p269, %p270
    %p272 = scmp.ne.s32.totalorder %s264, %s266
    %p273 = scmp.eq.s32.totalorder %s31, 1
    %p274 = por %p272, %p273
    %p275 = scmp.ne.s32.totalorder %s266, %s267
    %p276 = scmp.eq.s32.totalorder %s31, 0
    %p277 = por %p275, %p276
    %p278 = scmp.ne.s32.totalorder %s266, %s267
    %p279 = scmp.eq.s32.totalorder %s32, 1
    %p280 = por %p278, %p279
    %p282 = scmp.ne.s32.totalorder %s267, %s281
    %p283 = scmp.eq.s32.totalorder %s32, 0
    %p284 = por %p282, %p283
    %s286 = sadd.s32 %s285, 1
    %p289 = scmp.eq.s32.totalorder %s26, 1
    %p290 = scmp.ne.s32.totalorder %s285, %s287
    %p291 = scmp.eq.s32.totalorder %s26, 0
    %p292 = por %p290, %p291
    %p293 = scmp.ne.s32.totalorder %s285, %s287
    %p294 = scmp.eq.s32.totalorder %s31, 1
    %p295 = por %p293, %p294
    %p296 = scmp.ne.s32.totalorder %s287, %s288
    %p297 = scmp.eq.s32.totalorder %s31, 0
    %p298 = por %p296, %p297
    %p299 = scmp.ne.s32.totalorder %s287, %s288
    %p300 = scmp.eq.s32.totalorder %s32, 1
    %p301 = por %p299, %p300
    %p303 = scmp.ne.s32.totalorder %s288, %s302
    %p304 = scmp.eq.s32.totalorder %s32, 0
    %p305 = por %p303, %p304
    %s307 = sadd.s32 %s306, 1
    %p310 = scmp.eq.s32.totalorder %s26, 1
    %p311 = scmp.ne.s32.totalorder %s306, %s308
    %p312 = scmp.eq.s32.totalorder %s26, 0
    %p313 = por %p311, %p312
    %p314 = scmp.ne.s32.totalorder %s306, %s308
    %p315 = scmp.eq.s32.totalorder %s31, 1
    %p316 = por %p314, %p315
    %p317 = scmp.ne.s32.totalorder %s308, %s309
    %p318 = scmp.eq.s32.totalorder %s31, 0
    %p319 = por %p317, %p318
    %p320 = scmp.ne.s32.totalorder %s308, %s309
    %p321 = scmp.eq.s32.totalorder %s32, 1
    %p322 = por %p320, %p321
    %p324 = scmp.ne.s32.totalorder %s309, %s323
    %p325 = scmp.eq.s32.totalorder %s32, 0
    %p326 = por %p324, %p325
    %s328 = sadd.s32 %s327, 1
    %p331 = scmp.eq.s32.totalorder %s26, 1
    %p332 = scmp.ne.s32.totalorder %s327, %s329
    %p333 = scmp.eq.s32.totalorder %s26, 0
    %p334 = por %p332, %p333
    %p335 = scmp.ne.s32.totalorder %s327, %s329
    %p336 = scmp.eq.s32.totalorder %s31, 1
    %p337 = por %p335, %p336
    %p338 = scmp.ne.s32.totalorder %s329, %s330
    %p339 = scmp.eq.s32.totalorder %s31, 0
    %p340 = por %p338, %p339
    %p341 = scmp.ne.s32.totalorder %s329, %s330
    %p342 = scmp.eq.s32.totalorder %s32, 1
    %p343 = por %p341, %p342
    %p345 = scmp.ne.s32.totalorder %s330, %s344
    %p346 = scmp.eq.s32.totalorder %s32, 0
    %p347 = por %p345, %p346
    %s349 = sadd.s32 %s348, 1
    %p352 = scmp.eq.s32.totalorder %s26, 1
    %p353 = scmp.ne.s32.totalorder %s348, %s350
    %p354 = scmp.eq.s32.totalorder %s26, 0
    %p355 = por %p353, %p354
    %p356 = scmp.ne.s32.totalorder %s348, %s350
    %p357 = scmp.eq.s32.totalorder %s31, 1
    %p358 = por %p356, %p357
    %p359 = scmp.ne.s32.totalorder %s350, %s351
    %p360 = scmp.eq.s32.totalorder %s31, 0
    %p361 = por %p359, %p360
    %p362 = scmp.ne.s32.totalorder %s350, %s351
    %p363 = scmp.eq.s32.totalorder %s32, 1
    %p364 = por %p362, %p363
    %p366 = scmp.ne.s32.totalorder %s351, %s365
    %p367 = scmp.eq.s32.totalorder %s32, 0
    %p368 = por %p366, %p367
    %s370 = sadd.s32 %s369, 1
    %p373 = scmp.eq.s32.totalorder %s26, 1
    %p374 = scmp.ne.s32.totalorder %s369, %s371
    %p375 = scmp.eq.s32.totalorder %s26, 0
    %p376 = por %p374, %p375
    %p377 = scmp.ne.s32.totalorder %s369, %s371
    %p378 = scmp.eq.s32.totalorder %s31, 1
    %p379 = por %p377, %p378
    %p380 = scmp.ne.s32.totalorder %s371, %s372
    %p381 = scmp.eq.s32.totalorder %s31, 0
    %p382 = por %p380, %p381
    %p383 = scmp.ne.s32.totalorder %s371, %s372
    %p384 = scmp.eq.s32.totalorder %s32, 1
    %p385 = por %p383, %p384
    %p387 = scmp.ne.s32.totalorder %s372, %s386
    %p388 = scmp.eq.s32.totalorder %s32, 0
    %p389 = por %p387, %p388
    %s391 = sadd.s32 %s390, 1
    %p394 = scmp.eq.s32.totalorder %s26, 1
    %p395 = scmp.ne.s32.totalorder %s390, %s392
    %p396 = scmp.eq.s32.totalorder %s26, 0
    %p397 = por %p395, %p396
    %p398 = scmp.ne.s32.totalorder %s390, %s392
    %p399 = scmp.eq.s32.totalorder %s31, 1
    %p400 = por %p398, %p399
    %p401 = scmp.ne.s32.totalorder %s392, %s393
    %p402 = scmp.eq.s32.totalorder %s31, 0
    %p403 = por %p401, %p402
    %p404 = scmp.ne.s32.totalorder %s392, %s393
    %p405 = scmp.eq.s32.totalorder %s32, 1
    %p406 = por %p404, %p405
    %p408 = scmp.ne.s32.totalorder %s393, %s407
    %p409 = scmp.eq.s32.totalorder %s32, 0
    %p410 = por %p408, %p409
    %s412 = sadd.s32 %s411, 1
    %p415 = scmp.eq.s32.totalorder %s26, 1
    %p416 = scmp.ne.s32.totalorder %s411, %s413
    %p417 = scmp.eq.s32.totalorder %s26, 0
    %p418 = por %p416, %p417
    %p419 = scmp.ne.s32.totalorder %s411, %s413
    %p420 = scmp.eq.s32.totalorder %s31, 1
    %p421 = por %p419, %p420
    %p422 = scmp.ne.s32.totalorder %s413, %s414
    %p423 = scmp.eq.s32.totalorder %s31, 0
    %p424 = por %p422, %p423
    %p425 = scmp.ne.s32.totalorder %s413, %s414
    %p426 = scmp.eq.s32.totalorder %s32, 1
    %p427 = por %p425, %p426
    %p429 = scmp.ne.s32.totalorder %s414, %s428
    %p430 = scmp.eq.s32.totalorder %s32, 0
    %p431 = por %p429, %p430
    %s433 = sadd.s32 %s432, 1
    %p436 = scmp.eq.s32.totalorder %s26, 1
    %p437 = scmp.ne.s32.totalorder %s432, %s434
    %p438 = scmp.eq.s32.totalorder %s26, 0
    %p439 = por %p437, %p438
    %p440 = scmp.ne.s32.totalorder %s432, %s434
    %p441 = scmp.eq.s32.totalorder %s31, 1
    %p442 = por %p440, %p441
    %p443 = scmp.ne.s32.totalorder %s434, %s435
    %p444 = scmp.eq.s32.totalorder %s31, 0
    %p445 = por %p443, %p444
    %p446 = scmp.ne.s32.totalorder %s434, %s435
    %p447 = scmp.eq.s32.totalorder %s32, 1
    %p448 = por %p446, %p447
    %p450 = scmp.ne.s32.totalorder %s435, %s449
    %p451 = scmp.eq.s32.totalorder %s32, 0
    %p452 = por %p450, %p451
    %s454 = sadd.s32 %s453, 1
    %p457 = scmp.eq.s32.totalorder %s26, 1
    %p458 = scmp.ne.s32.totalorder %s453, %s455
    %p459 = scmp.eq.s32.totalorder %s26, 0
    %p460 = por %p458, %p459
    %p461 = scmp.ne.s32.totalorder %s453, %s455
    %p462 = scmp.eq.s32.totalorder %s31, 1
    %p463 = por %p461, %p462
    %p464 = scmp.ne.s32.totalorder %s455, %s456
    %p465 = scmp.eq.s32.totalorder %s31, 0
    %p466 = por %p464, %p465
    %p467 = scmp.ne.s32.totalorder %s455, %s456
    %p468 = scmp.eq.s32.totalorder %s32, 1
    %p469 = por %p467, %p468
    %p471 = scmp.ne.s32.totalorder %s456, %s470
    %p472 = scmp.eq.s32.totalorder %s32, 0
    %p473 = por %p471, %p472
    %s474 = ssub.s32 %s26, %s33
    %p475 = scmp.eq.s32.totalorder %s474, 0
    %s477 = sadd.s32 %s476, 1
    %s478 = scalar_select %p475, %s476, %s477
    %p481 = pneg %p475
    %p482 = scmp.eq.s32.totalorder %s26, 1
    %p483 = por %p481, %p482
    %p484 = scmp.ne.s32.totalorder %s476, %s479
    %p485 = scmp.eq.s32.totalorder %s26, 0
    %p486 = por %p484, %p485
    %p487 = scmp.ne.s32.totalorder %s476, %s479
    %p488 = scmp.eq.s32.totalorder %s31, 1
    %p489 = por %p487, %p488
    %p490 = scmp.ne.s32.totalorder %s479, %s480
    %p491 = scmp.eq.s32.totalorder %s31, 0
    %p492 = por %p490, %p491
    %p493 = scmp.ne.s32.totalorder %s479, %s480
    %p494 = scmp.eq.s32.totalorder %s32, 1
    %p495 = por %p493, %p494
    %p497 = scmp.ne.s32.totalorder %s480, %s496
    %p498 = scmp.eq.s32.totalorder %s32, 0
    %p499 = por %p497, %p498
    %p500 = scmp.le.s32.totalorder 1, %s26
    %p501 = scmp.lt.s32.totalorder %s26, 3
    %p502 = pnand %p500, %p501
    %p503 = pneg %p502
    // Predicated region
    $region9: #{reference_model_forward.1} parent=5 // pred_check
      _
    $region10: #{reference_model_forward.1} parent=5 // pred_check_branch
      %505 = sbr.rel (%p502) target = $region12
    $region11: #{reference_model_forward.1} parent=5 // pred_region
      %s506 = ssub.s32 %s26, 1
      // Predicated region
      $region13: #{reference_model_forward.1} parent=11 // pred_check
        %p507 = pneg %p151
      $region14: #{reference_model_forward.1} parent=11 // pred_check_branch
        %509 = sbr.rel (%p507) target = $region16
      $region15: #{reference_model_forward.1} parent=11 // pred_region
        _
      $region16: #{reference_model_forward.1} parent=11 // pred_fallthru
        _
      // Predicated region
      $region17: #{reference_model_forward.1} parent=11 // pred_check
        %p510 = pneg %p172
      $region18: #{reference_model_forward.1} parent=11 // pred_check_branch
        %512 = sbr.rel (%p510) target = $region20
      $region19: #{reference_model_forward.1} parent=11 // pred_region
        _
      $region20: #{reference_model_forward.1} parent=11 // pred_fallthru
        _
      // Predicated region
      $region21: #{reference_model_forward.1} parent=11 // pred_check
        %p513 = pneg %p193
      $region22: #{reference_model_forward.1} parent=11 // pred_check_branch
        %515 = sbr.rel (%p513) target = $region24
      $region23: #{reference_model_forward.1} parent=11 // pred_region
        _
      $region24: #{reference_model_forward.1} parent=11 // pred_fallthru
        _
      // Predicated region
      $region25: #{reference_model_forward.1} parent=11 // pred_check
        %p516 = pneg %p214
      $region26: #{reference_model_forward.1} parent=11 // pred_check_branch
        %518 = sbr.rel (%p516) target = $region28
      $region27: #{reference_model_forward.1} parent=11 // pred_region
        _
      $region28: #{reference_model_forward.1} parent=11 // pred_fallthru
        _
      // Predicated region
      $region29: #{reference_model_forward.1} parent=11 // pred_check
        %p519 = pneg %p235
      $region30: #{reference_model_forward.1} parent=11 // pred_check_branch
        %521 = sbr.rel (%p519) target = $region32
      $region31: #{reference_model_forward.1} parent=11 // pred_region
        _
      $region32: #{reference_model_forward.1} parent=11 // pred_fallthru
        _
      // Predicated region
      $region33: #{reference_model_forward.1} parent=11 // pred_check
        %p522 = pneg %p256
      $region34: #{reference_model_forward.1} parent=11 // pred_check_branch
        %524 = sbr.rel (%p522) target = $region36
      $region35: #{reference_model_forward.1} parent=11 // pred_region
        _
      $region36: #{reference_model_forward.1} parent=11 // pred_fallthru
        _
      // Predicated region
      $region37: #{reference_model_forward.1} parent=11 // pred_check
        %p525 = pneg %p277
      $region38: #{reference_model_forward.1} parent=11 // pred_check_branch
        %527 = sbr.rel (%p525) target = $region40
      $region39: #{reference_model_forward.1} parent=11 // pred_region
        _
      $region40: #{reference_model_forward.1} parent=11 // pred_fallthru
        _
      // Predicated region
      $region41: #{reference_model_forward.1} parent=11 // pred_check
        %p528 = pneg %p298
      $region42: #{reference_model_forward.1} parent=11 // pred_check_branch
        %530 = sbr.rel (%p528) target = $region44
      $region43: #{reference_model_forward.1} parent=11 // pred_region
        _
      $region44: #{reference_model_forward.1} parent=11 // pred_fallthru
        _
      // Predicated region
      $region45: #{reference_model_forward.1} parent=11 // pred_check
        %p531 = pneg %p319
      $region46: #{reference_model_forward.1} parent=11 // pred_check_branch
        %533 = sbr.rel (%p531) target = $region48
      $region47: #{reference_model_forward.1} parent=11 // pred_region
        _
      $region48: #{reference_model_forward.1} parent=11 // pred_fallthru
        _
      // Predicated region
      $region49: #{reference_model_forward.1} parent=11 // pred_check
        %p534 = pneg %p340
      $region50: #{reference_model_forward.1} parent=11 // pred_check_branch
        %536 = sbr.rel (%p534) target = $region52
      $region51: #{reference_model_forward.1} parent=11 // pred_region
        _
      $region52: #{reference_model_forward.1} parent=11 // pred_fallthru
        _
      // Predicated region
      $region53: #{reference_model_forward.1} parent=11 // pred_check
        %p537 = pneg %p361
      $region54: #{reference_model_forward.1} parent=11 // pred_check_branch
        %539 = sbr.rel (%p537) target = $region56
      $region55: #{reference_model_forward.1} parent=11 // pred_region
        _
      $region56: #{reference_model_forward.1} parent=11 // pred_fallthru
        _
      // Predicated region
      $region57: #{reference_model_forward.1} parent=11 // pred_check
        %p540 = pneg %p382
      $region58: #{reference_model_forward.1} parent=11 // pred_check_branch
        %542 = sbr.rel (%p540) target = $region60
      $region59: #{reference_model_forward.1} parent=11 // pred_region
        _
      $region60: #{reference_model_forward.1} parent=11 // pred_fallthru
        _
      // Predicated region
      $region61: #{reference_model_forward.1} parent=11 // pred_check
        %p543 = pneg %p403
      $region62: #{reference_model_forward.1} parent=11 // pred_check_branch
        %545 = sbr.rel (%p543) target = $region64
      $region63: #{reference_model_forward.1} parent=11 // pred_region
        _
      $region64: #{reference_model_forward.1} parent=11 // pred_fallthru
        _
      // Predicated region
      $region65: #{reference_model_forward.1} parent=11 // pred_check
        %p546 = pneg %p424
      $region66: #{reference_model_forward.1} parent=11 // pred_check_branch
        %548 = sbr.rel (%p546) target = $region68
      $region67: #{reference_model_forward.1} parent=11 // pred_region
        _
      $region68: #{reference_model_forward.1} parent=11 // pred_fallthru
        _
      // Predicated region
      $region69: #{reference_model_forward.1} parent=11 // pred_check
        %p549 = pneg %p445
      $region70: #{reference_model_forward.1} parent=11 // pred_check_branch
        %551 = sbr.rel (%p549) target = $region72
      $region71: #{reference_model_forward.1} parent=11 // pred_region
        _
      $region72: #{reference_model_forward.1} parent=11 // pred_fallthru
        _
      // Predicated region
      $region73: #{reference_model_forward.1} parent=11 // pred_check
        %p552 = pneg %p466
      $region74: #{reference_model_forward.1} parent=11 // pred_check_branch
        %554 = sbr.rel (%p552) target = $region76
      $region75: #{reference_model_forward.1} parent=11 // pred_region
        _
      $region76: #{reference_model_forward.1} parent=11 // pred_fallthru
        _
    $region12: #{reference_model_forward.1} parent=5 // pred_fallthru
      _
    %p555 = scmp.lt.s32.totalorder %s26, 2
    // Predicated region
    $region77: #{reference_model_forward.1} parent=5 // pred_check
      %p556 = pneg %p555
    $region78: #{reference_model_forward.1} parent=5 // pred_check_branch
      %558 = sbr.rel (%p556) target = $region80
    $region79: #{reference_model_forward.1} parent=5 // pred_region
      // Predicated region
      $region81: #{reference_model_forward.1} parent=79 // pred_check
        %p559 = pneg %p46
      $region82: #{reference_model_forward.1} parent=79 // pred_check_branch
        %561 = sbr.rel (%p559) target = $region84
      $region83: #{reference_model_forward.1} parent=79 // pred_region
        %p562 = scmp.lt.s32.totalorder %s26, 1
        %s563 = scalar_select %p562, %s26, 1
        %s564 = smul.addr %s563, 8
        %s565 = scalar_lea.vmem %s0, %s564
      $region84: #{reference_model_forward.1} parent=79 // pred_fallthru
        _
      // Predicated region
      $region85: #{reference_model_forward.1} parent=79 // pred_check
        %p566 = pneg %p72
      $region86: #{reference_model_forward.1} parent=79 // pred_check_branch
        %568 = sbr.rel (%p566) target = $region88
      $region87: #{reference_model_forward.1} parent=79 // pred_region
        %p569 = scmp.lt.s32.totalorder %s26, 1
        %s570 = scalar_select %p569, %s26, 1
        %s571 = smul.addr %s570, 8
        %s572 = scalar_lea.vmem %s1, %s571
      $region88: #{reference_model_forward.1} parent=79 // pred_fallthru
        _
      // Predicated region
      $region89: #{reference_model_forward.1} parent=79 // pred_check
        %p573 = pneg %p98
      $region90: #{reference_model_forward.1} parent=79 // pred_check_branch
        %575 = sbr.rel (%p573) target = $region92
      $region91: #{reference_model_forward.1} parent=79 // pred_region
        %p576 = scmp.lt.s32.totalorder %s26, 1
        %s577 = scalar_select %p576, %s26, 1
        %s578 = scalar_lea.vmem %s2, %s577
      $region92: #{reference_model_forward.1} parent=79 // pred_fallthru
        _
      // Predicated region
      $region93: #{reference_model_forward.1} parent=79 // pred_check
        %p579 = pneg %p124
      $region94: #{reference_model_forward.1} parent=79 // pred_check_branch
        %581 = sbr.rel (%p579) target = $region96
      $region95: #{reference_model_forward.1} parent=79 // pred_region
        %p582 = scmp.lt.s32.totalorder %s26, 1
        %s583 = scalar_select %p582, %s26, 1
        %s584 = smul.addr %s583, 8
        %s585 = scalar_lea.vmem %s3, %s584
      $region96: #{reference_model_forward.1} parent=79 // pred_fallthru
        _
    $region80: #{reference_model_forward.1} parent=5 // pred_fallthru
      _
    %p586 = scmp.le.s32.totalorder 1, %s26
    %p587 = scmp.lt.s32.totalorder %s26, 3
    %p588 = pnand %p586, %p587
    %p589 = pneg %p588
    // Predicated region
    $region97: #{reference_model_forward.1} parent=5 // pred_check
      _
    $region98: #{reference_model_forward.1} parent=5 // pred_check_branch
      %591 = sbr.rel (%p588) target = $region100
    $region99: #{reference_model_forward.1} parent=5 // pred_region
      %s592 = ssub.s32 %s26, 1
      %p593 = scmp.lt.s32.totalorder %s31, 1
      %s594 = scalar_select %p593, %s31, 1
      %s595 = smul.addr %s594, 8
      %s596 = scalar_lea.vmem %s0, %s595
      %p597 = pneg %p52
      %p598 = pneg %p49
      %p599 = scmp.lt.s32.totalorder %s31, 1
      %s600 = scalar_select %p599, %s31, 1
      %s601 = smul.addr %s600, 8
      %s602 = scalar_lea.vmem %s1, %s601
      %p603 = pneg %p78
      %p604 = pneg %p75
      %p605 = scmp.lt.s32.totalorder %s31, 1
      %s606 = scalar_select %p605, %s31, 1
      %s607 = scalar_lea.vmem %s2, %s606
      %p608 = pneg %p104
      %p609 = pneg %p101
      %p610 = scmp.lt.s32.totalorder %s31, 1
      %s611 = scalar_select %p610, %s31, 1
      %s612 = smul.addr %s611, 8
      %s613 = scalar_lea.vmem %s3, %s612
      %p614 = pneg %p130
      %p615 = pneg %p127
      %p616 = pneg %p151
      %p617 = pneg %p148
      %p618 = pneg %p172
      %p619 = pneg %p169
      %p620 = pneg %p193
      %p621 = pneg %p190
      %p622 = pneg %p214
      %p623 = pneg %p211
      %p624 = pneg %p235
      %p625 = pneg %p232
      %p626 = pneg %p256
      %p627 = pneg %p253
      %p628 = pneg %p277
      %p629 = pneg %p274
      %p630 = pneg %p298
      %p631 = pneg %p295
      %p632 = pneg %p319
      %p633 = pneg %p316
      %p634 = pneg %p340
      %p635 = pneg %p337
      %p636 = pneg %p361
      %p637 = pneg %p358
      %p638 = pneg %p382
      %p639 = pneg %p379
      %p640 = pneg %p403
      %p641 = pneg %p400
      %p642 = pneg %p424
      %p643 = pneg %p421
      %p644 = pneg %p445
      %p645 = pneg %p442
      %p646 = pneg %p466
      %p647 = pneg %p463
      %p648 = pneg %p492
      %p649 = pneg %p489
      %p650 = scmp.lt.s32.totalorder %s31, 1
      %s651 = scalar_select %p650, %s31, 1
      %s652 = smul.addr %s651, 8
      %s653 = scalar_lea.vmem %s20, %s652
      %p654 = scmp.lt.s32.totalorder %s31, 1
      %s655 = scalar_select %p654, %s31, 1
      %s656 = smul.addr %s655, 8
      %s657 = scalar_lea.vmem %s0, %s656
      %p658 = scmp.lt.s32.totalorder %s31, 1
      %s659 = scalar_select %p658, %s31, 1
      %s660 = smul.addr %s659, 8
      %s661 = scalar_lea.vmem %s1, %s660
      %p662 = scmp.lt.s32.totalorder %s31, 1
      %s663 = scalar_select %p662, %s31, 1
      %s664 = scalar_lea.vmem %s2, %s663
      %p665 = scmp.lt.s32.totalorder %s31, 1
      %s666 = scalar_select %p665, %s31, 1
      %s667 = smul.addr %s666, 8
      %s668 = scalar_lea.vmem %s3, %s667
      %p669 = scmp.lt.s32.totalorder %s31, 1
      %s670 = scalar_select %p669, %s31, 1
      %s671 = smul.addr %s670, 8
      %s672 = scalar_lea.vmem %s20, %s671
      %v673 = vld [vmem:[%s657] sm:$0xff]
      %v674 = vld [vmem:[%s661] sm:$0x7f]
      %v675 = vld [vmem:[%s664] sm:$0x1]
      %v676 = vld [vmem:[%s668] sm:$0x7f]
      %v677 = vld [vmem:[%s4] sm:$0xff]
      %v678 = vld [vmem:[%s4 + $0x8] sm:$0xff]
      %v679 = vld [vmem:[%s4 + $0x10] sm:$0xff]
      %v680 = vld [vmem:[%s4 + $0x18] sm:$0xff]
      %v681 = vld [vmem:[%s4 + $0x20] sm:$0xff]
      %v682 = vld [vmem:[%s4 + $0x28] sm:$0xff]
      %v683 = vld [vmem:[%s4 + $0x30] sm:$0xff]
      %v684 = vld [vmem:[%s4 + $0x38] sm:$0xff]
      %v685 = vld [vmem:[%s4 + $0x40] sm:$0xff]
      %v686 = vld [vmem:[%s4 + $0x48] sm:$0xff]
      %v687 = vld [vmem:[%s4 + $0x50] sm:$0xff]
      %v688 = vld [vmem:[%s4 + $0x58] sm:$0xff]
      %v689 = vld [vmem:[%s4 + $0x60] sm:$0xff]
      %v690 = vld [vmem:[%s4 + $0x68] sm:$0xff]
      %v691 = vld [vmem:[%s4 + $0x70] sm:$0xff]
      %v692 = vld [vmem:[%s4 + $0x78] sm:$0xff]
      %v693 = vlaneseq
      %v694 = vand.u32 %v693, 127
      %695 = vset.pattern.permute.xlu0 0
      %696 = vperm.xlu0 %695, %v673
      %v697 = vpop.permute.xlu0 %696
      %vm698 = vcmp.eq.s32.totalorder %v694, %v697
      %v699 = vsel %vm698, 1, 0
      %v700 = vcvt.s32.f32 %v699
      %v701 = vld [vmem:[%s5] sm:$0xff]
      %702 = vmatprep.subr.mxu0 0.0
      %703 = vmatpush1.msra.mxu0 %v692
      %704 = vmatprep.subr.mxu0 0.0
      %705 = vmatpush1.msra.mxu0 %v691
      %706 = vmatprep.subr.mxu0 0.0
      %707 = vmatpush1.msra.mxu0 %v690
      %708 = vmatprep.subr.mxu0 0.0
      %709 = vmatpush1.msra.mxu0 %v689
      %710 = vmatprep.subr.mxu0 0.0
      %711 = vmatpush1.msra.mxu0 %v688
      %712 = vmatprep.subr.mxu0 0.0
      %713 = vmatpush1.msra.mxu0 %v687
      %714 = vmatprep.subr.mxu0 0.0
      %715 = vmatpush1.msra.mxu0 %v686
      %716 = vmatprep.subr.mxu0 0.0
      %717 = vmatpush1.msra.mxu0 %v685
      %718 = vmatprep.subr.mxu0 0.0
      %719 = vmatpush1.msra.mxu0 %v684
      %720 = vmatprep.subr.mxu0 0.0
      %721 = vmatpush1.msra.mxu0 %v683
      %722 = vmatprep.subr.mxu0 0.0
      %723 = vmatpush1.msra.mxu0 %v682
      %724 = vmatprep.subr.mxu0 0.0
      %725 = vmatpush1.msra.mxu0 %v681
      %726 = vmatprep.subr.mxu0 0.0
      %727 = vmatpush1.msra.mxu0 %v680
      %728 = vmatprep.subr.mxu0 0.0
      %729 = vmatpush1.msra.mxu0 %v679
      %730 = vmatprep.subr.mxu0 0.0
      %731 = vmatpush1.msra.mxu0 %v678
      %732 = vmatprep.subr.mxu0 0.0
      %733 = vmatpush1.msra.mxu0 %v677
      %734 = vmatprep.subr.mxu0 0.0
      %735 = vmatpush2.msra.mxu0 0.0
      %736 = vmatprep.subr.mxu0 0.0
      %737 = vmatpush2.msra.mxu0 0.0
      %738 = vmatprep.subr.mxu0 0.0
      %739 = vmatpush2.msra.mxu0 0.0
      %740 = vmatprep.subr.mxu0 0.0
      %741 = vmatpush2.msra.mxu0 0.0
      %742 = vmatprep.subr.mxu0 0.0
      %743 = vmatpush2.msra.mxu0 0.0
      %744 = vmatprep.subr.mxu0 0.0
      %745 = vmatpush2.msra.mxu0 0.0
      %746 = vmatprep.subr.mxu0 0.0
      %747 = vmatpush2.msra.mxu0 0.0
      %748 = vmatprep.subr.mxu0 0.0
      %749 = vmatpush2.msra.mxu0 0.0
      %750 = vmatprep.subr.mxu0 0.0
      %751 = vmatpush2.msra.mxu0 0.0
      %752 = vmatprep.subr.mxu0 0.0
      %753 = vmatpush2.msra.mxu0 0.0
      %754 = vmatprep.subr.mxu0 0.0
      %755 = vmatpush2.msra.mxu0 0.0
      %756 = vmatprep.subr.mxu0 0.0
      %757 = vmatpush2.msra.mxu0 0.0
      %758 = vmatprep.subr.mxu0 0.0
      %759 = vmatpush2.msra.mxu0 0.0
      %760 = vmatprep.subr.mxu0 0.0
      %761 = vmatpush2.msra.mxu0 0.0
      %762 = vmatprep.subr.mxu0 0.0
      %763 = vmatpush2.msra.mxu0 0.0
      %764 = vmatprep.subr.mxu0 0.0
      %765 = vmatpush2.msra.mxu0 0.0
      %766 = vmatprep.mubr.f32.mxu0 0.0
      %767 = vmatmul.mubr.f32.gmra.mxu0 %v700
      %v768 = vpop.f32.mrf.mxu0
      %v769 = vadd.f32 %v701, %v768
      %v770 = vpop.f32.mrf.mxu0
      %771 = vdwg.mxu0
      %v772 = vlaneseq
      %v773 = vshrl.u32 %v772, 7
      %vm774 = vcmp.le.s32.totalorder %v694, %v773
      %vm775 = vcmp.gt.f32.partialorder %v675, 0.5
      %v776 = vsel %vm775, 1, 0
      %v777 = vlaneseq
      %v778 = vshrl.u32 %v777, 7
      %v779 = vsub.s32 0, %v778
      %v780 = vrot.slane %v776, %v779
      %vm781 = vcmp.eq.s32.totalorder %v780, 1
      %vm782 = vmand %vm774, %vm781
      %v783 = vld [vmem:[%s6] sm:$0x1]
      %v784 = vld [vmem:[%s7] sm:$0x1]
      %vm785 = vcmask 261120
      %v786 = vsel %vm785, %v769, 0.0
      %787 = vadd.xlane.f32.xlu0 %v786
      %v788 = vpop.xlane.xlu0 %787
      %v789 = vrcp.pop 32.0
      %v790 = vmul.f32 %v788, %v789
      %v791 = vsub.f32 %v769, %v790
      %v792 = vmul.f32 %v791, %v791
      %v793 = vsel %vm785, %v792, 0.0
      %794 = vadd.xlane.f32.xlu0 %v793
      %v795 = vpop.xlane.xlu0 %794
      %v796 = vmul.f32 %v795, %v789
      %v797 = vadd.f32 %v796, 1e-05
      %v798 = vrsqrt.pop %v797
      %v799 = vmul.f32 %v791, %v798
      %v801 = vlaneseq
      %v802 = vshrl.u32 %v801, 7
      %v803 = vsub.s32 0, %v802
      %v804 = vrot.slane %v783, %v803
      %v806 = vmul.f32 %v799, %v804
      %v808 = vlaneseq
      %v809 = vshrl.u32 %v808, 7
      %v810 = vsub.s32 0, %v809
      %v811 = vrot.slane %v784, %v810
      %v813 = vadd.f32 %v806, %v811
      %v814 = vld [vmem:[%s8] sm:$0xff]
      %v815 = vld [vmem:[%s8 + $0x8] sm:$0xff]
      %v816 = vld [vmem:[%s8 + $0x10] sm:$0xff]
      %v817 = vld [vmem:[%s8 + $0x18] sm:$0xff]
      %v818 = vld [vmem:[%s9] sm:$0x1]
      %v820 = vlaneseq
      %v821 = vshrl.u32 %v820, 7
      %v822 = vsub.s32 0, %v821
      %v823 = vrot.slane %v818, %v822
      %v826 = vsel %vm785, %v813, 0
      %828 = vmatprep.subr.mxu0 0.0
      %829 = vmatpush1.msra.mxu0 0.0
      %830 = vmatprep.subr.mxu0 0.0
      %831 = vmatpush1.msra.mxu0 0.0
      %832 = vmatprep.subr.mxu0 0.0
      %833 = vmatpush1.msra.mxu0 0.0
      %834 = vmatprep.subr.mxu0 0.0
      %835 = vmatpush1.msra.mxu0 0.0
      %836 = vmatprep.subr.mxu0 0.0
      %837 = vmatpush1.msra.mxu0 0.0
      %838 = vmatprep.subr.mxu0 0.0
      %839 = vmatpush1.msra.mxu0 0.0
      %840 = vmatprep.subr.mxu0 0.0
      %841 = vmatpush1.msra.mxu0 0.0
      %842 = vmatprep.subr.mxu0 0.0
      %843 = vmatpush1.msra.mxu0 0.0
      %844 = vmatprep.subr.mxu0 0.0
      %845 = vmatpush1.msra.mxu0 0.0
      %846 = vmatprep.subr.mxu0 0.0
      %847 = vmatpush1.msra.mxu0 0.0
      %848 = vmatprep.subr.mxu0 0.0
      %849 = vmatpush1.msra.mxu0 0.0
      %850 = vmatprep.subr.mxu0 0.0
      %851 = vmatpush1.msra.mxu0 0.0
      %852 = vmatprep.subr.mxu0 0.0
      %853 = vmatpush1.msra.mxu0 %v817
      %854 = vmatprep.subr.mxu0 0.0
      %855 = vmatpush1.msra.mxu0 %v816
      %856 = vmatprep.subr.mxu0 0.0
      %857 = vmatpush1.msra.mxu0 %v815
      %858 = vmatprep.subr.mxu0 0.0
      %859 = vmatpush1.msra.mxu0 %v814
      %860 = vmatprep.subr.mxu0 0.0
      %861 = vmatpush2.msra.mxu0 0.0
      %862 = vmatprep.subr.mxu0 0.0
      %863 = vmatpush2.msra.mxu0 0.0
      %864 = vmatprep.subr.mxu0 0.0
      %865 = vmatpush2.msra.mxu0 0.0
      %866 = vmatprep.subr.mxu0 0.0
      %867 = vmatpush2.msra.mxu0 0.0
      %868 = vmatprep.subr.mxu0 0.0
      %869 = vmatpush2.msra.mxu0 0.0
      %870 = vmatprep.subr.mxu0 0.0
      %871 = vmatpush2.msra.mxu0 0.0
      %872 = vmatprep.subr.mxu0 0.0
      %873 = vmatpush2.msra.mxu0 0.0
      %874 = vmatprep.subr.mxu0 0.0
      %875 = vmatpush2.msra.mxu0 0.0
      %876 = vmatprep.subr.mxu0 0.0
      %877 = vmatpush2.msra.mxu0 0.0
      %878 = vmatprep.subr.mxu0 0.0
      %879 = vmatpush2.msra.mxu0 0.0
      %880 = vmatprep.subr.mxu0 0.0
      %881 = vmatpush2.msra.mxu0 0.0
      %882 = vmatprep.subr.mxu0 0.0
      %883 = vmatpush2.msra.mxu0 0.0
      %884 = vmatprep.subr.mxu0 0.0
      %885 = vmatpush2.msra.mxu0 0.0
      %886 = vmatprep.subr.mxu0 0.0
      %887 = vmatpush2.msra.mxu0 0.0
      %888 = vmatprep.subr.mxu0 0.0
      %889 = vmatpush2.msra.mxu0 0.0
      %890 = vmatprep.subr.mxu0 0.0
      %891 = vmatpush2.msra.mxu0 0.0
      %892 = vmatprep.mubr.f32.mxu0 0.0
      %893 = vmatmul.mubr.f32.gmra.mxu0 %v826
      %v894 = vpop.f32.mrf.mxu0
      %v895 = vadd.f32 %v823, %v894
      %v896 = vpop.f32.mrf.mxu0
      %897 = vdwg.mxu0
      %v898 = vld [vmem:[%s10] sm:$0xff]
      %v899 = vld [vmem:[%s10 + $0x8] sm:$0xff]
      %v900 = vld [vmem:[%s10 + $0x10] sm:$0xff]
      %v901 = vld [vmem:[%s10 + $0x18] sm:$0xff]
      %903 = vrot.lane.b32.xlu0 %v895, 96
      %v904 = vpop.permute.xlu0 %903
      %vm905 = vcmask 130048
      %v906 = vsel %vm905, %v895, 0
      %v908 = vsel %vm905, %v904, 0
      %910 = vmatprep.subr.mxu0 0.0
      %911 = vmatpush1.xpose.msra.mxu0 0.0
      %912 = vmatprep.subr.mxu0 0.0
      %913 = vmatpush1.xpose.msra.mxu0 0.0
      %914 = vmatprep.subr.mxu0 0.0
      %915 = vmatpush1.xpose.msra.mxu0 0.0
      %916 = vmatprep.subr.mxu0 0.0
      %917 = vmatpush1.xpose.msra.mxu0 0.0
      %918 = vmatprep.subr.mxu0 0.0
      %919 = vmatpush1.xpose.msra.mxu0 0.0
      %920 = vmatprep.subr.mxu0 0.0
      %921 = vmatpush1.xpose.msra.mxu0 0.0
      %922 = vmatprep.subr.mxu0 0.0
      %923 = vmatpush1.xpose.msra.mxu0 0.0
      %924 = vmatprep.subr.mxu0 0.0
      %925 = vmatpush1.xpose.msra.mxu0 0.0
      %926 = vmatprep.subr.mxu0 0.0
      %927 = vmatpush1.xpose.msra.mxu0 0.0
      %928 = vmatprep.subr.mxu0 0.0
      %929 = vmatpush1.xpose.msra.mxu0 0.0
      %930 = vmatprep.subr.mxu0 0.0
      %931 = vmatpush1.xpose.msra.mxu0 0.0
      %932 = vmatprep.subr.mxu0 0.0
      %933 = vmatpush1.xpose.msra.mxu0 0.0
      %934 = vmatprep.subr.mxu0 0.0
      %935 = vmatpush1.xpose.msra.mxu0 0.0
      %936 = vmatprep.subr.mxu0 0.0
      %937 = vmatpush1.xpose.msra.mxu0 0.0
      %938 = vmatprep.subr.mxu0 0.0
      %939 = vmatpush1.xpose.msra.mxu0 0.0
      %940 = vmatprep.subr.mxu0 0.0
      %941 = vmatpush1.xpose.msra.mxu0 %v908
      %942 = vmatprep.subr.mxu0 0.0
      %943 = vmatpush2.xpose.msra.mxu0 0.0
      %944 = vmatprep.subr.mxu0 0.0
      %945 = vmatpush2.xpose.msra.mxu0 0.0
      %946 = vmatprep.subr.mxu0 0.0
      %947 = vmatpush2.xpose.msra.mxu0 0.0
      %948 = vmatprep.subr.mxu0 0.0
      %949 = vmatpush2.xpose.msra.mxu0 0.0
      %950 = vmatprep.subr.mxu0 0.0
      %951 = vmatpush2.xpose.msra.mxu0 0.0
      %952 = vmatprep.subr.mxu0 0.0
      %953 = vmatpush2.xpose.msra.mxu0 0.0
      %954 = vmatprep.subr.mxu0 0.0
      %955 = vmatpush2.xpose.msra.mxu0 0.0
      %956 = vmatprep.subr.mxu0 0.0
      %957 = vmatpush2.xpose.msra.mxu0 0.0
      %958 = vmatprep.subr.mxu0 0.0
      %959 = vmatpush2.xpose.msra.mxu0 0.0
      %960 = vmatprep.subr.mxu0 0.0
      %961 = vmatpush2.xpose.msra.mxu0 0.0
      %962 = vmatprep.subr.mxu0 0.0
      %963 = vmatpush2.xpose.msra.mxu0 0.0
      %964 = vmatprep.subr.mxu0 0.0
      %965 = vmatpush2.xpose.msra.mxu0 0.0
      %966 = vmatprep.subr.mxu0 0.0
      %967 = vmatpush2.xpose.msra.mxu0 0.0
      %968 = vmatprep.subr.mxu0 0.0
      %969 = vmatpush2.xpose.msra.mxu0 0.0
      %970 = vmatprep.subr.mxu0 0.0
      %971 = vmatpush2.xpose.msra.mxu0 0.0
      %972 = vmatprep.subr.mxu0 0.0
      %973 = vmatpush2.xpose.msra.mxu0 0.0
      %974 = vmatprep.mubr.f32.mxu0 0.0
      %975 = vmatmul.mubr.f32.gmra.mxu0 %v906
      %v976 = vpop.f32.mrf.mxu0
      %v977 = vadd.f32 0.0, %v976
      %v978 = vpop.f32.mrf.mxu0
      %979 = vdwg.mxu0
      %v980 = vmul.f32 %v977, 0.25
      %v981 = vsel %vm782, %v980, -1e+30
      %vm982 = vcmask 64512
      %v983 = vsel %vm982, %v981, -inf
      %984 = vmax.xlane.f32.xlu0 %v983
      %v985 = vpop.xlane.xlu0 %984
      %v986 = vsub.f32 %v981, %v985
      %v987 = vmul.f32 %v986, 1.442695
      %v988 = vpow.pop %v987
      %v989 = vsel %vm982, %v988, 0.0
      %990 = vadd.xlane.f32.xlu0 %v989
      %v991 = vpop.xlane.xlu0 %990
      %v992 = vrcp.pop %v991
      %v993 = vmul.f32 %v988, %v992
      %994 = vrot.lane.b32.xlu0 %v895, 64
      %v995 = vpop.permute.xlu0 %994
      %v998 = vsel %vm982, %v993, 0
      %1000 = vmatprep.subr.mxu0 0.0
      %1001 = vmatpush1.msra.mxu0 0.0
      %1002 = vmatprep.subr.mxu0 0.0
      %1003 = vmatpush1.msra.mxu0 0.0
      %1004 = vmatprep.subr.mxu0 0.0
      %1005 = vmatpush1.msra.mxu0 0.0
      %1006 = vmatprep.subr.mxu0 0.0
      %1007 = vmatpush1.msra.mxu0 0.0
      %1008 = vmatprep.subr.mxu0 0.0
      %1009 = vmatpush1.msra.mxu0 0.0
      %1010 = vmatprep.subr.mxu0 0.0
      %1011 = vmatpush1.msra.mxu0 0.0
      %1012 = vmatprep.subr.mxu0 0.0
      %1013 = vmatpush1.msra.mxu0 0.0
      %1014 = vmatprep.subr.mxu0 0.0
      %1015 = vmatpush1.msra.mxu0 0.0
      %1016 = vmatprep.subr.mxu0 0.0
      %1017 = vmatpush1.msra.mxu0 0.0
      %1018 = vmatprep.subr.mxu0 0.0
      %1019 = vmatpush1.msra.mxu0 0.0
      %1020 = vmatprep.subr.mxu0 0.0
      %1021 = vmatpush1.msra.mxu0 0.0
      %1022 = vmatprep.subr.mxu0 0.0
      %1023 = vmatpush1.msra.mxu0 0.0
      %1024 = vmatprep.subr.mxu0 0.0
      %1025 = vmatpush1.msra.mxu0 0.0
      %1026 = vmatprep.subr.mxu0 0.0
      %1027 = vmatpush1.msra.mxu0 0.0
      %1028 = vmatprep.subr.mxu0 0.0
      %1029 = vmatpush1.msra.mxu0 0.0
      %1030 = vmatprep.subr.mxu0 0.0
      %1031 = vmatpush1.msra.mxu0 %v995
      %1032 = vmatprep.subr.mxu0 0.0
      %1033 = vmatpush2.msra.mxu0 0.0
      %1034 = vmatprep.subr.mxu0 0.0
      %1035 = vmatpush2.msra.mxu0 0.0
      %1036 = vmatprep.subr.mxu0 0.0
      %1037 = vmatpush2.msra.mxu0 0.0
      %1038 = vmatprep.subr.mxu0 0.0
      %1039 = vmatpush2.msra.mxu0 0.0
      %1040 = vmatprep.subr.mxu0 0.0
      %1041 = vmatpush2.msra.mxu0 0.0
      %1042 = vmatprep.subr.mxu0 0.0
      %1043 = vmatpush2.msra.mxu0 0.0
      %1044 = vmatprep.subr.mxu0 0.0
      %1045 = vmatpush2.msra.mxu0 0.0
      %1046 = vmatprep.subr.mxu0 0.0
      %1047 = vmatpush2.msra.mxu0 0.0
      %1048 = vmatprep.subr.mxu0 0.0
      %1049 = vmatpush2.msra.mxu0 0.0
      %1050 = vmatprep.subr.mxu0 0.0
      %1051 = vmatpush2.msra.mxu0 0.0
      %1052 = vmatprep.subr.mxu0 0.0
      %1053 = vmatpush2.msra.mxu0 0.0
      %1054 = vmatprep.subr.mxu0 0.0
      %1055 = vmatpush2.msra.mxu0 0.0
      %1056 = vmatprep.subr.mxu0 0.0
      %1057 = vmatpush2.msra.mxu0 0.0
      %1058 = vmatprep.subr.mxu0 0.0
      %1059 = vmatpush2.msra.mxu0 0.0
      %1060 = vmatprep.subr.mxu0 0.0
      %1061 = vmatpush2.msra.mxu0 0.0
      %1062 = vmatprep.subr.mxu0 0.0
      %1063 = vmatpush2.msra.mxu0 0.0
      %1064 = vmatprep.mubr.f32.mxu0 0.0
      %1065 = vmatmul.mubr.f32.gmra.mxu0 %v998
      %v1066 = vpop.f32.mrf.mxu0
      %v1067 = vadd.f32 0.0, %v1066
      %v1068 = vpop.f32.mrf.mxu0
      %1069 = vdwg.mxu0
      %1070 = vrot.lane.b32.xlu0 %v895, 112
      %v1071 = vpop.permute.xlu0 %1070
      %1072 = vrot.lane.b32.xlu0 %v895, 80
      %v1073 = vpop.permute.xlu0 %1072
      %v1074 = vsel %vm905, %v1071, 0
      %v1076 = vsel %vm905, %v1073, 0
      %1078 = vmatprep.subr.mxu0 0.0
      %1079 = vmatpush1.xpose.msra.mxu0 0.0
      %1080 = vmatprep.subr.mxu0 0.0
      %1081 = vmatpush1.xpose.msra.mxu0 0.0
      %1082 = vmatprep.subr.mxu0 0.0
      %1083 = vmatpush1.xpose.msra.mxu0 0.0
      %1084 = vmatprep.subr.mxu0 0.0
      %1085 = vmatpush1.xpose.msra.mxu0 0.0
      %1086 = vmatprep.subr.mxu0 0.0
      %1087 = vmatpush1.xpose.msra.mxu0 0.0
      %1088 = vmatprep.subr.mxu0 0.0
      %1089 = vmatpush1.xpose.msra.mxu0 0.0
      %1090 = vmatprep.subr.mxu0 0.0
      %1091 = vmatpush1.xpose.msra.mxu0 0.0
      %1092 = vmatprep.subr.mxu0 0.0
      %1093 = vmatpush1.xpose.msra.mxu0 0.0
      %1094 = vmatprep.subr.mxu0 0.0
      %1095 = vmatpush1.xpose.msra.mxu0 0.0
      %1096 = vmatprep.subr.mxu0 0.0
      %1097 = vmatpush1.xpose.msra.mxu0 0.0
      %1098 = vmatprep.subr.mxu0 0.0
      %1099 = vmatpush1.xpose.msra.mxu0 0.0
      %1100 = vmatprep.subr.mxu0 0.0
      %1101 = vmatpush1.xpose.msra.mxu0 0.0
      %1102 = vmatprep.subr.mxu0 0.0
      %1103 = vmatpush1.xpose.msra.mxu0 0.0
      %1104 = vmatprep.subr.mxu0 0.0
      %1105 = vmatpush1.xpose.msra.mxu0 0.0
      %1106 = vmatprep.subr.mxu0 0.0
      %1107 = vmatpush1.xpose.msra.mxu0 0.0
      %1108 = vmatprep.subr.mxu0 0.0
      %1109 = vmatpush1.xpose.msra.mxu0 %v1076
      %1110 = vmatprep.subr.mxu0 0.0
      %1111 = vmatpush2.xpose.msra.mxu0 0.0
      %1112 = vmatprep.subr.mxu0 0.0
      %1113 = vmatpush2.xpose.msra.mxu0 0.0
      %1114 = vmatprep.subr.mxu0 0.0
      %1115 = vmatpush2.xpose.msra.mxu0 0.0
      %1116 = vmatprep.subr.mxu0 0.0
      %1117 = vmatpush2.xpose.msra.mxu0 0.0
      %1118 = vmatprep.subr.mxu0 0.0
      %1119 = vmatpush2.xpose.msra.mxu0 0.0
      %1120 = vmatprep.subr.mxu0 0.0
      %1121 = vmatpush2.xpose.msra.mxu0 0.0
      %1122 = vmatprep.subr.mxu0 0.0
      %1123 = vmatpush2.xpose.msra.mxu0 0.0
      %1124 = vmatprep.subr.mxu0 0.0
      %1125 = vmatpush2.xpose.msra.mxu0 0.0
      %1126 = vmatprep.subr.mxu0 0.0
      %1127 = vmatpush2.xpose.msra.mxu0 0.0
      %1128 = vmatprep.subr.mxu0 0.0
      %1129 = vmatpush2.xpose.msra.mxu0 0.0
      %1130 = vmatprep.subr.mxu0 0.0
      %1131 = vmatpush2.xpose.msra.mxu0 0.0
      %1132 = vmatprep.subr.mxu0 0.0
      %1133 = vmatpush2.xpose.msra.mxu0 0.0
      %1134 = vmatprep.subr.mxu0 0.0
      %1135 = vmatpush2.xpose.msra.mxu0 0.0
      %1136 = vmatprep.subr.mxu0 0.0
      %1137 = vmatpush2.xpose.msra.mxu0 0.0
      %1138 = vmatprep.subr.mxu0 0.0
      %1139 = vmatpush2.xpose.msra.mxu0 0.0
      %1140 = vmatprep.subr.mxu0 0.0
      %1141 = vmatpush2.xpose.msra.mxu0 0.0
      %1142 = vmatprep.mubr.f32.mxu0 0.0
      %1143 = vmatmul.mubr.f32.gmra.mxu0 %v1074
      %v1144 = vpop.f32.mrf.mxu0
      %v1145 = vadd.f32 0.0, %v1144
      %v1146 = vpop.f32.mrf.mxu0
      %1147 = vdwg.mxu0
      %v1148 = vmul.f32 %v1145, 0.25
      %v1149 = vsel %vm782, %v1148, -1e+30
      %v1150 = vsel %vm982, %v1149, -inf
      %1151 = vmax.xlane.f32.xlu0 %v1150
      %v1152 = vpop.xlane.xlu0 %1151
      %v1153 = vsub.f32 %v1149, %v1152
      %v1154 = vmul.f32 %v1153, 1.442695
      %v1155 = vpow.pop %v1154
      %v1156 = vsel %vm982, %v1155, 0.0
      %1157 = vadd.xlane.f32.xlu0 %v1156
      %v1158 = vpop.xlane.xlu0 %1157
      %v1159 = vrcp.pop %v1158
      %v1160 = vmul.f32 %v1155, %v1159
      %1161 = vrot.lane.b32.xlu0 %v895, 48
      %v1162 = vpop.permute.xlu0 %1161
      %v1165 = vsel %vm982, %v1160, 0
      %1167 = vmatprep.subr.mxu0 0.0
      %1168 = vmatpush1.msra.mxu0 0.0
      %1169 = vmatprep.subr.mxu0 0.0
      %1170 = vmatpush1.msra.mxu0 0.0
      %1171 = vmatprep.subr.mxu0 0.0
      %1172 = vmatpush1.msra.mxu0 0.0
      %1173 = vmatprep.subr.mxu0 0.0
      %1174 = vmatpush1.msra.mxu0 0.0
      %1175 = vmatprep.subr.mxu0 0.0
      %1176 = vmatpush1.msra.mxu0 0.0
      %1177 = vmatprep.subr.mxu0 0.0
      %1178 = vmatpush1.msra.mxu0 0.0
      %1179 = vmatprep.subr.mxu0 0.0
      %1180 = vmatpush1.msra.mxu0 0.0
      %1181 = vmatprep.subr.mxu0 0.0
      %1182 = vmatpush1.msra.mxu0 0.0
      %1183 = vmatprep.subr.mxu0 0.0
      %1184 = vmatpush1.msra.mxu0 0.0
      %1185 = vmatprep.subr.mxu0 0.0
      %1186 = vmatpush1.msra.mxu0 0.0
      %1187 = vmatprep.subr.mxu0 0.0
      %1188 = vmatpush1.msra.mxu0 0.0
      %1189 = vmatprep.subr.mxu0 0.0
      %1190 = vmatpush1.msra.mxu0 0.0
      %1191 = vmatprep.subr.mxu0 0.0
      %1192 = vmatpush1.msra.mxu0 0.0
      %1193 = vmatprep.subr.mxu0 0.0
      %1194 = vmatpush1.msra.mxu0 0.0
      %1195 = vmatprep.subr.mxu0 0.0
      %1196 = vmatpush1.msra.mxu0 0.0
      %1197 = vmatprep.subr.mxu0 0.0
      %1198 = vmatpush1.msra.mxu0 %v1162
      %1199 = vmatprep.subr.mxu0 0.0
      %1200 = vmatpush2.msra.mxu0 0.0
      %1201 = vmatprep.subr.mxu0 0.0
      %1202 = vmatpush2.msra.mxu0 0.0
      %1203 = vmatprep.subr.mxu0 0.0
      %1204 = vmatpush2.msra.mxu0 0.0
      %1205 = vmatprep.subr.mxu0 0.0
      %1206 = vmatpush2.msra.mxu0 0.0
      %1207 = vmatprep.subr.mxu0 0.0
      %1208 = vmatpush2.msra.mxu0 0.0
      %1209 = vmatprep.subr.mxu0 0.0
      %1210 = vmatpush2.msra.mxu0 0.0
      %1211 = vmatprep.subr.mxu0 0.0
      %1212 = vmatpush2.msra.mxu0 0.0
      %1213 = vmatprep.subr.mxu0 0.0
      %1214 = vmatpush2.msra.mxu0 0.0
      %1215 = vmatprep.subr.mxu0 0.0
      %1216 = vmatpush2.msra.mxu0 0.0
      %1217 = vmatprep.subr.mxu0 0.0
      %1218 = vmatpush2.msra.mxu0 0.0
      %1219 = vmatprep.subr.mxu0 0.0
      %1220 = vmatpush2.msra.mxu0 0.0
      %1221 = vmatprep.subr.mxu0 0.0
      %1222 = vmatpush2.msra.mxu0 0.0
      %1223 = vmatprep.subr.mxu0 0.0
      %1224 = vmatpush2.msra.mxu0 0.0
      %1225 = vmatprep.subr.mxu0 0.0
      %1226 = vmatpush2.msra.mxu0 0.0
      %1227 = vmatprep.subr.mxu0 0.0
      %1228 = vmatpush2.msra.mxu0 0.0
      %1229 = vmatprep.subr.mxu0 0.0
      %1230 = vmatpush2.msra.mxu0 0.0
      %1231 = vmatprep.mubr.f32.mxu0 0.0
      %1232 = vmatmul.mubr.f32.gmra.mxu0 %v1165
      %v1233 = vpop.f32.mrf.mxu0
      %v1234 = vadd.f32 0.0, %v1233
      %v1235 = vpop.f32.mrf.mxu0
      %1236 = vdwg.mxu0
      %v1238 = vsel %vm905, %v1234, 0
      %1240 = vmatprep.subr.mxu0 0.0
      %1241 = vmatpush1.msra.mxu0 0.0
      %1242 = vmatprep.subr.mxu0 0.0
      %1243 = vmatpush1.msra.mxu0 0.0
      %1244 = vmatprep.subr.mxu0 0.0
      %1245 = vmatpush1.msra.mxu0 0.0
      %1246 = vmatprep.subr.mxu0 0.0
      %1247 = vmatpush1.msra.mxu0 0.0
      %1248 = vmatprep.subr.mxu0 0.0
      %1249 = vmatpush1.msra.mxu0 0.0
      %1250 = vmatprep.subr.mxu0 0.0
      %1251 = vmatpush1.msra.mxu0 0.0
      %1252 = vmatprep.subr.mxu0 0.0
      %1253 = vmatpush1.msra.mxu0 0.0
      %1254 = vmatprep.subr.mxu0 0.0
      %1255 = vmatpush1.msra.mxu0 0.0
      %1256 = vmatprep.subr.mxu0 0.0
      %1257 = vmatpush1.msra.mxu0 0.0
      %1258 = vmatprep.subr.mxu0 0.0
      %1259 = vmatpush1.msra.mxu0 0.0
      %1260 = vmatprep.subr.mxu0 0.0
      %1261 = vmatpush1.msra.mxu0 0.0
      %1262 = vmatprep.subr.mxu0 0.0
      %1263 = vmatpush1.msra.mxu0 0.0
      %1264 = vmatprep.subr.mxu0 0.0
      %1265 = vmatpush1.msra.mxu0 0.0
      %1266 = vmatprep.subr.mxu0 0.0
      %1267 = vmatpush1.msra.mxu0 0.0
      %1268 = vmatprep.subr.mxu0 0.0
      %1269 = vmatpush1.msra.mxu0 %v901
      %1270 = vmatprep.subr.mxu0 0.0
      %1271 = vmatpush1.msra.mxu0 %v900
      %1272 = vmatprep.subr.mxu0 0.0
      %1273 = vmatpush2.msra.mxu0 0.0
      %1274 = vmatprep.subr.mxu0 0.0
      %1275 = vmatpush2.msra.mxu0 0.0
      %1276 = vmatprep.subr.mxu0 0.0
      %1277 = vmatpush2.msra.mxu0 0.0
      %1278 = vmatprep.subr.mxu0 0.0
      %1279 = vmatpush2.msra.mxu0 0.0
      %1280 = vmatprep.subr.mxu0 0.0
      %1281 = vmatpush2.msra.mxu0 0.0
      %1282 = vmatprep.subr.mxu0 0.0
      %1283 = vmatpush2.msra.mxu0 0.0
      %1284 = vmatprep.subr.mxu0 0.0
      %1285 = vmatpush2.msra.mxu0 0.0
      %1286 = vmatprep.subr.mxu0 0.0
      %1287 = vmatpush2.msra.mxu0 0.0
      %1288 = vmatprep.subr.mxu0 0.0
      %1289 = vmatpush2.msra.mxu0 0.0
      %1290 = vmatprep.subr.mxu0 0.0
      %1291 = vmatpush2.msra.mxu0 0.0
      %1292 = vmatprep.subr.mxu0 0.0
      %1293 = vmatpush2.msra.mxu0 0.0
      %1294 = vmatprep.subr.mxu0 0.0
      %1295 = vmatpush2.msra.mxu0 0.0
      %1296 = vmatprep.subr.mxu0 0.0
      %1297 = vmatpush2.msra.mxu0 0.0
      %1298 = vmatprep.subr.mxu0 0.0
      %1299 = vmatpush2.msra.mxu0 0.0
      %1300 = vmatprep.subr.mxu0 0.0
      %1301 = vmatpush2.msra.mxu0 0.0
      %1302 = vmatprep.subr.mxu0 0.0
      %1303 = vmatpush2.msra.mxu0 0.0
      %1304 = vmatprep.mubr.f32.mxu0 0.0
      %1305 = vmatmul.mubr.f32.gmra.mxu0 %v1238
      %v1306 = vpop.f32.mrf.mxu0
      %v1307 = vadd.f32 0.0, %v1306
      %v1308 = vpop.f32.mrf.mxu0
      %1309 = vdwg.mxu0
      %v1311 = vsel %vm905, %v1067, 0
      %1313 = vmatprep.subr.mxu0 0.0
      %1314 = vmatpush1.msra.mxu0 0.0
      %1315 = vmatprep.subr.mxu0 0.0
      %1316 = vmatpush1.msra.mxu0 0.0
      %1317 = vmatprep.subr.mxu0 0.0
      %1318 = vmatpush1.msra.mxu0 0.0
      %1319 = vmatprep.subr.mxu0 0.0
      %1320 = vmatpush1.msra.mxu0 0.0
      %1321 = vmatprep.subr.mxu0 0.0
      %1322 = vmatpush1.msra.mxu0 0.0
      %1323 = vmatprep.subr.mxu0 0.0
      %1324 = vmatpush1.msra.mxu0 0.0
      %1325 = vmatprep.subr.mxu0 0.0
      %1326 = vmatpush1.msra.mxu0 0.0
      %1327 = vmatprep.subr.mxu0 0.0
      %1328 = vmatpush1.msra.mxu0 0.0
      %1329 = vmatprep.subr.mxu0 0.0
      %1330 = vmatpush1.msra.mxu0 0.0
      %1331 = vmatprep.subr.mxu0 0.0
      %1332 = vmatpush1.msra.mxu0 0.0
      %1333 = vmatprep.subr.mxu0 0.0
      %1334 = vmatpush1.msra.mxu0 0.0
      %1335 = vmatprep.subr.mxu0 0.0
      %1336 = vmatpush1.msra.mxu0 0.0
      %1337 = vmatprep.subr.mxu0 0.0
      %1338 = vmatpush1.msra.mxu0 0.0
      %1339 = vmatprep.subr.mxu0 0.0
      %1340 = vmatpush1.msra.mxu0 0.0
      %1341 = vmatprep.subr.mxu0 0.0
      %1342 = vmatpush1.msra.mxu0 %v899
      %1343 = vmatprep.subr.mxu0 0.0
      %1344 = vmatpush1.msra.mxu0 %v898
      %1345 = vmatprep.subr.mxu0 0.0
      %1346 = vmatpush2.msra.mxu0 0.0
      %1347 = vmatprep.subr.mxu0 0.0
      %1348 = vmatpush2.msra.mxu0 0.0
      %1349 = vmatprep.subr.mxu0 0.0
      %1350 = vmatpush2.msra.mxu0 0.0
      %1351 = vmatprep.subr.mxu0 0.0
      %1352 = vmatpush2.msra.mxu0 0.0
      %1353 = vmatprep.subr.mxu0 0.0
      %1354 = vmatpush2.msra.mxu0 0.0
      %1355 = vmatprep.subr.mxu0 0.0
      %1356 = vmatpush2.msra.mxu0 0.0
      %1357 = vmatprep.subr.mxu0 0.0
      %1358 = vmatpush2.msra.mxu0 0.0
      %1359 = vmatprep.subr.mxu0 0.0
      %1360 = vmatpush2.msra.mxu0 0.0
      %1361 = vmatprep.subr.mxu0 0.0
      %1362 = vmatpush2.msra.mxu0 0.0
      %1363 = vmatprep.subr.mxu0 0.0
      %1364 = vmatpush2.msra.mxu0 0.0
      %1365 = vmatprep.subr.mxu0 0.0
      %1366 = vmatpush2.msra.mxu0 0.0
      %1367 = vmatprep.subr.mxu0 0.0
      %1368 = vmatpush2.msra.mxu0 0.0
      %1369 = vmatprep.subr.mxu0 0.0
      %1370 = vmatpush2.msra.mxu0 0.0
      %1371 = vmatprep.subr.mxu0 0.0
      %1372 = vmatpush2.msra.mxu0 0.0
      %1373 = vmatprep.subr.mxu0 0.0
      %1374 = vmatpush2.msra.mxu0 0.0
      %1375 = vmatprep.subr.mxu0 0.0
      %1376 = vmatpush2.msra.mxu0 0.0
      %1377 = vmatprep.mubr.f32.mxu0 0.0
      %1378 = vmatmul.mubr.f32.gmra.mxu0 %v1311
      %v1379 = vpop.f32.mrf.mxu0
      %v1380 = vadd.f32 %v1307, %v1379
      %v1381 = vpop.f32.mrf.mxu0
      %1382 = vdwg.mxu0
      %v1383 = vadd.f32 %v769, %v1380
      %v1384 = vld [vmem:[%s11] sm:$0x1]
      %v1386 = vlaneseq
      %v1387 = vshrl.u32 %v1386, 7
      %v1388 = vsub.s32 0, %v1387
      %v1389 = vrot.slane %v1384, %v1388
      %v1391 = vadd.f32 %v1383, %v1389
      %v1392 = vld [vmem:[%s12] sm:$0x1]
      %v1393 = vld [vmem:[%s13] sm:$0x1]
      %v1394 = vsel %vm785, %v1391, 0.0
      %1395 = vadd.xlane.f32.xlu0 %v1394
      %v1396 = vpop.xlane.xlu0 %1395
      %v1397 = vmul.f32 %v1396, %v789
      %v1398 = vsub.f32 %v1391, %v1397
      %v1399 = vmul.f32 %v1398, %v1398
      %v1400 = vsel %vm785, %v1399, 0.0
      %1401 = vadd.xlane.f32.xlu0 %v1400
      %v1402 = vpop.xlane.xlu0 %1401
      %v1403 = vmul.f32 %v1402, %v789
      %v1404 = vadd.f32 %v1403, 1e-05
      %v1405 = vrsqrt.pop %v1404
      %v1406 = vmul.f32 %v1398, %v1405
      %v1408 = vlaneseq
      %v1409 = vshrl.u32 %v1408, 7
      %v1410 = vsub.s32 0, %v1409
      %v1411 = vrot.slane %v1392, %v1410
      %v1413 = vmul.f32 %v1406, %v1411
      %v1415 = vlaneseq
      %v1416 = vshrl.u32 %v1415, 7
      %v1417 = vsub.s32 0, %v1416
      %v1418 = vrot.slane %v1393, %v1417
      %v1420 = vadd.f32 %v1413, %v1418
      %v1421 = vld [vmem:[%s14] sm:$0xff]
      %v1422 = vld [vmem:[%s14 + $0x8] sm:$0xff]
      %v1423 = vld [vmem:[%s14 + $0x10] sm:$0xff]
      %v1424 = vld [vmem:[%s14 + $0x18] sm:$0xff]
      %v1425 = vld [vmem:[%s15] sm:$0x1]
      %v1427 = vlaneseq
      %v1428 = vshrl.u32 %v1427, 7
      %v1429 = vsub.s32 0, %v1428
      %v1430 = vrot.slane %v1425, %v1429
      %v1433 = vsel %vm785, %v1420, 0
      %1435 = vmatprep.subr.mxu0 0.0
      %1436 = vmatpush1.msra.mxu0 0.0
      %1437 = vmatprep.subr.mxu0 0.0
      %1438 = vmatpush1.msra.mxu0 0.0
      %1439 = vmatprep.subr.mxu0 0.0
      %1440 = vmatpush1.msra.mxu0 0.0
      %1441 = vmatprep.subr.mxu0 0.0
      %1442 = vmatpush1.msra.mxu0 0.0
      %1443 = vmatprep.subr.mxu0 0.0
      %1444 = vmatpush1.msra.mxu0 0.0
      %1445 = vmatprep.subr.mxu0 0.0
      %1446 = vmatpush1.msra.mxu0 0.0
      %1447 = vmatprep.subr.mxu0 0.0
      %1448 = vmatpush1.msra.mxu0 0.0
      %1449 = vmatprep.subr.mxu0 0.0
      %1450 = vmatpush1.msra.mxu0 0.0
      %1451 = vmatprep.subr.mxu0 0.0
      %1452 = vmatpush1.msra.mxu0 0.0
      %1453 = vmatprep.subr.mxu0 0.0
      %1454 = vmatpush1.msra.mxu0 0.0
      %1455 = vmatprep.subr.mxu0 0.0
      %1456 = vmatpush1.msra.mxu0 0.0
      %1457 = vmatprep.subr.mxu0 0.0
      %1458 = vmatpush1.msra.mxu0 0.0
      %1459 = vmatprep.subr.mxu0 0.0
      %1460 = vmatpush1.msra.mxu0 %v1424
      %1461 = vmatprep.subr.mxu0 0.0
      %1462 = vmatpush1.msra.mxu0 %v1423
      %1463 = vmatprep.subr.mxu0 0.0
      %1464 = vmatpush1.msra.mxu0 %v1422
      %1465 = vmatprep.subr.mxu0 0.0
      %1466 = vmatpush1.msra.mxu0 %v1421
      %1467 = vmatprep.subr.mxu0 0.0
      %1468 = vmatpush2.msra.mxu0 0.0
      %1469 = vmatprep.subr.mxu0 0.0
      %1470 = vmatpush2.msra.mxu0 0.0
      %1471 = vmatprep.subr.mxu0 0.0
      %1472 = vmatpush2.msra.mxu0 0.0
      %1473 = vmatprep.subr.mxu0 0.0
      %1474 = vmatpush2.msra.mxu0 0.0
      %1475 = vmatprep.subr.mxu0 0.0
      %1476 = vmatpush2.msra.mxu0 0.0
      %1477 = vmatprep.subr.mxu0 0.0
      %1478 = vmatpush2.msra.mxu0 0.0
      %1479 = vmatprep.subr.mxu0 0.0
      %1480 = vmatpush2.msra.mxu0 0.0
      %1481 = vmatprep.subr.mxu0 0.0
      %1482 = vmatpush2.msra.mxu0 0.0
      %1483 = vmatprep.subr.mxu0 0.0
      %1484 = vmatpush2.msra.mxu0 0.0
      %1485 = vmatprep.subr.mxu0 0.0
      %1486 = vmatpush2.msra.mxu0 0.0
      %1487 = vmatprep.subr.mxu0 0.0
      %1488 = vmatpush2.msra.mxu0 0.0
      %1489 = vmatprep.subr.mxu0 0.0
      %1490 = vmatpush2.msra.mxu0 0.0
      %1491 = vmatprep.subr.mxu0 0.0
      %1492 = vmatpush2.msra.mxu0 0.0
      %1493 = vmatprep.subr.mxu0 0.0
      %1494 = vmatpush2.msra.mxu0 0.0
      %1495 = vmatprep.subr.mxu0 0.0
      %1496 = vmatpush2.msra.mxu0 0.0
      %1497 = vmatprep.subr.mxu0 0.0
      %1498 = vmatpush2.msra.mxu0 0.0
      %1499 = vmatprep.mubr.f32.mxu0 0.0
      %1500 = vmatmul.mubr.f32.gmra.mxu0 %v1433
      %v1501 = vpop.f32.mrf.mxu0
      %v1502 = vadd.f32 %v1430, %v1501
      %v1503 = vpop.f32.mrf.mxu0
      %1504 = vdwg.mxu0
      %v1505 = vmul.f32 %v1502, %v1502
      %v1506 = vmul.f32 %v1502, %v1505
      %v1507 = vmul.f32 %v1506, 0.044715
      %v1508 = vadd.f32 %v1502, %v1507
      %v1509 = vmul.f32 %v1508, 0.7978846
      %v1510 = vtanh.pop %v1509
      %v1511 = vadd.f32 %v1510, 1.0
      %v1512 = vmul.f32 %v1511, 0.5
      %v1513 = vmul.f32 %v1502, %v1512
      %v1514 = vld [vmem:[%s16] sm:$0xff]
      %v1515 = vld [vmem:[%s16 + $0x8] sm:$0xff]
      %v1516 = vld [vmem:[%s16 + $0x10] sm:$0xff]
      %v1517 = vld [vmem:[%s16 + $0x18] sm:$0xff]
      %v1518 = vld [vmem:[%s16 + $0x20] sm:$0xff]
      %v1519 = vld [vmem:[%s16 + $0x28] sm:$0xff]
      %v1520 = vld [vmem:[%s16 + $0x30] sm:$0xff]
      %v1521 = vld [vmem:[%s16 + $0x38] sm:$0xff]
      %vm1522 = vcmask 523264
      %v1524 = vsel %vm1522, %v1513, 0
      %1526 = vmatprep.subr.mxu0 0.0
      %1527 = vmatpush1.msra.mxu0 0.0
      %1528 = vmatprep.subr.mxu0 0.0
      %1529 = vmatpush1.msra.mxu0 0.0
      %1530 = vmatprep.subr.mxu0 0.0
      %1531 = vmatpush1.msra.mxu0 0.0
      %1532 = vmatprep.subr.mxu0 0.0
      %1533 = vmatpush1.msra.mxu0 0.0
      %1534 = vmatprep.subr.mxu0 0.0
      %1535 = vmatpush1.msra.mxu0 0.0
      %1536 = vmatprep.subr.mxu0 0.0
      %1537 = vmatpush1.msra.mxu0 0.0
      %1538 = vmatprep.subr.mxu0 0.0
      %1539 = vmatpush1.msra.mxu0 0.0
      %1540 = vmatprep.subr.mxu0 0.0
      %1541 = vmatpush1.msra.mxu0 0.0
      %1542 = vmatprep.subr.mxu0 0.0
      %1543 = vmatpush1.msra.mxu0 %v1521
      %1544 = vmatprep.subr.mxu0 0.0
      %1545 = vmatpush1.msra.mxu0 %v1520
      %1546 = vmatprep.subr.mxu0 0.0
      %1547 = vmatpush1.msra.mxu0 %v1519
      %1548 = vmatprep.subr.mxu0 0.0
      %1549 = vmatpush1.msra.mxu0 %v1518
      %1550 = vmatprep.subr.mxu0 0.0
      %1551 = vmatpush1.msra.mxu0 %v1517
      %1552 = vmatprep.subr.mxu0 0.0
      %1553 = vmatpush1.msra.mxu0 %v1516
      %1554 = vmatprep.subr.mxu0 0.0
      %1555 = vmatpush1.msra.mxu0 %v1515
      %1556 = vmatprep.subr.mxu0 0.0
      %1557 = vmatpush1.msra.mxu0 %v1514
      %1558 = vmatprep.subr.mxu0 0.0
      %1559 = vmatpush2.msra.mxu0 0.0
      %1560 = vmatprep.subr.mxu0 0.0
      %1561 = vmatpush2.msra.mxu0 0.0
      %1562 = vmatprep.subr.mxu0 0.0
      %1563 = vmatpush2.msra.mxu0 0.0
      %1564 = vmatprep.subr.mxu0 0.0
      %1565 = vmatpush2.msra.mxu0 0.0
      %1566 = vmatprep.subr.mxu0 0.0
      %1567 = vmatpush2.msra.mxu0 0.0
      %1568 = vmatprep.subr.mxu0 0.0
      %1569 = vmatpush2.msra.mxu0 0.0
      %1570 = vmatprep.subr.mxu0 0.0
      %1571 = vmatpush2.msra.mxu0 0.0
      %1572 = vmatprep.subr.mxu0 0.0
      %1573 = vmatpush2.msra.mxu0 0.0
      %1574 = vmatprep.subr.mxu0 0.0
      %1575 = vmatpush2.msra.mxu0 0.0
      %1576 = vmatprep.subr.mxu0 0.0
      %1577 = vmatpush2.msra.mxu0 0.0
      %1578 = vmatprep.subr.mxu0 0.0
      %1579 = vmatpush2.msra.mxu0 0.0
      %1580 = vmatprep.subr.mxu0 0.0
      %1581 = vmatpush2.msra.mxu0 0.0
      %1582 = vmatprep.subr.mxu0 0.0
      %1583 = vmatpush2.msra.mxu0 0.0
      %1584 = vmatprep.subr.mxu0 0.0
      %1585 = vmatpush2.msra.mxu0 0.0
      %1586 = vmatprep.subr.mxu0 0.0
      %1587 = vmatpush2.msra.mxu0 0.0
      %1588 = vmatprep.subr.mxu0 0.0
      %1589 = vmatpush2.msra.mxu0 0.0
      %1590 = vmatprep.mubr.f32.mxu0 0.0
      %1591 = vmatmul.mubr.f32.gmra.mxu0 %v1524
      %v1592 = vpop.f32.mrf.mxu0
      %v1593 = vadd.f32 0.0, %v1592
      %v1594 = vpop.f32.mrf.mxu0
      %1595 = vdwg.mxu0
      %v1596 = vadd.f32 %v1391, %v1593
      %v1597 = vld [vmem:[%s17] sm:$0x1]
      %v1599 = vlaneseq
      %v1600 = vshrl.u32 %v1599, 7
      %v1601 = vsub.s32 0, %v1600
      %v1602 = vrot.slane %v1597, %v1601
      %v1604 = vadd.f32 %v1596, %v1602
      %s1605 = scalar_lea.vmem %s6, 1
      %v1606 = vld [vmem:[%s1605] sm:$0x1]
      %s1607 = scalar_lea.vmem %s7, 1
      %v1608 = vld [vmem:[%s1607] sm:$0x1]
      %v1609 = vsel %vm785, %v1604, 0.0
      %1610 = vadd.xlane.f32.xlu0 %v1609
      %v1611 = vpop.xlane.xlu0 %1610
      %v1612 = vmul.f32 %v1611, %v789
      %v1613 = vsub.f32 %v1604, %v1612
      %v1614 = vmul.f32 %v1613, %v1613
      %v1615 = vsel %vm785, %v1614, 0.0
      %1616 = vadd.xlane.f32.xlu0 %v1615
      %v1617 = vpop.xlane.xlu0 %1616
      %v1618 = vmul.f32 %v1617, %v789
      %v1619 = vadd.f32 %v1618, 1e-05
      %v1620 = vrsqrt.pop %v1619
      %v1621 = vmul.f32 %v1613, %v1620
      %v1623 = vlaneseq
      %v1624 = vshrl.u32 %v1623, 7
      %v1625 = vsub.s32 0, %v1624
      %v1626 = vrot.slane %v1606, %v1625
      %v1628 = vmul.f32 %v1621, %v1626
      %v1630 = vlaneseq
      %v1631 = vshrl.u32 %v1630, 7
      %v1632 = vsub.s32 0, %v1631
      %v1633 = vrot.slane %v1608, %v1632
      %v1635 = vadd.f32 %v1628, %v1633
      %s1636 = scalar_lea.vmem %s8, 32
      %v1637 = vld [vmem:[%s1636] sm:$0xff]
      %v1638 = vld [vmem:[%s1636 + $0x8] sm:$0xff]
      %v1639 = vld [vmem:[%s1636 + $0x10] sm:$0xff]
      %v1640 = vld [vmem:[%s1636 + $0x18] sm:$0xff]
      %s1641 = scalar_lea.vmem %s9, 1
      %v1642 = vld [vmem:[%s1641] sm:$0x1]
      %v1644 = vlaneseq
      %v1645 = vshrl.u32 %v1644, 7
      %v1646 = vsub.s32 0, %v1645
      %v1647 = vrot.slane %v1642, %v1646
      %v1650 = vsel %vm785, %v1635, 0
      %1652 = vmatprep.subr.mxu0 0.0
      %1653 = vmatpush1.msra.mxu0 0.0
      %1654 = vmatprep.subr.mxu0 0.0
      %1655 = vmatpush1.msra.mxu0 0.0
      %1656 = vmatprep.subr.mxu0 0.0
      %1657 = vmatpush1.msra.mxu0 0.0
      %1658 = vmatprep.subr.mxu0 0.0
      %1659 = vmatpush1.msra.mxu0 0.0
      %1660 = vmatprep.subr.mxu0 0.0
      %1661 = vmatpush1.msra.mxu0 0.0
      %1662 = vmatprep.subr.mxu0 0.0
      %1663 = vmatpush1.msra.mxu0 0.0
      %1664 = vmatprep.subr.mxu0 0.0
      %1665 = vmatpush1.msra.mxu0 0.0
      %1666 = vmatprep.subr.mxu0 0.0
      %1667 = vmatpush1.msra.mxu0 0.0
      %1668 = vmatprep.subr.mxu0 0.0
      %1669 = vmatpush1.msra.mxu0 0.0
      %1670 = vmatprep.subr.mxu0 0.0
      %1671 = vmatpush1.msra.mxu0 0.0
      %1672 = vmatprep.subr.mxu0 0.0
      %1673 = vmatpush1.msra.mxu0 0.0
      %1674 = vmatprep.subr.mxu0 0.0
      %1675 = vmatpush1.msra.mxu0 0.0
      %1676 = vmatprep.subr.mxu0 0.0
      %1677 = vmatpush1.msra.mxu0 %v1640
      %1678 = vmatprep.subr.mxu0 0.0
      %1679 = vmatpush1.msra.mxu0 %v1639
      %1680 = vmatprep.subr.mxu0 0.0
      %1681 = vmatpush1.msra.mxu0 %v1638
      %1682 = vmatprep.subr.mxu0 0.0
      %1683 = vmatpush1.msra.mxu0 %v1637
      %1684 = vmatprep.subr.mxu0 0.0
      %1685 = vmatpush2.msra.mxu0 0.0
      %1686 = vmatprep.subr.mxu0 0.0
      %1687 = vmatpush2.msra.mxu0 0.0
      %1688 = vmatprep.subr.mxu0 0.0
      %1689 = vmatpush2.msra.mxu0 0.0
      %1690 = vmatprep.subr.mxu0 0.0
      %1691 = vmatpush2.msra.mxu0 0.0
      %1692 = vmatprep.subr.mxu0 0.0
      %1693 = vmatpush2.msra.mxu0 0.0
      %1694 = vmatprep.subr.mxu0 0.0
      %1695 = vmatpush2.msra.mxu0 0.0
      %1696 = vmatprep.subr.mxu0 0.0
      %1697 = vmatpush2.msra.mxu0 0.0
      %1698 = vmatprep.subr.mxu0 0.0
      %1699 = vmatpush2.msra.mxu0 0.0
      %1700 = vmatprep.subr.mxu0 0.0
      %1701 = vmatpush2.msra.mxu0 0.0
      %1702 = vmatprep.subr.mxu0 0.0
      %1703 = vmatpush2.msra.mxu0 0.0
      %1704 = vmatprep.subr.mxu0 0.0
      %1705 = vmatpush2.msra.mxu0 0.0
      %1706 = vmatprep.subr.mxu0 0.0
      %1707 = vmatpush2.msra.mxu0 0.0
      %1708 = vmatprep.subr.mxu0 0.0
      %1709 = vmatpush2.msra.mxu0 0.0
      %1710 = vmatprep.subr.mxu0 0.0
      %1711 = vmatpush2.msra.mxu0 0.0
      %1712 = vmatprep.subr.mxu0 0.0
      %1713 = vmatpush2.msra.mxu0 0.0
      %1714 = vmatprep.subr.mxu0 0.0
      %1715 = vmatpush2.msra.mxu0 0.0
      %1716 = vmatprep.mubr.f32.mxu0 0.0
      %1717 = vmatmul.mubr.f32.gmra.mxu0 %v1650
      %v1718 = vpop.f32.mrf.mxu0
      %v1719 = vadd.f32 %v1647, %v1718
      %v1720 = vpop.f32.mrf.mxu0
      %1721 = vdwg.mxu0
      %s1722 = scalar_lea.vmem %s10, 32
      %v1723 = vld [vmem:[%s1722] sm:$0xff]
      %v1724 = vld [vmem:[%s1722 + $0x8] sm:$0xff]
      %v1725 = vld [vmem:[%s1722 + $0x10] sm:$0xff]
      %v1726 = vld [vmem:[%s1722 + $0x18] sm:$0xff]
      %1728 = vrot.lane.b32.xlu0 %v1719, 96
      %v1729 = vpop.permute.xlu0 %1728
      %v1730 = vsel %vm905, %v1719, 0
      %v1732 = vsel %vm905, %v1729, 0
      %1734 = vmatprep.subr.mxu0 0.0
      %1735 = vmatpush1.xpose.msra.mxu0 0.0
      %1736 = vmatprep.subr.mxu0 0.0
      %1737 = vmatpush1.xpose.msra.mxu0 0.0
      %1738 = vmatprep.subr.mxu0 0.0
      %1739 = vmatpush1.xpose.msra.mxu0 0.0
      %1740 = vmatprep.subr.mxu0 0.0
      %1741 = vmatpush1.xpose.msra.mxu0 0.0
      %1742 = vmatprep.subr.mxu0 0.0
      %1743 = vmatpush1.xpose.msra.mxu0 0.0
      %1744 = vmatprep.subr.mxu0 0.0
      %1745 = vmatpush1.xpose.msra.mxu0 0.0
      %1746 = vmatprep.subr.mxu0 0.0
      %1747 = vmatpush1.xpose.msra.mxu0 0.0
      %1748 = vmatprep.subr.mxu0 0.0
      %1749 = vmatpush1.xpose.msra.mxu0 0.0
      %1750 = vmatprep.subr.mxu0 0.0
      %1751 = vmatpush1.xpose.msra.mxu0 0.0
      %1752 = vmatprep.subr.mxu0 0.0
      %1753 = vmatpush1.xpose.msra.mxu0 0.0
      %1754 = vmatprep.subr.mxu0 0.0
      %1755 = vmatpush1.xpose.msra.mxu0 0.0
      %1756 = vmatprep.subr.mxu0 0.0
      %1757 = vmatpush1.xpose.msra.mxu0 0.0
      %1758 = vmatprep.subr.mxu0 0.0
      %1759 = vmatpush1.xpose.msra.mxu0 0.0
      %1760 = vmatprep.subr.mxu0 0.0
      %1761 = vmatpush1.xpose.msra.mxu0 0.0
      %1762 = vmatprep.subr.mxu0 0.0
      %1763 = vmatpush1.xpose.msra.mxu0 0.0
      %1764 = vmatprep.subr.mxu0 0.0
      %1765 = vmatpush1.xpose.msra.mxu0 %v1732
      %1766 = vmatprep.subr.mxu0 0.0
      %1767 = vmatpush2.xpose.msra.mxu0 0.0
      %1768 = vmatprep.subr.mxu0 0.0
      %1769 = vmatpush2.xpose.msra.mxu0 0.0
      %1770 = vmatprep.subr.mxu0 0.0
      %1771 = vmatpush2.xpose.msra.mxu0 0.0
      %1772 = vmatprep.subr.mxu0 0.0
      %1773 = vmatpush2.xpose.msra.mxu0 0.0
      %1774 = vmatprep.subr.mxu0 0.0
      %1775 = vmatpush2.xpose.msra.mxu0 0.0
      %1776 = vmatprep.subr.mxu0 0.0
      %1777 = vmatpush2.xpose.msra.mxu0 0.0
      %1778 = vmatprep.subr.mxu0 0.0
      %1779 = vmatpush2.xpose.msra.mxu0 0.0
      %1780 = vmatprep.subr.mxu0 0.0
      %1781 = vmatpush2.xpose.msra.mxu0 0.0
      %1782 = vmatprep.subr.mxu0 0.0
      %1783 = vmatpush2.xpose.msra.mxu0 0.0
      %1784 = vmatprep.subr.mxu0 0.0
      %1785 = vmatpush2.xpose.msra.mxu0 0.0
      %1786 = vmatprep.subr.mxu0 0.0
      %1787 = vmatpush2.xpose.msra.mxu0 0.0
      %1788 = vmatprep.subr.mxu0 0.0
      %1789 = vmatpush2.xpose.msra.mxu0 0.0
      %1790 = vmatprep.subr.mxu0 0.0
      %1791 = vmatpush2.xpose.msra.mxu0 0.0
      %1792 = vmatprep.subr.mxu0 0.0
      %1793 = vmatpush2.xpose.msra.mxu0 0.0
      %1794 = vmatprep.subr.mxu0 0.0
      %1795 = vmatpush2.xpose.msra.mxu0 0.0
      %1796 = vmatprep.subr.mxu0 0.0
      %1797 = vmatpush2.xpose.msra.mxu0 0.0
      %1798 = vmatprep.mubr.f32.mxu0 0.0
      %1799 = vmatmul.mubr.f32.gmra.mxu0 %v1730
      %v1800 = vpop.f32.mrf.mxu0
      %v1801 = vadd.f32 0.0, %v1800
      %v1802 = vpop.f32.mrf.mxu0
      %1803 = vdwg.mxu0
      %v1804 = vmul.f32 %v1801, 0.25
      %v1805 = vsel %vm782, %v1804, -1e+30
      %v1806 = vsel %vm982, %v1805, -inf
      %1807 = vmax.xlane.f32.xlu0 %v1806
      %v1808 = vpop.xlane.xlu0 %1807
      %v1809 = vsub.f32 %v1805, %v1808
      %v1810 = vmul.f32 %v1809, 1.442695
      %v1811 = vpow.pop %v1810
      %v1812 = vsel %vm982, %v1811, 0.0
      %1813 = vadd.xlane.f32.xlu0 %v1812
      %v1814 = vpop.xlane.xlu0 %1813
      %v1815 = vrcp.pop %v1814
      %v1816 = vmul.f32 %v1811, %v1815
      %1817 = vrot.lane.b32.xlu0 %v1719, 64
      %v1818 = vpop.permute.xlu0 %1817
      %v1821 = vsel %vm982, %v1816, 0
      %1823 = vmatprep.subr.mxu0 0.0
      %1824 = vmatpush1.msra.mxu0 0.0
      %1825 = vmatprep.subr.mxu0 0.0
      %1826 = vmatpush1.msra.mxu0 0.0
      %1827 = vmatprep.subr.mxu0 0.0
      %1828 = vmatpush1.msra.mxu0 0.0
      %1829 = vmatprep.subr.mxu0 0.0
      %1830 = vmatpush1.msra.mxu0 0.0
      %1831 = vmatprep.subr.mxu0 0.0
      %1832 = vmatpush1.msra.mxu0 0.0
      %1833 = vmatprep.subr.mxu0 0.0
      %1834 = vmatpush1.msra.mxu0 0.0
      %1835 = vmatprep.subr.mxu0 0.0
      %1836 = vmatpush1.msra.mxu0 0.0
      %1837 = vmatprep.subr.mxu0 0.0
      %1838 = vmatpush1.msra.mxu0 0.0
      %1839 = vmatprep.subr.mxu0 0.0
      %1840 = vmatpush1.msra.mxu0 0.0
      %1841 = vmatprep.subr.mxu0 0.0
      %1842 = vmatpush1.msra.mxu0 0.0
      %1843 = vmatprep.subr.mxu0 0.0
      %1844 = vmatpush1.msra.mxu0 0.0
      %1845 = vmatprep.subr.mxu0 0.0
      %1846 = vmatpush1.msra.mxu0 0.0
      %1847 = vmatprep.subr.mxu0 0.0
      %1848 = vmatpush1.msra.mxu0 0.0
      %1849 = vmatprep.subr.mxu0 0.0
      %1850 = vmatpush1.msra.mxu0 0.0
      %1851 = vmatprep.subr.mxu0 0.0
      %1852 = vmatpush1.msra.mxu0 0.0
      %1853 = vmatprep.subr.mxu0 0.0
      %1854 = vmatpush1.msra.mxu0 %v1818
      %1855 = vmatprep.subr.mxu0 0.0
      %1856 = vmatpush2.msra.mxu0 0.0
      %1857 = vmatprep.subr.mxu0 0.0
      %1858 = vmatpush2.msra.mxu0 0.0
      %1859 = vmatprep.subr.mxu0 0.0
      %1860 = vmatpush2.msra.mxu0 0.0
      %1861 = vmatprep.subr.mxu0 0.0
      %1862 = vmatpush2.msra.mxu0 0.0
      %1863 = vmatprep.subr.mxu0 0.0
      %1864 = vmatpush2.msra.mxu0 0.0
      %1865 = vmatprep.subr.mxu0 0.0
      %1866 = vmatpush2.msra.mxu0 0.0
      %1867 = vmatprep.subr.mxu0 0.0
      %1868 = vmatpush2.msra.mxu0 0.0
      %1869 = vmatprep.subr.mxu0 0.0
      %1870 = vmatpush2.msra.mxu0 0.0
      %1871 = vmatprep.subr.mxu0 0.0
      %1872 = vmatpush2.msra.mxu0 0.0
      %1873 = vmatprep.subr.mxu0 0.0
      %1874 = vmatpush2.msra.mxu0 0.0
      %1875 = vmatprep.subr.mxu0 0.0
      %1876 = vmatpush2.msra.mxu0 0.0
      %1877 = vmatprep.subr.mxu0 0.0
      %1878 = vmatpush2.msra.mxu0 0.0
      %1879 = vmatprep.subr.mxu0 0.0
      %1880 = vmatpush2.msra.mxu0 0.0
      %1881 = vmatprep.subr.mxu0 0.0
      %1882 = vmatpush2.msra.mxu0 0.0
      %1883 = vmatprep.subr.mxu0 0.0
      %1884 = vmatpush2.msra.mxu0 0.0
      %1885 = vmatprep.subr.mxu0 0.0
      %1886 = vmatpush2.msra.mxu0 0.0
      %1887 = vmatprep.mubr.f32.mxu0 0.0
      %1888 = vmatmul.mubr.f32.gmra.mxu0 %v1821
      %v1889 = vpop.f32.mrf.mxu0
      %v1890 = vadd.f32 0.0, %v1889
      %v1891 = vpop.f32.mrf.mxu0
      %1892 = vdwg.mxu0
      %1893 = vrot.lane.b32.xlu0 %v1719, 112
      %v1894 = vpop.permute.xlu0 %1893
      %1895 = vrot.lane.b32.xlu0 %v1719, 80
      %v1896 = vpop.permute.xlu0 %1895
      %v1897 = vsel %vm905, %v1894, 0
      %v1899 = vsel %vm905, %v1896, 0
      %1901 = vmatprep.subr.mxu0 0.0
      %1902 = vmatpush1.xpose.msra.mxu0 0.0
      %1903 = vmatprep.subr.mxu0 0.0
      %1904 = vmatpush1.xpose.msra.mxu0 0.0
      %1905 = vmatprep.subr.mxu0 0.0
      %1906 = vmatpush1.xpose.msra.mxu0 0.0
      %1907 = vmatprep.subr.mxu0 0.0
      %1908 = vmatpush1.xpose.msra.mxu0 0.0
      %1909 = vmatprep.subr.mxu0 0.0
      %1910 = vmatpush1.xpose.msra.mxu0 0.0
      %1911 = vmatprep.subr.mxu0 0.0
      %1912 = vmatpush1.xpose.msra.mxu0 0.0
      %1913 = vmatprep.subr.mxu0 0.0
      %1914 = vmatpush1.xpose.msra.mxu0 0.0
      %1915 = vmatprep.subr.mxu0 0.0
      %1916 = vmatpush1.xpose.msra.mxu0 0.0
      %1917 = vmatprep.subr.mxu0 0.0
      %1918 = vmatpush1.xpose.msra.mxu0 0.0
      %1919 = vmatprep.subr.mxu0 0.0
      %1920 = vmatpush1.xpose.msra.mxu0 0.0
      %1921 = vmatprep.subr.mxu0 0.0
      %1922 = vmatpush1.xpose.msra.mxu0 0.0
      %1923 = vmatprep.subr.mxu0 0.0
      %1924 = vmatpush1.xpose.msra.mxu0 0.0
      %1925 = vmatprep.subr.mxu0 0.0
      %1926 = vmatpush1.xpose.msra.mxu0 0.0
      %1927 = vmatprep.subr.mxu0 0.0
      %1928 = vmatpush1.xpose.msra.mxu0 0.0
      %1929 = vmatprep.subr.mxu0 0.0
      %1930 = vmatpush1.xpose.msra.mxu0 0.0
      %1931 = vmatprep.subr.mxu0 0.0
      %1932 = vmatpush1.xpose.msra.mxu0 %v1899
      %1933 = vmatprep.subr.mxu0 0.0
      %1934 = vmatpush2.xpose.msra.mxu0 0.0
      %1935 = vmatprep.subr.mxu0 0.0
      %1936 = vmatpush2.xpose.msra.mxu0 0.0
      %1937 = vmatprep.subr.mxu0 0.0
      %1938 = vmatpush2.xpose.msra.mxu0 0.0
      %1939 = vmatprep.subr.mxu0 0.0
      %1940 = vmatpush2.xpose.msra.mxu0 0.0
      %1941 = vmatprep.subr.mxu0 0.0
      %1942 = vmatpush2.xpose.msra.mxu0 0.0
      %1943 = vmatprep.subr.mxu0 0.0
      %1944 = vmatpush2.xpose.msra.mxu0 0.0
      %1945 = vmatprep.subr.mxu0 0.0
      %1946 = vmatpush2.xpose.msra.mxu0 0.0
      %1947 = vmatprep.subr.mxu0 0.0
      %1948 = vmatpush2.xpose.msra.mxu0 0.0
      %1949 = vmatprep.subr.mxu0 0.0
      %1950 = vmatpush2.xpose.msra.mxu0 0.0
      %1951 = vmatprep.subr.mxu0 0.0
      %1952 = vmatpush2.xpose.msra.mxu0 0.0
      %1953 = vmatprep.subr.mxu0 0.0
      %1954 = vmatpush2.xpose.msra.mxu0 0.0
      %1955 = vmatprep.subr.mxu0 0.0
      %1956 = vmatpush2.xpose.msra.mxu0 0.0
      %1957 = vmatprep.subr.mxu0 0.0
      %1958 = vmatpush2.xpose.msra.mxu0 0.0
      %1959 = vmatprep.subr.mxu0 0.0
      %1960 = vmatpush2.xpose.msra.mxu0 0.0
      %1961 = vmatprep.subr.mxu0 0.0
      %1962 = vmatpush2.xpose.msra.mxu0 0.0
      %1963 = vmatprep.subr.mxu0 0.0
      %1964 = vmatpush2.xpose.msra.mxu0 0.0
      %1965 = vmatprep.mubr.f32.mxu0 0.0
      %1966 = vmatmul.mubr.f32.gmra.mxu0 %v1897
      %v1967 = vpop.f32.mrf.mxu0
      %v1968 = vadd.f32 0.0, %v1967
      %v1969 = vpop.f32.mrf.mxu0
      %1970 = vdwg.mxu0
      %v1971 = vmul.f32 %v1968, 0.25
      %v1972 = vsel %vm782, %v1971, -1e+30
      %v1973 = vsel %vm982, %v1972, -inf
      %1974 = vmax.xlane.f32.xlu0 %v1973
      %v1975 = vpop.xlane.xlu0 %1974
      %v1976 = vsub.f32 %v1972, %v1975
      %v1977 = vmul.f32 %v1976, 1.442695
      %v1978 = vpow.pop %v1977
      %v1979 = vsel %vm982, %v1978, 0.0
      %1980 = vadd.xlane.f32.xlu0 %v1979
      %v1981 = vpop.xlane.xlu0 %1980
      %v1982 = vrcp.pop %v1981
      %v1983 = vmul.f32 %v1978, %v1982
      %1984 = vrot.lane.b32.xlu0 %v1719, 48
      %v1985 = vpop.permute.xlu0 %1984
      %v1988 = vsel %vm982, %v1983, 0
      %1990 = vmatprep.subr.mxu0 0.0
      %1991 = vmatpush1.msra.mxu0 0.0
      %1992 = vmatprep.subr.mxu0 0.0
      %1993 = vmatpush1.msra.mxu0 0.0
      %1994 = vmatprep.subr.mxu0 0.0
      %1995 = vmatpush1.msra.mxu0 0.0
      %1996 = vmatprep.subr.mxu0 0.0
      %1997 = vmatpush1.msra.mxu0 0.0
      %1998 = vmatprep.subr.mxu0 0.0
      %1999 = vmatpush1.msra.mxu0 0.0
      %2000 = vmatprep.subr.mxu0 0.0
      %2001 = vmatpush1.msra.mxu0 0.0
      %2002 = vmatprep.subr.mxu0 0.0
      %2003 = vmatpush1.msra.mxu0 0.0
      %2004 = vmatprep.subr.mxu0 0.0
      %2005 = vmatpush1.msra.mxu0 0.0
      %2006 = vmatprep.subr.mxu0 0.0
      %2007 = vmatpush1.msra.mxu0 0.0
      %2008 = vmatprep.subr.mxu0 0.0
      %2009 = vmatpush1.msra.mxu0 0.0
      %2010 = vmatprep.subr.mxu0 0.0
      %2011 = vmatpush1.msra.mxu0 0.0
      %2012 = vmatprep.subr.mxu0 0.0
      %2013 = vmatpush1.msra.mxu0 0.0
      %2014 = vmatprep.subr.mxu0 0.0
      %2015 = vmatpush1.msra.mxu0 0.0
      %2016 = vmatprep.subr.mxu0 0.0
      %2017 = vmatpush1.msra.mxu0 0.0
      %2018 = vmatprep.subr.mxu0 0.0
      %2019 = vmatpush1.msra.mxu0 0.0
      %2020 = vmatprep.subr.mxu0 0.0
      %2021 = vmatpush1.msra.mxu0 %v1985
      %2022 = vmatprep.subr.mxu0 0.0
      %2023 = vmatpush2.msra.mxu0 0.0
      %2024 = vmatprep.subr.mxu0 0.0
      %2025 = vmatpush2.msra.mxu0 0.0
      %2026 = vmatprep.subr.mxu0 0.0
      %2027 = vmatpush2.msra.mxu0 0.0
      %2028 = vmatprep.subr.mxu0 0.0
      %2029 = vmatpush2.msra.mxu0 0.0
      %2030 = vmatprep.subr.mxu0 0.0
      %2031 = vmatpush2.msra.mxu0 0.0
      %2032 = vmatprep.subr.mxu0 0.0
      %2033 = vmatpush2.msra.mxu0 0.0
      %2034 = vmatprep.subr.mxu0 0.0
      %2035 = vmatpush2.msra.mxu0 0.0
      %2036 = vmatprep.subr.mxu0 0.0
      %2037 = vmatpush2.msra.mxu0 0.0
      %2038 = vmatprep.subr.mxu0 0.0
      %2039 = vmatpush2.msra.mxu0 0.0
      %2040 = vmatprep.subr.mxu0 0.0
      %2041 = vmatpush2.msra.mxu0 0.0
      %2042 = vmatprep.subr.mxu0 0.0
      %2043 = vmatpush2.msra.mxu0 0.0
      %2044 = vmatprep.subr.mxu0 0.0
      %2045 = vmatpush2.msra.mxu0 0.0
      %2046 = vmatprep.subr.mxu0 0.0
      %2047 = vmatpush2.msra.mxu0 0.0
      %2048 = vmatprep.subr.mxu0 0.0
      %2049 = vmatpush2.msra.mxu0 0.0
      %2050 = vmatprep.subr.mxu0 0.0
      %2051 = vmatpush2.msra.mxu0 0.0
      %2052 = vmatprep.subr.mxu0 0.0
      %2053 = vmatpush2.msra.mxu0 0.0
      %2054 = vmatprep.mubr.f32.mxu0 0.0
      %2055 = vmatmul.mubr.f32.gmra.mxu0 %v1988
      %v2056 = vpop.f32.mrf.mxu0
      %v2057 = vadd.f32 0.0, %v2056
      %v2058 = vpop.f32.mrf.mxu0
      %2059 = vdwg.mxu0
      %v2061 = vsel %vm905, %v2057, 0
      %2063 = vmatprep.subr.mxu0 0.0
      %2064 = vmatpush1.msra.mxu0 0.0
      %2065 = vmatprep.subr.mxu0 0.0
      %2066 = vmatpush1.msra.mxu0 0.0
      %2067 = vmatprep.subr.mxu0 0.0
      %2068 = vmatpush1.msra.mxu0 0.0
      %2069 = vmatprep.subr.mxu0 0.0
      %2070 = vmatpush1.msra.mxu0 0.0
      %2071 = vmatprep.subr.mxu0 0.0
      %2072 = vmatpush1.msra.mxu0 0.0
      %2073 = vmatprep.subr.mxu0 0.0
      %2074 = vmatpush1.msra.mxu0 0.0
      %2075 = vmatprep.subr.mxu0 0.0
      %2076 = vmatpush1.msra.mxu0 0.0
      %2077 = vmatprep.subr.mxu0 0.0
      %2078 = vmatpush1.msra.mxu0 0.0
      %2079 = vmatprep.subr.mxu0 0.0
      %2080 = vmatpush1.msra.mxu0 0.0
      %2081 = vmatprep.subr.mxu0 0.0
      %2082 = vmatpush1.msra.mxu0 0.0
      %2083 = vmatprep.subr.mxu0 0.0
      %2084 = vmatpush1.msra.mxu0 0.0
      %2085 = vmatprep.subr.mxu0 0.0
      %2086 = vmatpush1.msra.mxu0 0.0
      %2087 = vmatprep.subr.mxu0 0.0
      %2088 = vmatpush1.msra.mxu0 0.0
      %2089 = vmatprep.subr.mxu0 0.0
      %2090 = vmatpush1.msra.mxu0 0.0
      %2091 = vmatprep.subr.mxu0 0.0
      %2092 = vmatpush1.msra.mxu0 %v1726
      %2093 = vmatprep.subr.mxu0 0.0
      %2094 = vmatpush1.msra.mxu0 %v1725
      %2095 = vmatprep.subr.mxu0 0.0
      %2096 = vmatpush2.msra.mxu0 0.0
      %2097 = vmatprep.subr.mxu0 0.0
      %2098 = vmatpush2.msra.mxu0 0.0
      %2099 = vmatprep.subr.mxu0 0.0
      %2100 = vmatpush2.msra.mxu0 0.0
      %2101 = vmatprep.subr.mxu0 0.0
      %2102 = vmatpush2.msra.mxu0 0.0
      %2103 = vmatprep.subr.mxu0 0.0
      %2104 = vmatpush2.msra.mxu0 0.0
      %2105 = vmatprep.subr.mxu0 0.0
      %2106 = vmatpush2.msra.mxu0 0.0
      %2107 = vmatprep.subr.mxu0 0.0
      %2108 = vmatpush2.msra.mxu0 0.0
      %2109 = vmatprep.subr.mxu0 0.0
      %2110 = vmatpush2.msra.mxu0 0.0
      %2111 = vmatprep.subr.mxu0 0.0
      %2112 = vmatpush2.msra.mxu0 0.0
      %2113 = vmatprep.subr.mxu0 0.0
      %2114 = vmatpush2.msra.mxu0 0.0
      %2115 = vmatprep.subr.mxu0 0.0
      %2116 = vmatpush2.msra.mxu0 0.0
      %2117 = vmatprep.subr.mxu0 0.0
      %2118 = vmatpush2.msra.mxu0 0.0
      %2119 = vmatprep.subr.mxu0 0.0
      %2120 = vmatpush2.msra.mxu0 0.0
      %2121 = vmatprep.subr.mxu0 0.0
      %2122 = vmatpush2.msra.mxu0 0.0
      %2123 = vmatprep.subr.mxu0 0.0
      %2124 = vmatpush2.msra.mxu0 0.0
      %2125 = vmatprep.subr.mxu0 0.0
      %2126 = vmatpush2.msra.mxu0 0.0
      %2127 = vmatprep.mubr.f32.mxu0 0.0
      %2128 = vmatmul.mubr.f32.gmra.mxu0 %v2061
      %v2129 = vpop.f32.mrf.mxu0
      %v2130 = vadd.f32 0.0, %v2129
      %v2131 = vpop.f32.mrf.mxu0
      %2132 = vdwg.mxu0
      %v2134 = vsel %vm905, %v1890, 0
      %2136 = vmatprep.subr.mxu0 0.0
      %2137 = vmatpush1.msra.mxu0 0.0
      %2138 = vmatprep.subr.mxu0 0.0
      %2139 = vmatpush1.msra.mxu0 0.0
      %2140 = vmatprep.subr.mxu0 0.0
      %2141 = vmatpush1.msra.mxu0 0.0
      %2142 = vmatprep.subr.mxu0 0.0
      %2143 = vmatpush1.msra.mxu0 0.0
      %2144 = vmatprep.subr.mxu0 0.0
      %2145 = vmatpush1.msra.mxu0 0.0
      %2146 = vmatprep.subr.mxu0 0.0
      %2147 = vmatpush1.msra.mxu0 0.0
      %2148 = vmatprep.subr.mxu0 0.0
      %2149 = vmatpush1.msra.mxu0 0.0
      %2150 = vmatprep.subr.mxu0 0.0
      %2151 = vmatpush1.msra.mxu0 0.0
      %2152 = vmatprep.subr.mxu0 0.0
      %2153 = vmatpush1.msra.mxu0 0.0
      %2154 = vmatprep.subr.mxu0 0.0
      %2155 = vmatpush1.msra.mxu0 0.0
      %2156 = vmatprep.subr.mxu0 0.0
      %2157 = vmatpush1.msra.mxu0 0.0
      %2158 = vmatprep.subr.mxu0 0.0
      %2159 = vmatpush1.msra.mxu0 0.0
      %2160 = vmatprep.subr.mxu0 0.0
      %2161 = vmatpush1.msra.mxu0 0.0
      %2162 = vmatprep.subr.mxu0 0.0
      %2163 = vmatpush1.msra.mxu0 0.0
      %2164 = vmatprep.subr.mxu0 0.0
      %2165 = vmatpush1.msra.mxu0 %v1724
      %2166 = vmatprep.subr.mxu0 0.0
      %2167 = vmatpush1.msra.mxu0 %v1723
      %2168 = vmatprep.subr.mxu0 0.0
      %2169 = vmatpush2.msra.mxu0 0.0
      %2170 = vmatprep.subr.mxu0 0.0
      %2171 = vmatpush2.msra.mxu0 0.0
      %2172 = vmatprep.subr.mxu0 0.0
      %2173 = vmatpush2.msra.mxu0 0.0
      %2174 = vmatprep.subr.mxu0 0.0
      %2175 = vmatpush2.msra.mxu0 0.0
      %2176 = vmatprep.subr.mxu0 0.0
      %2177 = vmatpush2.msra.mxu0 0.0
      %2178 = vmatprep.subr.mxu0 0.0
      %2179 = vmatpush2.msra.mxu0 0.0
      %2180 = vmatprep.subr.mxu0 0.0
      %2181 = vmatpush2.msra.mxu0 0.0
      %2182 = vmatprep.subr.mxu0 0.0
      %2183 = vmatpush2.msra.mxu0 0.0
      %2184 = vmatprep.subr.mxu0 0.0
      %2185 = vmatpush2.msra.mxu0 0.0
      %2186 = vmatprep.subr.mxu0 0.0
      %2187 = vmatpush2.msra.mxu0 0.0
      %2188 = vmatprep.subr.mxu0 0.0
      %2189 = vmatpush2.msra.mxu0 0.0
      %2190 = vmatprep.subr.mxu0 0.0
      %2191 = vmatpush2.msra.mxu0 0.0
      %2192 = vmatprep.subr.mxu0 0.0
      %2193 = vmatpush2.msra.mxu0 0.0
      %2194 = vmatprep.subr.mxu0 0.0
      %2195 = vmatpush2.msra.mxu0 0.0
      %2196 = vmatprep.subr.mxu0 0.0
      %2197 = vmatpush2.msra.mxu0 0.0
      %2198 = vmatprep.subr.mxu0 0.0
      %2199 = vmatpush2.msra.mxu0 0.0
      %2200 = vmatprep.mubr.f32.mxu0 0.0
      %2201 = vmatmul.mubr.f32.gmra.mxu0 %v2134
      %v2202 = vpop.f32.mrf.mxu0
      %v2203 = vadd.f32 %v2130, %v2202
      %v2204 = vpop.f32.mrf.mxu0
      %2205 = vdwg.mxu0
      %v2206 = vadd.f32 %v1604, %v2203
      %s2207 = scalar_lea.vmem %s11, 1
      %v2208 = vld [vmem:[%s2207] sm:$0x1]
      %v2210 = vlaneseq
      %v2211 = vshrl.u32 %v2210, 7
      %v2212 = vsub.s32 0, %v2211
      %v2213 = vrot.slane %v2208, %v2212
      %v2215 = vadd.f32 %v2206, %v2213
      %s2216 = scalar_lea.vmem %s12, 1
      %v2217 = vld [vmem:[%s2216] sm:$0x1]
      %s2218 = scalar_lea.vmem %s13, 1
      %v2219 = vld [vmem:[%s2218] sm:$0x1]
      %v2220 = vsel %vm785, %v2215, 0.0
      %2221 = vadd.xlane.f32.xlu0 %v2220
      %v2222 = vpop.xlane.xlu0 %2221
      %v2223 = vmul.f32 %v2222, %v789
      %v2224 = vsub.f32 %v2215, %v2223
      %v2225 = vmul.f32 %v2224, %v2224
      %v2226 = vsel %vm785, %v2225, 0.0
      %2227 = vadd.xlane.f32.xlu0 %v2226
      %v2228 = vpop.xlane.xlu0 %2227
      %v2229 = vmul.f32 %v2228, %v789
      %v2230 = vadd.f32 %v2229, 1e-05
      %v2231 = vrsqrt.pop %v2230
      %v2232 = vmul.f32 %v2224, %v2231
      %v2234 = vlaneseq
      %v2235 = vshrl.u32 %v2234, 7
      %v2236 = vsub.s32 0, %v2235
      %v2237 = vrot.slane %v2217, %v2236
      %v2239 = vmul.f32 %v2232, %v2237
      %v2241 = vlaneseq
      %v2242 = vshrl.u32 %v2241, 7
      %v2243 = vsub.s32 0, %v2242
      %v2244 = vrot.slane %v2219, %v2243
      %v2246 = vadd.f32 %v2239, %v2244
      %s2247 = scalar_lea.vmem %s14, 32
      %v2248 = vld [vmem:[%s2247] sm:$0xff]
      %v2249 = vld [vmem:[%s2247 + $0x8] sm:$0xff]
      %v2250 = vld [vmem:[%s2247 + $0x10] sm:$0xff]
      %v2251 = vld [vmem:[%s2247 + $0x18] sm:$0xff]
      %s2252 = scalar_lea.vmem %s15, 1
      %v2253 = vld [vmem:[%s2252] sm:$0x1]
      %v2255 = vlaneseq
      %v2256 = vshrl.u32 %v2255, 7
      %v2257 = vsub.s32 0, %v2256
      %v2258 = vrot.slane %v2253, %v2257
      %v2261 = vsel %vm785, %v2246, 0
      %2263 = vmatprep.subr.mxu0 0.0
      %2264 = vmatpush1.msra.mxu0 0.0
      %2265 = vmatprep.subr.mxu0 0.0
      %2266 = vmatpush1.msra.mxu0 0.0
      %2267 = vmatprep.subr.mxu0 0.0
      %2268 = vmatpush1.msra.mxu0 0.0
      %2269 = vmatprep.subr.mxu0 0.0
      %2270 = vmatpush1.msra.mxu0 0.0
      %2271 = vmatprep.subr.mxu0 0.0
      %2272 = vmatpush1.msra.mxu0 0.0
      %2273 = vmatprep.subr.mxu0 0.0
      %2274 = vmatpush1.msra.mxu0 0.0
      %2275 = vmatprep.subr.mxu0 0.0
      %2276 = vmatpush1.msra.mxu0 0.0
      %2277 = vmatprep.subr.mxu0 0.0
      %2278 = vmatpush1.msra.mxu0 0.0
      %2279 = vmatprep.subr.mxu0 0.0
      %2280 = vmatpush1.msra.mxu0 0.0
      %2281 = vmatprep.subr.mxu0 0.0
      %2282 = vmatpush1.msra.mxu0 0.0
      %2283 = vmatprep.subr.mxu0 0.0
      %2284 = vmatpush1.msra.mxu0 0.0
      %2285 = vmatprep.subr.mxu0 0.0
      %2286 = vmatpush1.msra.mxu0 0.0
      %2287 = vmatprep.subr.mxu0 0.0
      %2288 = vmatpush1.msra.mxu0 %v2251
      %2289 = vmatprep.subr.mxu0 0.0
      %2290 = vmatpush1.msra.mxu0 %v2250
      %2291 = vmatprep.subr.mxu0 0.0
      %2292 = vmatpush1.msra.mxu0 %v2249
      %2293 = vmatprep.subr.mxu0 0.0
      %2294 = vmatpush1.msra.mxu0 %v2248
      %2295 = vmatprep.subr.mxu0 0.0
      %2296 = vmatpush2.msra.mxu0 0.0
      %2297 = vmatprep.subr.mxu0 0.0
      %2298 = vmatpush2.msra.mxu0 0.0
      %2299 = vmatprep.subr.mxu0 0.0
      %2300 = vmatpush2.msra.mxu0 0.0
      %2301 = vmatprep.subr.mxu0 0.0
      %2302 = vmatpush2.msra.mxu0 0.0
      %2303 = vmatprep.subr.mxu0 0.0
      %2304 = vmatpush2.msra.mxu0 0.0
      %2305 = vmatprep.subr.mxu0 0.0
      %2306 = vmatpush2.msra.mxu0 0.0
      %2307 = vmatprep.subr.mxu0 0.0
      %2308 = vmatpush2.msra.mxu0 0.0
      %2309 = vmatprep.subr.mxu0 0.0
      %2310 = vmatpush2.msra.mxu0 0.0
      %2311 = vmatprep.subr.mxu0 0.0
      %2312 = vmatpush2.msra.mxu0 0.0
      %2313 = vmatprep.subr.mxu0 0.0
      %2314 = vmatpush2.msra.mxu0 0.0
      %2315 = vmatprep.subr.mxu0 0.0
      %2316 = vmatpush2.msra.mxu0 0.0
      %2317 = vmatprep.subr.mxu0 0.0
      %2318 = vmatpush2.msra.mxu0 0.0
      %2319 = vmatprep.subr.mxu0 0.0
      %2320 = vmatpush2.msra.mxu0 0.0
      %2321 = vmatprep.subr.mxu0 0.0
      %2322 = vmatpush2.msra.mxu0 0.0
      %2323 = vmatprep.subr.mxu0 0.0
      %2324 = vmatpush2.msra.mxu0 0.0
      %2325 = vmatprep.subr.mxu0 0.0
      %2326 = vmatpush2.msra.mxu0 0.0
      %2327 = vmatprep.mubr.f32.mxu0 0.0
      %2328 = vmatmul.mubr.f32.gmra.mxu0 %v2261
      %v2329 = vpop.f32.mrf.mxu0
      %v2330 = vadd.f32 %v2258, %v2329
      %v2331 = vpop.f32.mrf.mxu0
      %2332 = vdwg.mxu0
      %v2333 = vmul.f32 %v2330, %v2330
      %v2334 = vmul.f32 %v2330, %v2333
      %v2335 = vmul.f32 %v2334, 0.044715
      %v2336 = vadd.f32 %v2330, %v2335
      %v2337 = vmul.f32 %v2336, 0.7978846
      %v2338 = vtanh.pop %v2337
      %v2339 = vadd.f32 %v2338, 1.0
      %v2340 = vmul.f32 %v2339, 0.5
      %v2341 = vmul.f32 %v2330, %v2340
      %s2342 = scalar_lea.vmem %s16, 64
      %v2343 = vld [vmem:[%s2342] sm:$0xff]
      %v2344 = vld [vmem:[%s2342 + $0x8] sm:$0xff]
      %v2345 = vld [vmem:[%s2342 + $0x10] sm:$0xff]
      %v2346 = vld [vmem:[%s2342 + $0x18] sm:$0xff]
      %v2347 = vld [vmem:[%s2342 + $0x20] sm:$0xff]
      %v2348 = vld [vmem:[%s2342 + $0x28] sm:$0xff]
      %v2349 = vld [vmem:[%s2342 + $0x30] sm:$0xff]
      %v2350 = vld [vmem:[%s2342 + $0x38] sm:$0xff]
      %v2352 = vsel %vm1522, %v2341, 0
      %2354 = vmatprep.subr.mxu0 0.0
      %2355 = vmatpush1.msra.mxu0 0.0
      %2356 = vmatprep.subr.mxu0 0.0
      %2357 = vmatpush1.msra.mxu0 0.0
      %2358 = vmatprep.subr.mxu0 0.0
      %2359 = vmatpush1.msra.mxu0 0.0
      %2360 = vmatprep.subr.mxu0 0.0
      %2361 = vmatpush1.msra.mxu0 0.0
      %2362 = vmatprep.subr.mxu0 0.0
      %2363 = vmatpush1.msra.mxu0 0.0
      %2364 = vmatprep.subr.mxu0 0.0
      %2365 = vmatpush1.msra.mxu0 0.0
      %2366 = vmatprep.subr.mxu0 0.0
      %2367 = vmatpush1.msra.mxu0 0.0
      %2368 = vmatprep.subr.mxu0 0.0
      %2369 = vmatpush1.msra.mxu0 0.0
      %2370 = vmatprep.subr.mxu0 0.0
      %2371 = vmatpush1.msra.mxu0 %v2350
      %2372 = vmatprep.subr.mxu0 0.0
      %2373 = vmatpush1.msra.mxu0 %v2349
      %2374 = vmatprep.subr.mxu0 0.0
      %2375 = vmatpush1.msra.mxu0 %v2348
      %2376 = vmatprep.subr.mxu0 0.0
      %2377 = vmatpush1.msra.mxu0 %v2347
      %2378 = vmatprep.subr.mxu0 0.0
      %2379 = vmatpush1.msra.mxu0 %v2346
      %2380 = vmatprep.subr.mxu0 0.0
      %2381 = vmatpush1.msra.mxu0 %v2345
      %2382 = vmatprep.subr.mxu0 0.0
      %2383 = vmatpush1.msra.mxu0 %v2344
      %2384 = vmatprep.subr.mxu0 0.0
      %2385 = vmatpush1.msra.mxu0 %v2343
      %2386 = vmatprep.subr.mxu0 0.0
      %2387 = vmatpush2.msra.mxu0 0.0
      %2388 = vmatprep.subr.mxu0 0.0
      %2389 = vmatpush2.msra.mxu0 0.0
      %2390 = vmatprep.subr.mxu0 0.0
      %2391 = vmatpush2.msra.mxu0 0.0
      %2392 = vmatprep.subr.mxu0 0.0
      %2393 = vmatpush2.msra.mxu0 0.0
      %2394 = vmatprep.subr.mxu0 0.0
      %2395 = vmatpush2.msra.mxu0 0.0
      %2396 = vmatprep.subr.mxu0 0.0
      %2397 = vmatpush2.msra.mxu0 0.0
      %2398 = vmatprep.subr.mxu0 0.0
      %2399 = vmatpush2.msra.mxu0 0.0
      %2400 = vmatprep.subr.mxu0 0.0
      %2401 = vmatpush2.msra.mxu0 0.0
      %2402 = vmatprep.subr.mxu0 0.0
      %2403 = vmatpush2.msra.mxu0 0.0
      %2404 = vmatprep.subr.mxu0 0.0
      %2405 = vmatpush2.msra.mxu0 0.0
      %2406 = vmatprep.subr.mxu0 0.0
      %2407 = vmatpush2.msra.mxu0 0.0
      %2408 = vmatprep.subr.mxu0 0.0
      %2409 = vmatpush2.msra.mxu0 0.0
      %2410 = vmatprep.subr.mxu0 0.0
      %2411 = vmatpush2.msra.mxu0 0.0
      %2412 = vmatprep.subr.mxu0 0.0
      %2413 = vmatpush2.msra.mxu0 0.0
      %2414 = vmatprep.subr.mxu0 0.0
      %2415 = vmatpush2.msra.mxu0 0.0
      %2416 = vmatprep.subr.mxu0 0.0
      %2417 = vmatpush2.msra.mxu0 0.0
      %2418 = vmatprep.mubr.f32.mxu0 0.0
      %2419 = vmatmul.mubr.f32.gmra.mxu0 %v2352
      %v2420 = vpop.f32.mrf.mxu0
      %v2421 = vadd.f32 0.0, %v2420
      %v2422 = vpop.f32.mrf.mxu0
      %2423 = vdwg.mxu0
      %v2424 = vadd.f32 %v2215, %v2421
      %s2425 = scalar_lea.vmem %s17, 1
      %v2426 = vld [vmem:[%s2425] sm:$0x1]
      %v2428 = vlaneseq
      %v2429 = vshrl.u32 %v2428, 7
      %v2430 = vsub.s32 0, %v2429
      %v2431 = vrot.slane %v2426, %v2430
      %v2433 = vadd.f32 %v2424, %v2431
      %v2434 = vld [vmem:[%s18] sm:$0x1]
      %v2435 = vld [vmem:[%s19] sm:$0x1]
      %v2436 = vsel %vm785, %v2433, 0.0
      %2437 = vadd.xlane.f32.xlu0 %v2436
      %v2438 = vpop.xlane.xlu0 %2437
      %v2439 = vmul.f32 %v2438, %v789
      %v2440 = vsub.f32 %v2433, %v2439
      %v2441 = vmul.f32 %v2440, %v2440
      %v2442 = vsel %vm785, %v2441, 0.0
      %2443 = vadd.xlane.f32.xlu0 %v2442
      %v2444 = vpop.xlane.xlu0 %2443
      %v2445 = vmul.f32 %v2444, %v789
      %v2446 = vadd.f32 %v2445, 1e-05
      %v2447 = vrsqrt.pop %v2446
      %v2448 = vmul.f32 %v2440, %v2447
      %v2450 = vlaneseq
      %v2451 = vshrl.u32 %v2450, 7
      %v2452 = vsub.s32 0, %v2451
      %v2453 = vrot.slane %v2434, %v2452
      %v2455 = vmul.f32 %v2448, %v2453
      %v2457 = vlaneseq
      %v2458 = vshrl.u32 %v2457, 7
      %v2459 = vsub.s32 0, %v2458
      %v2460 = vrot.slane %v2435, %v2459
      %v2462 = vadd.f32 %v2455, %v2460
      %v2464 = vsel %vm785, %v2462, 0
      %v2467 = vsel %vm785, %v677, 0
      %v2470 = vsel %vm785, %v678, 0
      %v2473 = vsel %vm785, %v679, 0
      %v2476 = vsel %vm785, %v680, 0
      %v2479 = vsel %vm785, %v681, 0
      %v2482 = vsel %vm785, %v682, 0
      %v2485 = vsel %vm785, %v683, 0
      %v2488 = vsel %vm785, %v684, 0
      %v2491 = vsel %vm785, %v685, 0
      %v2494 = vsel %vm785, %v686, 0
      %v2497 = vsel %vm785, %v687, 0
      %v2500 = vsel %vm785, %v688, 0
      %v2503 = vsel %vm785, %v689, 0
      %v2506 = vsel %vm785, %v690, 0
      %v2509 = vsel %vm785, %v691, 0
      %v2512 = vsel %vm785, %v692, 0
      %2514 = vmatprep.subr.mxu0 0.0
      %2515 = vmatpush1.xpose.msra.mxu0 %v2512
      %2516 = vmatprep.subr.mxu0 0.0
      %2517 = vmatpush1.xpose.msra.mxu0 %v2509
      %2518 = vmatprep.subr.mxu0 0.0
      %2519 = vmatpush1.xpose.msra.mxu0 %v2506
      %2520 = vmatprep.subr.mxu0 0.0
      %2521 = vmatpush1.xpose.msra.mxu0 %v2503
      %2522 = vmatprep.subr.mxu0 0.0
      %2523 = vmatpush1.xpose.msra.mxu0 %v2500
      %2524 = vmatprep.subr.mxu0 0.0
      %2525 = vmatpush1.xpose.msra.mxu0 %v2497
      %2526 = vmatprep.subr.mxu0 0.0
      %2527 = vmatpush1.xpose.msra.mxu0 %v2494
      %2528 = vmatprep.subr.mxu0 0.0
      %2529 = vmatpush1.xpose.msra.mxu0 %v2491
      %2530 = vmatprep.subr.mxu0 0.0
      %2531 = vmatpush1.xpose.msra.mxu0 %v2488
      %2532 = vmatprep.subr.mxu0 0.0
      %2533 = vmatpush1.xpose.msra.mxu0 %v2485
      %2534 = vmatprep.subr.mxu0 0.0
      %2535 = vmatpush1.xpose.msra.mxu0 %v2482
      %2536 = vmatprep.subr.mxu0 0.0
      %2537 = vmatpush1.xpose.msra.mxu0 %v2479
      %2538 = vmatprep.subr.mxu0 0.0
      %2539 = vmatpush1.xpose.msra.mxu0 %v2476
      %2540 = vmatprep.subr.mxu0 0.0
      %2541 = vmatpush1.xpose.msra.mxu0 %v2473
      %2542 = vmatprep.subr.mxu0 0.0
      %2543 = vmatpush1.xpose.msra.mxu0 %v2470
      %2544 = vmatprep.subr.mxu0 0.0
      %2545 = vmatpush1.xpose.msra.mxu0 %v2467
      %2546 = vmatprep.subr.mxu0 0.0
      %2547 = vmatpush2.xpose.msra.mxu0 0.0
      %2548 = vmatprep.subr.mxu0 0.0
      %2549 = vmatpush2.xpose.msra.mxu0 0.0
      %2550 = vmatprep.subr.mxu0 0.0
      %2551 = vmatpush2.xpose.msra.mxu0 0.0
      %2552 = vmatprep.subr.mxu0 0.0
      %2553 = vmatpush2.xpose.msra.mxu0 0.0
      %2554 = vmatprep.subr.mxu0 0.0
      %2555 = vmatpush2.xpose.msra.mxu0 0.0
      %2556 = vmatprep.subr.mxu0 0.0
      %2557 = vmatpush2.xpose.msra.mxu0 0.0
      %2558 = vmatprep.subr.mxu0 0.0
      %2559 = vmatpush2.xpose.msra.mxu0 0.0
      %2560 = vmatprep.subr.mxu0 0.0
      %2561 = vmatpush2.xpose.msra.mxu0 0.0
      %2562 = vmatprep.subr.mxu0 0.0
      %2563 = vmatpush2.xpose.msra.mxu0 0.0
      %2564 = vmatprep.subr.mxu0 0.0
      %2565 = vmatpush2.xpose.msra.mxu0 0.0
      %2566 = vmatprep.subr.mxu0 0.0
      %2567 = vmatpush2.xpose.msra.mxu0 0.0
      %2568 = vmatprep.subr.mxu0 0.0
      %2569 = vmatpush2.xpose.msra.mxu0 0.0
      %2570 = vmatprep.subr.mxu0 0.0
      %2571 = vmatpush2.xpose.msra.mxu0 0.0
      %2572 = vmatprep.subr.mxu0 0.0
      %2573 = vmatpush2.xpose.msra.mxu0 0.0
      %2574 = vmatprep.subr.mxu0 0.0
      %2575 = vmatpush2.xpose.msra.mxu0 0.0
      %2576 = vmatprep.subr.mxu0 0.0
      %2577 = vmatpush2.xpose.msra.mxu0 0.0
      %2578 = vmatprep.mubr.f32.mxu0 0.0
      %2579 = vmatmul.mubr.f32.gmra.mxu0 %v2464
      %v2580 = vpop.f32.mrf.mxu0
      %v2581 = vadd.f32 0.0, %v2580
      %v2582 = vpop.f32.mrf.mxu0
      %2583 = vdwg.mxu0
      %vm2584 = vcmask 1046528
      %v2585 = vsel %vm2584, %v2581, -inf
      %2586 = vmax.xlane.f32.xlu0 %v2585
      %v2587 = vpop.xlane.xlu0 %2586
      %v2588 = vsub.f32 %v2581, %v2587
      %v2589 = vmul.f32 %v2588, 1.442695
      %v2590 = vpow.pop %v2589
      %v2591 = vsel %vm2584, %v2590, 0.0
      %2592 = vadd.xlane.f32.xlu0 %v2591
      %v2593 = vpop.xlane.xlu0 %2592
      %v2594 = vlog2.pop %v2593
      %v2595 = vmul.f32 %v2594, 0.6931472
      %v2596 = vadd.f32 %v2595, %v2587
      %2597 = vset.pattern.permute.xlu0 0
      %2598 = vperm.xlu0 %2597, %v674
      %v2599 = vpop.permute.xlu0 %2598
      %vm2600 = vcmp.eq.s32.totalorder %v694, %v2599
      %v2601 = vsel %vm2600, %v2581, 0.0
      %v2602 = vsel %vm2584, %v2601, 0.0
      %2603 = vadd.xlane.f32.xlu0 %v2602
      %v2604 = vpop.xlane.xlu0 %2603
      %v2605 = vsub.f32 %v2604, %v2596
      %v2606 = vmul.f32 %v2605, %v676
      %vm2607 = vcmask 6144
      %2608 = vst.msk [vmem:[%s672] sm:$0x7f] %vm2607, %v2606
      %p2609 = scmp.lt.s32.totalorder %s31, 1
      %s2610 = scalar_select %p2609, %s31, 1
      %s2611 = smul.addr %s2610, 8
      %s2612 = scalar_lea.vmem %s20, %s2611
      // Predicated region
      $region101: #{reference_model_forward.1} parent=99 // pred_check
        %p2613 = pneg %p489
      $region102: #{reference_model_forward.1} parent=99 // pred_check_branch
        %2615 = sbr.rel (%p2613) target = $region104
      $region103: #{reference_model_forward.1} parent=99 // pred_region
        _
      $region104: #{reference_model_forward.1} parent=99 // pred_fallthru
        _
    $region100: #{reference_model_forward.1} parent=5 // pred_fallthru
      _
    %p2616 = scmp.le.s32.totalorder 2, %s26
    // Predicated region
    $region105: #{reference_model_forward.1} parent=5 // pred_check
      %p2617 = pneg %p2616
    $region106: #{reference_model_forward.1} parent=5 // pred_check_branch
      %2619 = sbr.rel (%p2617) target = $region108
    $region107: #{reference_model_forward.1} parent=5 // pred_region
      %s2620 = ssub.s32 %s26, 2
      // Predicated region
      $region109: #{reference_model_forward.1} parent=107 // pred_check
        %p2621 = pneg %p495
      $region110: #{reference_model_forward.1} parent=107 // pred_check_branch
        %2623 = sbr.rel (%p2621) target = $region112
      $region111: #{reference_model_forward.1} parent=107 // pred_region
        %p2624 = scmp.lt.s32.totalorder %s32, 1
        %s2625 = scalar_select %p2624, %s32, 1
        %s2626 = smul.addr %s2625, 8
        %s2627 = scalar_lea.vmem %s20, %s2626
      $region112: #{reference_model_forward.1} parent=107 // pred_fallthru
        _
    $region108: #{reference_model_forward.1} parent=5 // pred_fallthru
      _
  $region6: #{reference_model_forward.1} parent=0 // loop_footer
    %s30 = sadd.s32 1, %s26
  $region7: #{reference_model_forward.1} parent=0 // loop_footer_branch
    %25 = sbr.rel target = $region3
  $region8: #{reference_model_forward.1} parent=0 // loop_exit
    _

</llo_original>
